<compile_context>
chip_gen: v7x
topology: tpu7x:2x2x1
jax: 0.10.0
libtpu: 0.0.40
codegen_flags: <defaults>
</compile_context>

<pallas_src>
import functools

import jax
import jax.numpy as jnp
import numpy as np
from jax import lax
from jax.experimental import pallas as pl
from jax.experimental.pallas import tpu as pltpu


# ----------------------------------------------------------------------------
# Fused kernel: whole Block forward for one image per grid step (lane-dense).
# ----------------------------------------------------------------------------
def _block_kernel(xp_ref, dw_ref, b_ref, pw1_ref, pw2_ref, rsel_ref,
                  csel_ref, skt_ref, o_ref, pad_ref, *, H, W, Cin, Cout):
    f32 = jnp.float32
    hi = jax.lax.Precision.HIGHEST
    Ho = (H + 2 - 3) // 2 + 1
    Wo = (W + 2 - 3) // 2 + 1
    WCi = W * Cin
    WCo = W * Cout
    PWCo = (W + 2) * Cout

    xp = xp_ref[...].reshape(H + 2, (W + 2) * Cin)   # zero-padded input slab
    dwv = dw_ref[...]           # (18, W*Cout) tiled depthwise tap weights
    bv = b_ref[...]             # (3,  W*Cout) folded-BN biases (b1, b2, skip)
    rsel = rsel_ref[...]        # (Ho, H) stride-2 row selector (0/1)

    # ---- rep path -----------------------------------------------------------
    # ReLU of the pre-padded input (relu(0)==0 keeps the zero border valid).
    a = jnp.maximum(xp, 0.0)                                    # (H+2,(W+2)*Cin)

    # Depthwise 3x3 #1: 9 lane-dense VPU FMAs; first tap initialises.
    d1 = a[0:H, 0:WCi] * dwv[0:1, 0:WCi]
    for k in range(1, 9):
        dh, dw = divmod(k, 3)
        d1 = d1 + a[dh:dh + H, dw * Cin:dw * Cin + WCi] * dwv[k:k + 1, 0:WCi]

    # Pointwise 1x1 #1 (BN folded): one block-diagonal MXU dot, + bias, ReLU.
    y1 = jnp.dot(d1, pw1_ref[...], preferred_element_type=f32, precision=hi)
    y1 = jnp.maximum(y1 + bv[0:1, :], 0.0)                      # (H, W*Cout)

    # Zero-pad y1 into scratch: border-only init + interior store.
    pad_ref[0:1, :] = jnp.zeros((1, PWCo), f32)
    pad_ref[H + 1:H + 2, :] = jnp.zeros((1, PWCo), f32)
    pad_ref[:, 0:Cout] = jnp.zeros((H + 2, Cout), f32)
    pad_ref[:, PWCo - Cout:PWCo] = jnp.zeros((H + 2, Cout), f32)
    pad_ref[1:H + 1, Cout:Cout + WCo] = y1

    # Depthwise 3x3 #2.
    d2 = pad_ref[0:H, 0:WCo] * dwv[9:10, :]
    for k in range(1, 9):
        dh, dw = divmod(k, 3)
        d2 = d2 + pad_ref[dh:dh + H, dw * Cout:dw * Cout + WCo] * dwv[9 + k:10 + k, :]

    # Pointwise 1x1 #2 (BN folded); no ReLU before the pool.
    y2 = jnp.dot(d2, pw2_ref[...], preferred_element_type=f32, precision=hi)
    y2 = y2 + bv[1:2, :]                                        # (H, W*Cout)

    # MaxPool2d(3, stride 2, pad 1): big-negative border (finite, so the 0/1
    # selection matmul stays exact), stride-1 3x3 max via 9 taps, then the
    # stride-2 row/col subsample as two small selection dots (lane-dense,
    # no strided/gather reads).
    neg = jnp.finfo(f32).min
    pad_ref[0:1, :] = jnp.full((1, PWCo), neg, f32)
    pad_ref[H + 1:H + 2, :] = jnp.full((1, PWCo), neg, f32)
    pad_ref[:, 0:Cout] = jnp.full((H + 2, Cout), neg, f32)
    pad_ref[:, PWCo - Cout:PWCo] = jnp.full((H + 2, Cout), neg, f32)
    pad_ref[1:H + 1, Cout:Cout + WCo] = y2

    m = pad_ref[0:H, 0:WCo]
    for k in range(1, 9):
        dh, dw = divmod(k, 3)
        m = jnp.maximum(m, pad_ref[dh:dh + H, dw * Cout:dw * Cout + WCo])
    pooled = jnp.dot(jnp.dot(rsel, m, preferred_element_type=f32, precision=hi),
                     csel_ref[...], preferred_element_type=f32, precision=hi)

    # ---- skip path: 1x1 conv, stride 2, on the raw (pre-ReLU) input; BN folded.
    x_raw = xp[1:H + 1, Cin:Cin + WCi]                          # (H, W*Cin)
    skip = jnp.dot(jnp.dot(rsel, x_raw, preferred_element_type=f32, precision=hi),
                   skt_ref[...], preferred_element_type=f32, precision=hi)
    skip = skip + bv[2:3, 0:Wo * Cout]

    o_ref[...] = jnp.reshape(pooled + skip, (1, Ho, Wo * Cout))


# ----------------------------------------------------------------------------
# Wrapper: one fused pallas_call for the whole Block.
# ----------------------------------------------------------------------------
def block_forward(x_nchw, prep):
    """x_nchw: (N, Cin, H, W) float32. `prep` comes from prepare_params()."""
    x = jnp.transpose(x_nchw, (0, 2, 3, 1)).astype(jnp.float32)  # NCHW -> NHWC
    N, H, W, Cin = x.shape
    Cout = prep["cout"]
    Ho = (H + 2 - 3) // 2 + 1
    Wo = (W + 2 - 3) // 2 + 1

    # Wrapper-side layout plumbing (free XLA ops): spatial zero-pad once for
    # the whole batch and flatten to the lane-dense (H+2, (W+2)*Cin) slab.
    xp = jnp.pad(x, ((0, 0), (1, 1), (1, 1), (0, 0)))
    xp = xp.reshape(N, H + 2, (W + 2) * Cin)

    kernel = functools.partial(_block_kernel, H=H, W=W, Cin=Cin, Cout=Cout)
    out = pl.pallas_call(
        kernel,
        out_shape=jax.ShapeDtypeStruct((N, Ho, Wo * Cout), jnp.float32),
        grid=(N,),
        in_specs=[
            pl.BlockSpec((1, H + 2, (W + 2) * Cin), lambda n: (n, 0, 0)),  # padded input
            pl.BlockSpec((18, W * Cout), lambda n: (0, 0)),                # dw taps (tiled)
            pl.BlockSpec((3, W * Cout), lambda n: (0, 0)),                 # biases (tiled)
            pl.BlockSpec((W * Cin, W * Cout), lambda n: (0, 0)),           # pw1 block-diag
            pl.BlockSpec((W * Cout, W * Cout), lambda n: (0, 0)),          # pw2 block-diag
            pl.BlockSpec((Ho, H), lambda n: (0, 0)),                       # stride-2 row select
            pl.BlockSpec((W * Cout, Wo * Cout), lambda n: (0, 0)),         # stride-2 col select
            pl.BlockSpec((W * Cin, Wo * Cout), lambda n: (0, 0)),          # skip conv (folded)
        ],
        out_specs=pl.BlockSpec((1, Ho, Wo * Cout), lambda n: (n, 0, 0)),
        scratch_shapes=[pltpu.VMEM((H + 2, (W + 2) * Cout), jnp.float32)],
        compiler_params=pltpu.CompilerParams(dimension_semantics=("parallel",)),
    )(xp, prep["dw"], prep["b"], prep["pw1"], prep["pw2"],
      prep["rsel"], prep["csel"], prep["skt"])

    return jnp.transpose(out.reshape(N, Ho, Wo, Cout), (0, 3, 1, 2))  # -> NCHW


# ----------------------------------------------------------------------------
# Parameters: raw (PyTorch-equivalent) init + one-time prep.
# ----------------------------------------------------------------------------
def init_params(key, in_f=4, out_f=8):
    ks = jax.random.split(key, 11)

    def bn_p(kg, kb, c):
        g = 1.0 + 0.1 * jax.random.normal(kg, (c,), jnp.float32)
        b = 0.1 * jax.random.normal(kb, (c,), jnp.float32)
        m = jnp.zeros((c,), jnp.float32)   # running_mean
        v = jnp.ones((c,), jnp.float32)    # running_var
        return g, b, m, v

    p = {}
    p["dw1"] = 0.1 * jax.random.normal(ks[0], (3, 3, in_f), jnp.float32)
    p["pw1"] = 0.1 * jax.random.normal(ks[1], (in_f, out_f), jnp.float32)
    p["g1"], p["be1"], p["m1"], p["v1"] = bn_p(ks[2], ks[3], out_f)
    p["dw2"] = 0.1 * jax.random.normal(ks[4], (3, 3, out_f), jnp.float32)
    p["pw2"] = 0.1 * jax.random.normal(ks[5], (out_f, out_f), jnp.float32)
    p["g2"], p["be2"], p["m2"], p["v2"] = bn_p(ks[6], ks[7], out_f)
    p["skip_w"] = 0.1 * jax.random.normal(ks[8], (in_f, out_f), jnp.float32)
    p["gs"], p["bes"], p["ms"], p["vs"] = bn_p(ks[9], ks[10], out_f)
    return p


def prepare_params(p, H, W, eps=1e-5):
    """Fold inference BN into the pointwise weights; tile taps/biases to the
    lane-dense (W*C) layout; build block-diagonal pointwise and stride-2
    selection matrices (one-time host-side prep)."""
    Cin = p["dw1"].shape[-1]
    Cout = p["pw1"].shape[1]
    Ho = (H + 2 - 3) // 2 + 1
    Wo = (W + 2 - 3) // 2 + 1
    f32 = jnp.float32

    def fold(pw, g, b, m, v):
        s = g / jnp.sqrt(v + eps)
        return pw * s[None, :], b - m * s

    pw1, b1 = fold(p["pw1"], p["g1"], p["be1"], p["m1"], p["v1"])
    pw2, b2 = fold(p["pw2"], p["g2"], p["be2"], p["m2"], p["v2"])
    skw, skb = fold(p["skip_w"], p["gs"], p["bes"], p["ms"], p["vs"])

    # Depthwise taps tiled W times along lanes; packed into one (18, W*Cout).
    dw1_t = jnp.tile(p["dw1"].reshape(9, Cin), (1, W))             # (9, W*Cin)
    dw2_t = jnp.tile(p["dw2"].reshape(9, Cout), (1, W))            # (9, W*Cout)
    dw_all = jnp.concatenate(
        [jnp.pad(dw1_t, ((0, 0), (0, W * (Cout - Cin)))), dw2_t], axis=0)

    # Biases tiled to lane-dense width; packed into one (3, W*Cout).
    b_all = jnp.stack([
        jnp.tile(b1, W),
        jnp.tile(b2, W),
        jnp.pad(jnp.tile(skb, Wo), (0, (W - Wo) * Cout)),
    ], axis=0)

    # Block-diagonal pointwise (1x1 conv in the (H, W*C) layout).
    pw1_big = jnp.kron(jnp.eye(W, dtype=f32), pw1)                 # (W*Cin,  W*Cout)
    pw2_big = jnp.kron(jnp.eye(W, dtype=f32), pw2)                 # (W*Cout, W*Cout)

    # Stride-2 selection matrices (0/1) for the maxpool subsample + skip conv.
    rsel = (jnp.arange(H)[None, :] == 2 * jnp.arange(Ho)[:, None]).astype(f32)
    selw = (jnp.arange(W)[:, None] == 2 * jnp.arange(Wo)[None, :]).astype(f32)
    csel = jnp.kron(selw, jnp.eye(Cout, dtype=f32))                # (W*Cout, Wo*Cout)
    skt = jnp.kron(selw, skw)                                      # (W*Cin,  Wo*Cout)

    return {"dw": dw_all, "b": b_all, "pw1": pw1_big, "pw2": pw2_big,
            "rsel": rsel, "csel": csel, "skt": skt,
            "cin": Cin, "cout": Cout}


# ----------------------------------------------------------------------------
# Pure-JAX reference (numerical validation), uses the raw parameters.
# ----------------------------------------------------------------------------
def ref_block(x_nchw, p, eps=1e-5):
    x = jnp.transpose(x_nchw, (0, 2, 3, 1)).astype(jnp.float32)
    hi = jax.lax.Precision.HIGHEST

    def bn(t, g, b, m, var):
        return (t - m) / jnp.sqrt(var + eps) * g + b

    def sep(t, dw_w, pw_w):
        C = t.shape[-1]
        d = lax.conv_general_dilated(
            t, dw_w.reshape(3, 3, 1, C), (1, 1), ((1, 1), (1, 1)),
            dimension_numbers=("NHWC", "HWIO", "NHWC"),
            feature_group_count=C, precision=hi)
        return jnp.einsum("nhwc,co->nhwo", d, pw_w, precision=hi)

    h = bn(sep(jnp.maximum(x, 0.0), p["dw1"], p["pw1"]),
           p["g1"], p["be1"], p["m1"], p["v1"])
    h = bn(sep(jnp.maximum(h, 0.0), p["dw2"], p["pw2"]),
           p["g2"], p["be2"], p["m2"], p["v2"])
    h = lax.reduce_window(h, -jnp.inf, lax.max, (1, 3, 3, 1), (1, 2, 2, 1),
                          ((0, 0), (1, 1), (1, 1), (0, 0)))
    skip = jnp.einsum("nhwc,co->nhwo", x[:, ::2, ::2, :], p["skip_w"],
                      precision=hi)
    skip = bn(skip, p["gs"], p["bes"], p["ms"], p["vs"])
    return jnp.transpose(h + skip, (0, 3, 1, 2))


if __name__ == "__main__":
    key = jax.random.PRNGKey(0)
    kx, kp = jax.random.split(key)
    x = jax.random.normal(kx, (2, 4, 16, 16), jnp.float32)  # NCHW, like PyTorch
    params = init_params(kp, in_f=4, out_f=8)
    prep = prepare_params(params, H=16, W=16)   # one-time prep (BN fold, tiling)

    fwd = jax.jit(lambda a: block_forward(a, prep))
    out = jax.block_until_ready(fwd(x))

    assert out.shape == (2, 8, 8, 8), out.shape
    ref = ref_block(x, params)
    np.testing.assert_allclose(np.asarray(out), np.asarray(ref),
                               rtol=1e-4, atol=1e-4)
    print("KERNEL_OK")
</pallas_src>

<mosaic_0001>
module attributes {stable_mosaic.version = 11 : i64} {
  func.func @_block_kernel(%arg0: i32, %arg1: memref<1x18x72xf32, #tpu.memory_space<vmem>>, %arg2: memref<18x128xf32, #tpu.memory_space<vmem>>, %arg3: memref<3x128xf32, #tpu.memory_space<vmem>>, %arg4: memref<64x128xf32, #tpu.memory_space<vmem>>, %arg5: memref<128x128xf32, #tpu.memory_space<vmem>>, %arg6: memref<8x16xf32, #tpu.memory_space<vmem>>, %arg7: memref<128x64xf32, #tpu.memory_space<vmem>>, %arg8: memref<64x64xf32, #tpu.memory_space<vmem>>, %arg9: memref<1x8x64xf32, #tpu.memory_space<vmem>>, %arg10: memref<18x144xf32, #tpu.memory_space<vmem>>) attributes {dimension_semantics = [#tpu.dimension_semantics<parallel>], iteration_bounds = array<i64: 2>, scalar_prefetch = 0 : i64, scratch_operands = 1 : i64, tpu.core_type = #tpu.core_type<tc>, window_params = [{transform_indices = @transform_0, window_bounds = array<i64: 1, 18, 72>}, {pipeline_mode = #tpu.pipeline_mode<synchronous>, transform_indices = @transform_1, window_bounds = array<i64: 18, 128>}, {pipeline_mode = #tpu.pipeline_mode<synchronous>, transform_indices = @transform_2, window_bounds = array<i64: 3, 128>}, {pipeline_mode = #tpu.pipeline_mode<synchronous>, transform_indices = @transform_3, window_bounds = array<i64: 64, 128>}, {pipeline_mode = #tpu.pipeline_mode<synchronous>, transform_indices = @transform_4, window_bounds = array<i64: 128, 128>}, {pipeline_mode = #tpu.pipeline_mode<synchronous>, transform_indices = @transform_5, window_bounds = array<i64: 8, 16>}, {pipeline_mode = #tpu.pipeline_mode<synchronous>, transform_indices = @transform_6, window_bounds = array<i64: 128, 64>}, {pipeline_mode = #tpu.pipeline_mode<synchronous>, transform_indices = @transform_7, window_bounds = array<i64: 64, 64>}, {transform_indices = @transform_8, window_bounds = array<i64: 1, 8, 64>}]} {
    %c0 = arith.constant 0 : index
    %c0_0 = arith.constant 0 : index
    %c0_1 = arith.constant 0 : index
    %0 = vector.load %arg1[%c0, %c0_0, %c0_1] : memref<1x18x72xf32, #tpu.memory_space<vmem>>, vector<1x18x72xf32>
    %1 = vector.shape_cast %0 : vector<1x18x72xf32> to vector<18x72xf32>
    %c0_2 = arith.constant 0 : index
    %c0_3 = arith.constant 0 : index
    %2 = vector.load %arg2[%c0_2, %c0_3] : memref<18x128xf32, #tpu.memory_space<vmem>>, vector<18x128xf32>
    %c0_4 = arith.constant 0 : index
    %c0_5 = arith.constant 0 : index
    %3 = vector.load %arg3[%c0_4, %c0_5] : memref<3x128xf32, #tpu.memory_space<vmem>>, vector<3x128xf32>
    %c0_6 = arith.constant 0 : index
    %c0_7 = arith.constant 0 : index
    %4 = vector.load %arg6[%c0_6, %c0_7] : memref<8x16xf32, #tpu.memory_space<vmem>>, vector<8x16xf32>
    %cst = arith.constant 0.000000e+00 : f32
    %5 = vector.broadcast %cst : f32 to vector<18x72xf32>
    %6 = arith.maximumf %1, %5 : vector<18x72xf32>
    %7 = vector.extract_strided_slice %6 {offsets = [0, 0], sizes = [16, 64], strides = [1, 1]} : vector<18x72xf32> to vector<16x64xf32>
    %8 = vector.extract_strided_slice %2 {offsets = [0, 0], sizes = [1, 64], strides = [1, 1]} : vector<18x128xf32> to vector<1x64xf32>
    %9 = vector.broadcast %8 : vector<1x64xf32> to vector<16x64xf32>
    %10 = arith.mulf %7, %9 : vector<16x64xf32>
    %11 = vector.extract_strided_slice %6 {offsets = [0, 4], sizes = [16, 64], strides = [1, 1]} : vector<18x72xf32> to vector<16x64xf32>
    %12 = vector.extract_strided_slice %2 {offsets = [1, 0], sizes = [1, 64], strides = [1, 1]} : vector<18x128xf32> to vector<1x64xf32>
    %13 = vector.broadcast %12 : vector<1x64xf32> to vector<16x64xf32>
    %14 = arith.mulf %11, %13 : vector<16x64xf32>
    %15 = arith.addf %10, %14 : vector<16x64xf32>
    %16 = vector.extract_strided_slice %6 {offsets = [0, 8], sizes = [16, 64], strides = [1, 1]} : vector<18x72xf32> to vector<16x64xf32>
    %17 = vector.extract_strided_slice %2 {offsets = [2, 0], sizes = [1, 64], strides = [1, 1]} : vector<18x128xf32> to vector<1x64xf32>
    %18 = vector.broadcast %17 : vector<1x64xf32> to vector<16x64xf32>
    %19 = arith.mulf %16, %18 : vector<16x64xf32>
    %20 = arith.addf %15, %19 : vector<16x64xf32>
    %21 = vector.extract_strided_slice %6 {offsets = [1, 0], sizes = [16, 64], strides = [1, 1]} : vector<18x72xf32> to vector<16x64xf32>
    %22 = vector.extract_strided_slice %2 {offsets = [3, 0], sizes = [1, 64], strides = [1, 1]} : vector<18x128xf32> to vector<1x64xf32>
    %23 = vector.broadcast %22 : vector<1x64xf32> to vector<16x64xf32>
    %24 = arith.mulf %21, %23 : vector<16x64xf32>
    %25 = arith.addf %20, %24 : vector<16x64xf32>
    %26 = vector.extract_strided_slice %6 {offsets = [1, 4], sizes = [16, 64], strides = [1, 1]} : vector<18x72xf32> to vector<16x64xf32>
    %27 = vector.extract_strided_slice %2 {offsets = [4, 0], sizes = [1, 64], strides = [1, 1]} : vector<18x128xf32> to vector<1x64xf32>
    %28 = vector.broadcast %27 : vector<1x64xf32> to vector<16x64xf32>
    %29 = arith.mulf %26, %28 : vector<16x64xf32>
    %30 = arith.addf %25, %29 : vector<16x64xf32>
    %31 = vector.extract_strided_slice %6 {offsets = [1, 8], sizes = [16, 64], strides = [1, 1]} : vector<18x72xf32> to vector<16x64xf32>
    %32 = vector.extract_strided_slice %2 {offsets = [5, 0], sizes = [1, 64], strides = [1, 1]} : vector<18x128xf32> to vector<1x64xf32>
    %33 = vector.broadcast %32 : vector<1x64xf32> to vector<16x64xf32>
    %34 = arith.mulf %31, %33 : vector<16x64xf32>
    %35 = arith.addf %30, %34 : vector<16x64xf32>
    %36 = vector.extract_strided_slice %6 {offsets = [2, 0], sizes = [16, 64], strides = [1, 1]} : vector<18x72xf32> to vector<16x64xf32>
    %37 = vector.extract_strided_slice %2 {offsets = [6, 0], sizes = [1, 64], strides = [1, 1]} : vector<18x128xf32> to vector<1x64xf32>
    %38 = vector.broadcast %37 : vector<1x64xf32> to vector<16x64xf32>
    %39 = arith.mulf %36, %38 : vector<16x64xf32>
    %40 = arith.addf %35, %39 : vector<16x64xf32>
    %41 = vector.extract_strided_slice %6 {offsets = [2, 4], sizes = [16, 64], strides = [1, 1]} : vector<18x72xf32> to vector<16x64xf32>
    %42 = vector.extract_strided_slice %2 {offsets = [7, 0], sizes = [1, 64], strides = [1, 1]} : vector<18x128xf32> to vector<1x64xf32>
    %43 = vector.broadcast %42 : vector<1x64xf32> to vector<16x64xf32>
    %44 = arith.mulf %41, %43 : vector<16x64xf32>
    %45 = arith.addf %40, %44 : vector<16x64xf32>
    %46 = vector.extract_strided_slice %6 {offsets = [2, 8], sizes = [16, 64], strides = [1, 1]} : vector<18x72xf32> to vector<16x64xf32>
    %47 = vector.extract_strided_slice %2 {offsets = [8, 0], sizes = [1, 64], strides = [1, 1]} : vector<18x128xf32> to vector<1x64xf32>
    %48 = vector.broadcast %47 : vector<1x64xf32> to vector<16x64xf32>
    %49 = arith.mulf %46, %48 : vector<16x64xf32>
    %50 = arith.addf %45, %49 : vector<16x64xf32>
    %c0_8 = arith.constant 0 : index
    %c0_9 = arith.constant 0 : index
    %51 = vector.load %arg4[%c0_8, %c0_9] : memref<64x128xf32, #tpu.memory_space<vmem>>, vector<64x128xf32>
    %cst_10 = arith.constant dense<0.000000e+00> : vector<16x128xf32>
    %52 = tpu.matmul %50, %51, %cst_10 {dimension_numbers = #tpu.dot_dimension_numbers<[1], [0], [0], [1], [0, 0, 1, 1], [], []>, precision = #tpu.contract_precision<fp32>} : vector<16x64xf32>, vector<64x128xf32>, vector<16x128xf32> -> vector<16x128xf32>
    %53 = vector.extract_strided_slice %3 {offsets = [0, 0], sizes = [1, 128], strides = [1, 1]} : vector<3x128xf32> to vector<1x128xf32>
    %54 = vector.broadcast %53 : vector<1x128xf32> to vector<16x128xf32>
    %55 = arith.addf %52, %54 : vector<16x128xf32>
    %cst_11 = arith.constant 0.000000e+00 : f32
    %56 = vector.broadcast %cst_11 : f32 to vector<16x128xf32>
    %57 = arith.maximumf %55, %56 : vector<16x128xf32>
    %cst_12 = arith.constant 0.000000e+00 : f32
    %58 = vector.broadcast %cst_12 : f32 to vector<1x144xf32>
    %c0_13 = arith.constant 0 : index
    %c0_14 = arith.constant 0 : index
    %59 = vector.load %arg10[%c0_13, %c0_14] : memref<18x144xf32, #tpu.memory_space<vmem>>, vector<1x144xf32>
    tpu.vector_store %arg10[%c0_13, %c0_14], %58 {strides = array<i32>} : memref<18x144xf32, #tpu.memory_space<vmem>>, vector<1x144xf32>,
    %cst_15 = arith.constant 0.000000e+00 : f32
    %60 = vector.broadcast %cst_15 : f32 to vector<1x144xf32>
    %c17 = arith.constant 17 : index
    %c0_16 = arith.constant 0 : index
    %61 = vector.load %arg10[%c17, %c0_16] : memref<18x144xf32, #tpu.memory_space<vmem>>, vector<1x144xf32>
    tpu.vector_store %arg10[%c17, %c0_16], %60 {strides = array<i32>} : memref<18x144xf32, #tpu.memory_space<vmem>>, vector<1x144xf32>,
    %cst_17 = arith.constant 0.000000e+00 : f32
    %62 = vector.broadcast %cst_17 : f32 to vector<18x8xf32>
    %c0_18 = arith.constant 0 : index
    %c0_19 = arith.constant 0 : index
    %63 = vector.load %arg10[%c0_18, %c0_19] : memref<18x144xf32, #tpu.memory_space<vmem>>, vector<18x8xf32>
    tpu.vector_store %arg10[%c0_18, %c0_19], %62 {strides = array<i32>} : memref<18x144xf32, #tpu.memory_space<vmem>>, vector<18x8xf32>,
    %cst_20 = arith.constant 0.000000e+00 : f32
    %64 = vector.broadcast %cst_20 : f32 to vector<18x8xf32>
    %c0_21 = arith.constant 0 : index
    %c136 = arith.constant 136 : index
    %65 = vector.load %arg10[%c0_21, %c136] : memref<18x144xf32, #tpu.memory_space<vmem>>, vector<18x8xf32>
    tpu.vector_store %arg10[%c0_21, %c136], %64 {strides = array<i32>} : memref<18x144xf32, #tpu.memory_space<vmem>>, vector<18x8xf32>,
    %c1 = arith.constant 1 : index
    %c8 = arith.constant 8 : index
    %66 = vector.load %arg10[%c1, %c8] : memref<18x144xf32, #tpu.memory_space<vmem>>, vector<16x128xf32>
    tpu.vector_store %arg10[%c1, %c8], %57 {strides = array<i32>} : memref<18x144xf32, #tpu.memory_space<vmem>>, vector<16x128xf32>,
    %c0_22 = arith.constant 0 : index
    %c0_23 = arith.constant 0 : index
    %67 = vector.load %arg10[%c0_22, %c0_23] : memref<18x144xf32, #tpu.memory_space<vmem>>, vector<16x128xf32>
    %68 = vector.extract_strided_slice %2 {offsets = [9, 0], sizes = [1, 128], strides = [1, 1]} : vector<18x128xf32> to vector<1x128xf32>
    %69 = vector.broadcast %68 : vector<1x128xf32> to vector<16x128xf32>
    %70 = arith.mulf %67, %69 : vector<16x128xf32>
    %c0_24 = arith.constant 0 : index
    %c8_25 = arith.constant 8 : index
    %71 = vector.load %arg10[%c0_24, %c8_25] : memref<18x144xf32, #tpu.memory_space<vmem>>, vector<16x128xf32>
    %72 = vector.extract_strided_slice %2 {offsets = [10, 0], sizes = [1, 128], strides = [1, 1]} : vector<18x128xf32> to vector<1x128xf32>
    %73 = vector.broadcast %72 : vector<1x128xf32> to vector<16x128xf32>
    %74 = arith.mulf %71, %73 : vector<16x128xf32>
    %75 = arith.addf %70, %74 : vector<16x128xf32>
    %c0_26 = arith.constant 0 : index
    %c16 = arith.constant 16 : index
    %76 = vector.load %arg10[%c0_26, %c16] : memref<18x144xf32, #tpu.memory_space<vmem>>, vector<16x128xf32>
    %77 = vector.extract_strided_slice %2 {offsets = [11, 0], sizes = [1, 128], strides = [1, 1]} : vector<18x128xf32> to vector<1x128xf32>
    %78 = vector.broadcast %77 : vector<1x128xf32> to vector<16x128xf32>
    %79 = arith.mulf %76, %78 : vector<16x128xf32>
    %80 = arith.addf %75, %79 : vector<16x128xf32>
    %c1_27 = arith.constant 1 : index
    %c0_28 = arith.constant 0 : index
    %81 = vector.load %arg10[%c1_27, %c0_28] : memref<18x144xf32, #tpu.memory_space<vmem>>, vector<16x128xf32>
    %82 = vector.extract_strided_slice %2 {offsets = [12, 0], sizes = [1, 128], strides = [1, 1]} : vector<18x128xf32> to vector<1x128xf32>
    %83 = vector.broadcast %82 : vector<1x128xf32> to vector<16x128xf32>
    %84 = arith.mulf %81, %83 : vector<16x128xf32>
    %85 = arith.addf %80, %84 : vector<16x128xf32>
    %c1_29 = arith.constant 1 : index
    %c8_30 = arith.constant 8 : index
    %86 = vector.load %arg10[%c1_29, %c8_30] : memref<18x144xf32, #tpu.memory_space<vmem>>, vector<16x128xf32>
    %87 = vector.extract_strided_slice %2 {offsets = [13, 0], sizes = [1, 128], strides = [1, 1]} : vector<18x128xf32> to vector<1x128xf32>
    %88 = vector.broadcast %87 : vector<1x128xf32> to vector<16x128xf32>
    %89 = arith.mulf %86, %88 : vector<16x128xf32>
    %90 = arith.addf %85, %89 : vector<16x128xf32>
    %c1_31 = arith.constant 1 : index
    %c16_32 = arith.constant 16 : index
    %91 = vector.load %arg10[%c1_31, %c16_32] : memref<18x144xf32, #tpu.memory_space<vmem>>, vector<16x128xf32>
    %92 = vector.extract_strided_slice %2 {offsets = [14, 0], sizes = [1, 128], strides = [1, 1]} : vector<18x128xf32> to vector<1x128xf32>
    %93 = vector.broadcast %92 : vector<1x128xf32> to vector<16x128xf32>
    %94 = arith.mulf %91, %93 : vector<16x128xf32>
    %95 = arith.addf %90, %94 : vector<16x128xf32>
    %c2 = arith.constant 2 : index
    %c0_33 = arith.constant 0 : index
    %96 = vector.load %arg10[%c2, %c0_33] : memref<18x144xf32, #tpu.memory_space<vmem>>, vector<16x128xf32>
    %97 = vector.extract_strided_slice %2 {offsets = [15, 0], sizes = [1, 128], strides = [1, 1]} : vector<18x128xf32> to vector<1x128xf32>
    %98 = vector.broadcast %97 : vector<1x128xf32> to vector<16x128xf32>
    %99 = arith.mulf %96, %98 : vector<16x128xf32>
    %100 = arith.addf %95, %99 : vector<16x128xf32>
    %c2_34 = arith.constant 2 : index
    %c8_35 = arith.constant 8 : index
    %101 = vector.load %arg10[%c2_34, %c8_35] : memref<18x144xf32, #tpu.memory_space<vmem>>, vector<16x128xf32>
    %102 = vector.extract_strided_slice %2 {offsets = [16, 0], sizes = [1, 128], strides = [1, 1]} : vector<18x128xf32> to vector<1x128xf32>
    %103 = vector.broadcast %102 : vector<1x128xf32> to vector<16x128xf32>
    %104 = arith.mulf %101, %103 : vector<16x128xf32>
    %105 = arith.addf %100, %104 : vector<16x128xf32>
    %c2_36 = arith.constant 2 : index
    %c16_37 = arith.constant 16 : index
    %106 = vector.load %arg10[%c2_36, %c16_37] : memref<18x144xf32, #tpu.memory_space<vmem>>, vector<16x128xf32>
    %107 = vector.extract_strided_slice %2 {offsets = [17, 0], sizes = [1, 128], strides = [1, 1]} : vector<18x128xf32> to vector<1x128xf32>
    %108 = vector.broadcast %107 : vector<1x128xf32> to vector<16x128xf32>
    %109 = arith.mulf %106, %108 : vector<16x128xf32>
    %110 = arith.addf %105, %109 : vector<16x128xf32>
    %c0_38 = arith.constant 0 : index
    %c0_39 = arith.constant 0 : index
    %111 = vector.load %arg5[%c0_38, %c0_39] : memref<128x128xf32, #tpu.memory_space<vmem>>, vector<128x128xf32>
    %cst_40 = arith.constant dense<0.000000e+00> : vector<16x128xf32>
    %112 = tpu.matmul %110, %111, %cst_40 {dimension_numbers = #tpu.dot_dimension_numbers<[1], [0], [0], [1], [0, 0, 1, 1], [], []>, precision = #tpu.contract_precision<fp32>} : vector<16x128xf32>, vector<128x128xf32>, vector<16x128xf32> -> vector<16x128xf32>
    %113 = vector.extract_strided_slice %3 {offsets = [1, 0], sizes = [1, 128], strides = [1, 1]} : vector<3x128xf32> to vector<1x128xf32>
    %114 = vector.broadcast %113 : vector<1x128xf32> to vector<16x128xf32>
    %115 = arith.addf %112, %114 : vector<16x128xf32>
    %cst_41 = arith.constant -3.40282347E+38 : f32
    %116 = vector.broadcast %cst_41 : f32 to vector<1x144xf32>
    %c0_42 = arith.constant 0 : index
    %c0_43 = arith.constant 0 : index
    %117 = vector.load %arg10[%c0_42, %c0_43] : memref<18x144xf32, #tpu.memory_space<vmem>>, vector<1x144xf32>
    tpu.vector_store %arg10[%c0_42, %c0_43], %116 {strides = array<i32>} : memref<18x144xf32, #tpu.memory_space<vmem>>, vector<1x144xf32>,
    %cst_44 = arith.constant -3.40282347E+38 : f32
    %118 = vector.broadcast %cst_44 : f32 to vector<1x144xf32>
    %c17_45 = arith.constant 17 : index
    %c0_46 = arith.constant 0 : index
    %119 = vector.load %arg10[%c17_45, %c0_46] : memref<18x144xf32, #tpu.memory_space<vmem>>, vector<1x144xf32>
    tpu.vector_store %arg10[%c17_45, %c0_46], %118 {strides = array<i32>} : memref<18x144xf32, #tpu.memory_space<vmem>>, vector<1x144xf32>,
    %cst_47 = arith.constant -3.40282347E+38 : f32
    %120 = vector.broadcast %cst_47 : f32 to vector<18x8xf32>
    %c0_48 = arith.constant 0 : index
    %c0_49 = arith.constant 0 : index
    %121 = vector.load %arg10[%c0_48, %c0_49] : memref<18x144xf32, #tpu.memory_space<vmem>>, vector<18x8xf32>
    tpu.vector_store %arg10[%c0_48, %c0_49], %120 {strides = array<i32>} : memref<18x144xf32, #tpu.memory_space<vmem>>, vector<18x8xf32>,
    %cst_50 = arith.constant -3.40282347E+38 : f32
    %122 = vector.broadcast %cst_50 : f32 to vector<18x8xf32>
    %c0_51 = arith.constant 0 : index
    %c136_52 = arith.constant 136 : index
    %123 = vector.load %arg10[%c0_51, %c136_52] : memref<18x144xf32, #tpu.memory_space<vmem>>, vector<18x8xf32>
    tpu.vector_store %arg10[%c0_51, %c136_52], %122 {strides = array<i32>} : memref<18x144xf32, #tpu.memory_space<vmem>>, vector<18x8xf32>,
    %c1_53 = arith.constant 1 : index
    %c8_54 = arith.constant 8 : index
    %124 = vector.load %arg10[%c1_53, %c8_54] : memref<18x144xf32, #tpu.memory_space<vmem>>, vector<16x128xf32>
    tpu.vector_store %arg10[%c1_53, %c8_54], %115 {strides = array<i32>} : memref<18x144xf32, #tpu.memory_space<vmem>>, vector<16x128xf32>,
    %c0_55 = arith.constant 0 : index
    %c0_56 = arith.constant 0 : index
    %125 = vector.load %arg10[%c0_55, %c0_56] : memref<18x144xf32, #tpu.memory_space<vmem>>, vector<16x128xf32>
    %c0_57 = arith.constant 0 : index
    %c8_58 = arith.constant 8 : index
    %126 = vector.load %arg10[%c0_57, %c8_58] : memref<18x144xf32, #tpu.memory_space<vmem>>, vector<16x128xf32>
    %127 = arith.maximumf %125, %126 : vector<16x128xf32>
    %c0_59 = arith.constant 0 : index
    %c16_60 = arith.constant 16 : index
    %128 = vector.load %arg10[%c0_59, %c16_60] : memref<18x144xf32, #tpu.memory_space<vmem>>, vector<16x128xf32>
    %129 = arith.maximumf %127, %128 : vector<16x128xf32>
    %c1_61 = arith.constant 1 : index
    %c0_62 = arith.constant 0 : index
    %130 = vector.load %arg10[%c1_61, %c0_62] : memref<18x144xf32, #tpu.memory_space<vmem>>, vector<16x128xf32>
    %131 = arith.maximumf %129, %130 : vector<16x128xf32>
    %c1_63 = arith.constant 1 : index
    %c8_64 = arith.constant 8 : index
    %132 = vector.load %arg10[%c1_63, %c8_64] : memref<18x144xf32, #tpu.memory_space<vmem>>, vector<16x128xf32>
    %133 = arith.maximumf %131, %132 : vector<16x128xf32>
    %c1_65 = arith.constant 1 : index
    %c16_66 = arith.constant 16 : index
    %134 = vector.load %arg10[%c1_65, %c16_66] : memref<18x144xf32, #tpu.memory_space<vmem>>, vector<16x128xf32>
    %135 = arith.maximumf %133, %134 : vector<16x128xf32>
    %c2_67 = arith.constant 2 : index
    %c0_68 = arith.constant 0 : index
    %136 = vector.load %arg10[%c2_67, %c0_68] : memref<18x144xf32, #tpu.memory_space<vmem>>, vector<16x128xf32>
    %137 = arith.maximumf %135, %136 : vector<16x128xf32>
    %c2_69 = arith.constant 2 : index
    %c8_70 = arith.constant 8 : index
    %138 = vector.load %arg10[%c2_69, %c8_70] : memref<18x144xf32, #tpu.memory_space<vmem>>, vector<16x128xf32>
    %139 = arith.maximumf %137, %138 : vector<16x128xf32>
    %c2_71 = arith.constant 2 : index
    %c16_72 = arith.constant 16 : index
    %140 = vector.load %arg10[%c2_71, %c16_72] : memref<18x144xf32, #tpu.memory_space<vmem>>, vector<16x128xf32>
    %141 = arith.maximumf %139, %140 : vector<16x128xf32>
    %cst_73 = arith.constant dense<0.000000e+00> : vector<8x128xf32>
    %142 = tpu.matmul %4, %141, %cst_73 {dimension_numbers = #tpu.dot_dimension_numbers<[1], [0], [0], [1], [0, 0, 1, 1], [], []>, precision = #tpu.contract_precision<fp32>} : vector<8x16xf32>, vector<16x128xf32>, vector<8x128xf32> -> vector<8x128xf32>
    %c0_74 = arith.constant 0 : index
    %c0_75 = arith.constant 0 : index
    %143 = vector.load %arg7[%c0_74, %c0_75] : memref<128x64xf32, #tpu.memory_space<vmem>>, vector<128x64xf32>
    %cst_76 = arith.constant dense<0.000000e+00> : vector<8x64xf32>
    %144 = tpu.matmul %142, %143, %cst_76 {dimension_numbers = #tpu.dot_dimension_numbers<[1], [0], [0], [1], [0, 0, 1, 1], [], []>, precision = #tpu.contract_precision<fp32>} : vector<8x128xf32>, vector<128x64xf32>, vector<8x64xf32> -> vector<8x64xf32>
    %145 = vector.extract_strided_slice %1 {offsets = [1, 4], sizes = [16, 64], strides = [1, 1]} : vector<18x72xf32> to vector<16x64xf32>
    %cst_77 = arith.constant dense<0.000000e+00> : vector<8x64xf32>
    %146 = tpu.matmul %4, %145, %cst_77 {dimension_numbers = #tpu.dot_dimension_numbers<[1], [0], [0], [1], [0, 0, 1, 1], [], []>, precision = #tpu.contract_precision<fp32>} : vector<8x16xf32>, vector<16x64xf32>, vector<8x64xf32> -> vector<8x64xf32>
    %c0_78 = arith.constant 0 : index
    %c0_79 = arith.constant 0 : index
    %147 = vector.load %arg8[%c0_78, %c0_79] : memref<64x64xf32, #tpu.memory_space<vmem>>, vector<64x64xf32>
    %cst_80 = arith.constant dense<0.000000e+00> : vector<8x64xf32>
    %148 = tpu.matmul %146, %147, %cst_80 {dimension_numbers = #tpu.dot_dimension_numbers<[1], [0], [0], [1], [0, 0, 1, 1], [], []>, precision = #tpu.contract_precision<fp32>} : vector<8x64xf32>, vector<64x64xf32>, vector<8x64xf32> -> vector<8x64xf32>
    %149 = vector.extract_strided_slice %3 {offsets = [2, 0], sizes = [1, 64], strides = [1, 1]} : vector<3x128xf32> to vector<1x64xf32>
    %150 = vector.broadcast %149 : vector<1x64xf32> to vector<8x64xf32>
    %151 = arith.addf %148, %150 : vector<8x64xf32>
    %152 = arith.addf %144, %151 : vector<8x64xf32>
    %153 = vector.shape_cast %152 : vector<8x64xf32> to vector<1x8x64xf32>
    %c0_81 = arith.constant 0 : index
    %c0_82 = arith.constant 0 : index
    %c0_83 = arith.constant 0 : index
    %154 = vector.load %arg9[%c0_81, %c0_82, %c0_83] : memref<1x8x64xf32, #tpu.memory_space<vmem>>, vector<1x8x64xf32>
    tpu.vector_store %arg9[%c0_81, %c0_82, %c0_83], %153 {strides = array<i32>} : memref<1x8x64xf32, #tpu.memory_space<vmem>>, vector<1x8x64xf32>,
    return
  }
  func.func @transform_0(%arg0: i32) -> (i32, i32, i32) {
    %c0_i32 = arith.constant 0 : i32
    %c0_i32_0 = arith.constant 0 : i32
    %c0_i32_1 = arith.constant 0 : i32
    return %arg0, %c0_i32, %c0_i32_0 : i32, i32, i32
  }
  func.func @transform_1(%arg0: i32) -> (i32, i32) {
    %c0_i32 = arith.constant 0 : i32
    %c0_i32_0 = arith.constant 0 : i32
    %c0_i32_1 = arith.constant 0 : i32
    return %c0_i32, %c0_i32_0 : i32, i32
  }
  func.func @transform_2(%arg0: i32) -> (i32, i32) {
    %c0_i32 = arith.constant 0 : i32
    %c0_i32_0 = arith.constant 0 : i32
    %c0_i32_1 = arith.constant 0 : i32
    return %c0_i32, %c0_i32_0 : i32, i32
  }
  func.func @transform_3(%arg0: i32) -> (i32, i32) {
    %c0_i32 = arith.constant 0 : i32
    %c0_i32_0 = arith.constant 0 : i32
    %c0_i32_1 = arith.constant 0 : i32
    return %c0_i32, %c0_i32_0 : i32, i32
  }
  func.func @transform_4(%arg0: i32) -> (i32, i32) {
    %c0_i32 = arith.constant 0 : i32
    %c0_i32_0 = arith.constant 0 : i32
    %c0_i32_1 = arith.constant 0 : i32
    return %c0_i32, %c0_i32_0 : i32, i32
  }
  func.func @transform_5(%arg0: i32) -> (i32, i32) {
    %c0_i32 = arith.constant 0 : i32
    %c0_i32_0 = arith.constant 0 : i32
    %c0_i32_1 = arith.constant 0 : i32
    return %c0_i32, %c0_i32_0 : i32, i32
  }
  func.func @transform_6(%arg0: i32) -> (i32, i32) {
    %c0_i32 = arith.constant 0 : i32
    %c0_i32_0 = arith.constant 0 : i32
    %c0_i32_1 = arith.constant 0 : i32
    return %c0_i32, %c0_i32_0 : i32, i32
  }
  func.func @transform_7(%arg0: i32) -> (i32, i32) {
    %c0_i32 = arith.constant 0 : i32
    %c0_i32_0 = arith.constant 0 : i32
    %c0_i32_1 = arith.constant 0 : i32
    return %c0_i32, %c0_i32_0 : i32, i32
  }
  func.func @transform_8(%arg0: i32) -> (i32, i32, i32) {
    %c0_i32 = arith.constant 0 : i32
    %c0_i32_0 = arith.constant 0 : i32
    %c0_i32_1 = arith.constant 0 : i32
    return %arg0, %c0_i32, %c0_i32_0 : i32, i32, i32
  }
}

</mosaic_0001>

<llo_original>
// kernel: _lambda_.1
$region0: #{_lambda_.1}
  #allocation0 [shape = 'u32[]', space=smem, size = 0x4, offset = 0x4, fixed_abs, tag = 'smem constant byte address 0x4 - core index']
  #allocation1 [shape = 'u32[144,128]{1,0:T(1,128)}', space=vmem, size = 0x12000, scoped, tag = 'internal scratch']
  #allocation2 [shape = 'f32[18,144]{1,0:T(8,128)}', space=vmem, size = 0x6000, scoped, tag = 'scratch operand']
  %s0 = inlined_call_operand.vmem [shape: f32[2,18,72], index: 0, kind: input, shape index: {}]
  %s1 = inlined_call_operand.vmem [shape: f32[18,128], index: 1, kind: input, shape index: {}]
  %s2 = inlined_call_operand.vmem [shape: f32[3,128], index: 2, kind: input, shape index: {}]
  %s3 = inlined_call_operand.vmem [shape: f32[64,128], index: 3, kind: input, shape index: {}]
  %s4 = inlined_call_operand.vmem [shape: f32[128,128], index: 4, kind: input, shape index: {}]
  %s5 = inlined_call_operand.vmem [shape: f32[8,16], index: 5, kind: input, shape index: {}]
  %s6 = inlined_call_operand.vmem [shape: f32[128,64], index: 6, kind: input, shape index: {}]
  %s7 = inlined_call_operand.vmem [shape: f32[64,64], index: 7, kind: input, shape index: {}]
  %s8 = inlined_call_operand.vmem [shape: f32[2,8,64], index: 8, kind: output, shape index: {}]
  %s9 = sld [smem:[#allocation0]]
  $region65: #{_lambda_.1} parent=0
    _
  %s11 = ssub.s32 1, %s9
  %s12 = scalar_select 0, %s11, %s9
  loop: start=0, step=1, limit=4
  $region2: #{_lambda_.1} parent=0 // loop_pre_header
    _
  $region3: #{_lambda_.1} parent=0 // loop_header
    %s14 = sphi 0, %s18
    %p15 = scmp.ge.s32.totalorder %s14, 4
    %s24 = sphi 0, %s26
    %s27 = sphi 0, %s24
    %s28 = sphi 0, %s27
    %s44 = sphi 0, %s28
    %s48 = sphi 0, %s48
    %s50 = sphi 0, %s48
    %s51 = sphi 0, %s50
    %s65 = sphi 0, %s51
    %s69 = sphi 0, %s69
    %s71 = sphi 0, %s69
    %s72 = sphi 0, %s71
    %s86 = sphi 0, %s72
    %s90 = sphi 0, %s90
    %s92 = sphi 0, %s90
    %s93 = sphi 0, %s92
    %s107 = sphi 0, %s93
    %s111 = sphi 0, %s111
    %s113 = sphi 0, %s111
    %s114 = sphi 0, %s113
    %s128 = sphi 0, %s114
    %s132 = sphi 0, %s132
    %s134 = sphi 0, %s132
    %s135 = sphi 0, %s134
    %s149 = sphi 0, %s135
    %s153 = sphi 0, %s153
    %s155 = sphi 0, %s153
    %s156 = sphi 0, %s155
    %s170 = sphi 0, %s156
    %s174 = sphi 0, %s174
    %s176 = sphi 0, %s174
    %s177 = sphi 0, %s176
    %s191 = sphi 0, %s177
    %s197 = sphi 0, %s199
    %s200 = sphi 0, %s197
    %s201 = sphi 0, %s200
    %s217 = sphi 0, %s201
  $region4: #{_lambda_.1} parent=0 // loop_header_branch
    %17 = sbr.rel (%p15) target = $region8
  $region5: #{_lambda_.1} parent=0 // loop_body
    %s19 = ssub.s32 %s14, 1
    %s20 = ssub.s32 %s14, 2
    %s21 = sadd.s32 %s14, 1
    %s22 = ssub.s32 %s14, %s21
    %p23 = scmp.eq.s32.totalorder %s22, 0
    %s25 = sadd.s32 %s24, 1
    %s26 = scalar_select %p23, %s24, %s25
    %p29 = pneg %p23
    %p30 = scmp.eq.s32.totalorder %s14, 1
    %p31 = por %p29, %p30
    %p32 = scmp.ne.s32.totalorder %s24, %s27
    %p33 = scmp.eq.s32.totalorder %s14, 0
    %p34 = por %p32, %p33
    %p35 = scmp.ne.s32.totalorder %s24, %s27
    %p36 = scmp.eq.s32.totalorder %s19, 1
    %p37 = por %p35, %p36
    %p38 = scmp.ne.s32.totalorder %s27, %s28
    %p39 = scmp.eq.s32.totalorder %s19, 0
    %p40 = por %p38, %p39
    %p41 = scmp.ne.s32.totalorder %s27, %s28
    %p42 = scmp.eq.s32.totalorder %s20, 1
    %p43 = por %p41, %p42
    %p45 = scmp.ne.s32.totalorder %s28, %s44
    %p46 = scmp.eq.s32.totalorder %s20, 0
    %p47 = por %p45, %p46
    %s49 = sadd.s32 %s48, 1
    %p52 = scmp.eq.s32.totalorder %s14, 1
    %p53 = scmp.ne.s32.totalorder %s48, %s50
    %p54 = scmp.eq.s32.totalorder %s14, 0
    %p55 = por %p53, %p54
    %p56 = scmp.ne.s32.totalorder %s48, %s50
    %p57 = scmp.eq.s32.totalorder %s19, 1
    %p58 = por %p56, %p57
    %p59 = scmp.ne.s32.totalorder %s50, %s51
    %p60 = scmp.eq.s32.totalorder %s19, 0
    %p61 = por %p59, %p60
    %p62 = scmp.ne.s32.totalorder %s50, %s51
    %p63 = scmp.eq.s32.totalorder %s20, 1
    %p64 = por %p62, %p63
    %p66 = scmp.ne.s32.totalorder %s51, %s65
    %p67 = scmp.eq.s32.totalorder %s20, 0
    %p68 = por %p66, %p67
    %s70 = sadd.s32 %s69, 1
    %p73 = scmp.eq.s32.totalorder %s14, 1
    %p74 = scmp.ne.s32.totalorder %s69, %s71
    %p75 = scmp.eq.s32.totalorder %s14, 0
    %p76 = por %p74, %p75
    %p77 = scmp.ne.s32.totalorder %s69, %s71
    %p78 = scmp.eq.s32.totalorder %s19, 1
    %p79 = por %p77, %p78
    %p80 = scmp.ne.s32.totalorder %s71, %s72
    %p81 = scmp.eq.s32.totalorder %s19, 0
    %p82 = por %p80, %p81
    %p83 = scmp.ne.s32.totalorder %s71, %s72
    %p84 = scmp.eq.s32.totalorder %s20, 1
    %p85 = por %p83, %p84
    %p87 = scmp.ne.s32.totalorder %s72, %s86
    %p88 = scmp.eq.s32.totalorder %s20, 0
    %p89 = por %p87, %p88
    %s91 = sadd.s32 %s90, 1
    %p94 = scmp.eq.s32.totalorder %s14, 1
    %p95 = scmp.ne.s32.totalorder %s90, %s92
    %p96 = scmp.eq.s32.totalorder %s14, 0
    %p97 = por %p95, %p96
    %p98 = scmp.ne.s32.totalorder %s90, %s92
    %p99 = scmp.eq.s32.totalorder %s19, 1
    %p100 = por %p98, %p99
    %p101 = scmp.ne.s32.totalorder %s92, %s93
    %p102 = scmp.eq.s32.totalorder %s19, 0
    %p103 = por %p101, %p102
    %p104 = scmp.ne.s32.totalorder %s92, %s93
    %p105 = scmp.eq.s32.totalorder %s20, 1
    %p106 = por %p104, %p105
    %p108 = scmp.ne.s32.totalorder %s93, %s107
    %p109 = scmp.eq.s32.totalorder %s20, 0
    %p110 = por %p108, %p109
    %s112 = sadd.s32 %s111, 1
    %p115 = scmp.eq.s32.totalorder %s14, 1
    %p116 = scmp.ne.s32.totalorder %s111, %s113
    %p117 = scmp.eq.s32.totalorder %s14, 0
    %p118 = por %p116, %p117
    %p119 = scmp.ne.s32.totalorder %s111, %s113
    %p120 = scmp.eq.s32.totalorder %s19, 1
    %p121 = por %p119, %p120
    %p122 = scmp.ne.s32.totalorder %s113, %s114
    %p123 = scmp.eq.s32.totalorder %s19, 0
    %p124 = por %p122, %p123
    %p125 = scmp.ne.s32.totalorder %s113, %s114
    %p126 = scmp.eq.s32.totalorder %s20, 1
    %p127 = por %p125, %p126
    %p129 = scmp.ne.s32.totalorder %s114, %s128
    %p130 = scmp.eq.s32.totalorder %s20, 0
    %p131 = por %p129, %p130
    %s133 = sadd.s32 %s132, 1
    %p136 = scmp.eq.s32.totalorder %s14, 1
    %p137 = scmp.ne.s32.totalorder %s132, %s134
    %p138 = scmp.eq.s32.totalorder %s14, 0
    %p139 = por %p137, %p138
    %p140 = scmp.ne.s32.totalorder %s132, %s134
    %p141 = scmp.eq.s32.totalorder %s19, 1
    %p142 = por %p140, %p141
    %p143 = scmp.ne.s32.totalorder %s134, %s135
    %p144 = scmp.eq.s32.totalorder %s19, 0
    %p145 = por %p143, %p144
    %p146 = scmp.ne.s32.totalorder %s134, %s135
    %p147 = scmp.eq.s32.totalorder %s20, 1
    %p148 = por %p146, %p147
    %p150 = scmp.ne.s32.totalorder %s135, %s149
    %p151 = scmp.eq.s32.totalorder %s20, 0
    %p152 = por %p150, %p151
    %s154 = sadd.s32 %s153, 1
    %p157 = scmp.eq.s32.totalorder %s14, 1
    %p158 = scmp.ne.s32.totalorder %s153, %s155
    %p159 = scmp.eq.s32.totalorder %s14, 0
    %p160 = por %p158, %p159
    %p161 = scmp.ne.s32.totalorder %s153, %s155
    %p162 = scmp.eq.s32.totalorder %s19, 1
    %p163 = por %p161, %p162
    %p164 = scmp.ne.s32.totalorder %s155, %s156
    %p165 = scmp.eq.s32.totalorder %s19, 0
    %p166 = por %p164, %p165
    %p167 = scmp.ne.s32.totalorder %s155, %s156
    %p168 = scmp.eq.s32.totalorder %s20, 1
    %p169 = por %p167, %p168
    %p171 = scmp.ne.s32.totalorder %s156, %s170
    %p172 = scmp.eq.s32.totalorder %s20, 0
    %p173 = por %p171, %p172
    %s175 = sadd.s32 %s174, 1
    %p178 = scmp.eq.s32.totalorder %s14, 1
    %p179 = scmp.ne.s32.totalorder %s174, %s176
    %p180 = scmp.eq.s32.totalorder %s14, 0
    %p181 = por %p179, %p180
    %p182 = scmp.ne.s32.totalorder %s174, %s176
    %p183 = scmp.eq.s32.totalorder %s19, 1
    %p184 = por %p182, %p183
    %p185 = scmp.ne.s32.totalorder %s176, %s177
    %p186 = scmp.eq.s32.totalorder %s19, 0
    %p187 = por %p185, %p186
    %p188 = scmp.ne.s32.totalorder %s176, %s177
    %p189 = scmp.eq.s32.totalorder %s20, 1
    %p190 = por %p188, %p189
    %p192 = scmp.ne.s32.totalorder %s177, %s191
    %p193 = scmp.eq.s32.totalorder %s20, 0
    %p194 = por %p192, %p193
    %s195 = ssub.s32 %s14, %s21
    %p196 = scmp.eq.s32.totalorder %s195, 0
    %s198 = sadd.s32 %s197, 1
    %s199 = scalar_select %p196, %s197, %s198
    %p202 = pneg %p196
    %p203 = scmp.eq.s32.totalorder %s14, 1
    %p204 = por %p202, %p203
    %p205 = scmp.ne.s32.totalorder %s197, %s200
    %p206 = scmp.eq.s32.totalorder %s14, 0
    %p207 = por %p205, %p206
    %p208 = scmp.ne.s32.totalorder %s197, %s200
    %p209 = scmp.eq.s32.totalorder %s19, 1
    %p210 = por %p208, %p209
    %p211 = scmp.ne.s32.totalorder %s200, %s201
    %p212 = scmp.eq.s32.totalorder %s19, 0
    %p213 = por %p211, %p212
    %p214 = scmp.ne.s32.totalorder %s200, %s201
    %p215 = scmp.eq.s32.totalorder %s20, 1
    %p216 = por %p214, %p215
    %p218 = scmp.ne.s32.totalorder %s201, %s217
    %p219 = scmp.eq.s32.totalorder %s20, 0
    %p220 = por %p218, %p219
    %p221 = scmp.le.s32.totalorder 1, %s14
    %p222 = scmp.lt.s32.totalorder %s14, 3
    %p223 = pnand %p221, %p222
    %p224 = pneg %p223
    // Predicated region
    $region9: #{_lambda_.1} parent=5 // pred_check
      _
    $region10: #{_lambda_.1} parent=5 // pred_check_branch
      %226 = sbr.rel (%p223) target = $region12
    $region11: #{_lambda_.1} parent=5 // pred_region
      %s227 = ssub.s32 %s14, 1
      // Predicated region
      $region13: #{_lambda_.1} parent=11 // pred_check
        %p228 = pneg %p61
      $region14: #{_lambda_.1} parent=11 // pred_check_branch
        %230 = sbr.rel (%p228) target = $region16
      $region15: #{_lambda_.1} parent=11 // pred_region
        _
      $region16: #{_lambda_.1} parent=11 // pred_fallthru
        _
      // Predicated region
      $region17: #{_lambda_.1} parent=11 // pred_check
        %p231 = pneg %p82
      $region18: #{_lambda_.1} parent=11 // pred_check_branch
        %233 = sbr.rel (%p231) target = $region20
      $region19: #{_lambda_.1} parent=11 // pred_region
        _
      $region20: #{_lambda_.1} parent=11 // pred_fallthru
        _
      // Predicated region
      $region21: #{_lambda_.1} parent=11 // pred_check
        %p234 = pneg %p103
      $region22: #{_lambda_.1} parent=11 // pred_check_branch
        %236 = sbr.rel (%p234) target = $region24
      $region23: #{_lambda_.1} parent=11 // pred_region
        _
      $region24: #{_lambda_.1} parent=11 // pred_fallthru
        _
      // Predicated region
      $region25: #{_lambda_.1} parent=11 // pred_check
        %p237 = pneg %p124
      $region26: #{_lambda_.1} parent=11 // pred_check_branch
        %239 = sbr.rel (%p237) target = $region28
      $region27: #{_lambda_.1} parent=11 // pred_region
        _
      $region28: #{_lambda_.1} parent=11 // pred_fallthru
        _
      // Predicated region
      $region29: #{_lambda_.1} parent=11 // pred_check
        %p240 = pneg %p145
      $region30: #{_lambda_.1} parent=11 // pred_check_branch
        %242 = sbr.rel (%p240) target = $region32
      $region31: #{_lambda_.1} parent=11 // pred_region
        _
      $region32: #{_lambda_.1} parent=11 // pred_fallthru
        _
      // Predicated region
      $region33: #{_lambda_.1} parent=11 // pred_check
        %p243 = pneg %p166
      $region34: #{_lambda_.1} parent=11 // pred_check_branch
        %245 = sbr.rel (%p243) target = $region36
      $region35: #{_lambda_.1} parent=11 // pred_region
        _
      $region36: #{_lambda_.1} parent=11 // pred_fallthru
        _
      // Predicated region
      $region37: #{_lambda_.1} parent=11 // pred_check
        %p246 = pneg %p187
      $region38: #{_lambda_.1} parent=11 // pred_check_branch
        %248 = sbr.rel (%p246) target = $region40
      $region39: #{_lambda_.1} parent=11 // pred_region
        _
      $region40: #{_lambda_.1} parent=11 // pred_fallthru
        _
    $region12: #{_lambda_.1} parent=5 // pred_fallthru
      _
    %p249 = scmp.lt.s32.totalorder %s14, 2
    // Predicated region
    $region41: #{_lambda_.1} parent=5 // pred_check
      %p250 = pneg %p249
    $region42: #{_lambda_.1} parent=5 // pred_check_branch
      %252 = sbr.rel (%p250) target = $region44
    $region43: #{_lambda_.1} parent=5 // pred_region
      // Predicated region
      $region45: #{_lambda_.1} parent=43 // pred_check
        %p253 = pneg %p34
      $region46: #{_lambda_.1} parent=43 // pred_check_branch
        %255 = sbr.rel (%p253) target = $region48
      $region47: #{_lambda_.1} parent=43 // pred_region
        %p256 = scmp.lt.s32.totalorder %s14, 1
        %s257 = scalar_select %p256, %s14, 1
        %s258 = smul.addr %s257, 3
        %s259 = smul.addr %s258, 8
        %s260 = scalar_lea.vmem %s0, %s259
      $region48: #{_lambda_.1} parent=43 // pred_fallthru
        _
    $region44: #{_lambda_.1} parent=5 // pred_fallthru
      _
    %p261 = scmp.le.s32.totalorder 1, %s14
    %p262 = scmp.lt.s32.totalorder %s14, 3
    %p263 = pnand %p261, %p262
    %p264 = pneg %p263
    // Predicated region
    $region49: #{_lambda_.1} parent=5 // pred_check
      _
    $region50: #{_lambda_.1} parent=5 // pred_check_branch
      %266 = sbr.rel (%p263) target = $region52
    $region51: #{_lambda_.1} parent=5 // pred_region
      %s267 = ssub.s32 %s14, 1
      %p268 = scmp.lt.s32.totalorder %s19, 1
      %s269 = scalar_select %p268, %s19, 1
      %s270 = smul.addr %s269, 3
      %s271 = smul.addr %s270, 8
      %s272 = scalar_lea.vmem %s0, %s271
      %p273 = pneg %p40
      %p274 = pneg %p37
      %p275 = pneg %p61
      %p276 = pneg %p58
      %p277 = pneg %p82
      %p278 = pneg %p79
      %p279 = pneg %p103
      %p280 = pneg %p100
      %p281 = pneg %p124
      %p282 = pneg %p121
      %p283 = pneg %p145
      %p284 = pneg %p142
      %p285 = pneg %p166
      %p286 = pneg %p163
      %p287 = pneg %p187
      %p288 = pneg %p184
      %p289 = pneg %p213
      %p290 = pneg %p210
      %p291 = scmp.lt.s32.totalorder %s19, 1
      %s292 = scalar_select %p291, %s19, 1
      %s293 = smul.addr %s292, 8
      %s294 = scalar_lea.vmem %s8, %s293
      %p295 = scmp.lt.s32.totalorder %s19, 1
      %s296 = scalar_select %p295, %s19, 1
      %s297 = smul.addr %s296, 3
      %s298 = smul.addr %s297, 8
      %s299 = scalar_lea.vmem %s0, %s298
      %p300 = scmp.lt.s32.totalorder %s19, 1
      %s301 = scalar_select %p300, %s19, 1
      %s302 = smul.addr %s301, 8
      %s303 = scalar_lea.vmem %s8, %s302
      %v304 = vld [vmem:[%s299] sm:$0xff]
      %v305 = vld [vmem:[%s299 + $0x8] sm:$0xff]
      %v306 = vld [vmem:[%s299 + $0x10] sm:$0x3]
      %v307 = vld [vmem:[%s1] sm:$0xff]
      %v308 = vld [vmem:[%s1 + $0x8] sm:$0xff]
      %v309 = vld [vmem:[%s1 + $0x10] sm:$0x3]
      %v310 = vld [vmem:[%s2] sm:$0x7]
      %v311 = vld [vmem:[%s5] sm:$0xff]
      %v312 = vmax.f32 %v304, 0.0
      %v313 = vmax.f32 %v305, 0.0
      %v314 = vmax.f32 %v306, 0.0
      %v315 = vlaneseq
      %v316 = vshrl.u32 %v315, 7
      %v317 = vsub.s32 0, %v316
      %v318 = vrot.slane %v307, %v317
      %v319 = vmul.f32 %v312, %v318
      %v320 = vmul.f32 %v313, %v318
      %v321 = vlaneseq
      %v322 = vshrl.u32 %v321, 7
      %v323 = vsub.s32 1, %v322
      %v324 = vrot.slane %v307, %v323
      %326 = vrot.lane.b32.xlu0 %v324, 4
      %v327 = vpop.permute.xlu0 %326
      %v329 = vmul.f32 %v312, %v327
      %v330 = vmul.f32 %v313, %v327
      %333 = vrot.lane.b32.xlu0 %v329, 124
      %v334 = vpop.permute.xlu0 %333
      %335 = vrot.lane.b32.xlu0 %v330, 124
      %v336 = vpop.permute.xlu0 %335
      %v339 = vadd.f32 %v319, %v334
      %v340 = vadd.f32 %v320, %v336
      %v341 = vlaneseq
      %v342 = vshrl.u32 %v341, 7
      %v343 = vsub.s32 2, %v342
      %v344 = vrot.slane %v307, %v343
      %346 = vrot.lane.b32.xlu0 %v344, 8
      %v347 = vpop.permute.xlu0 %346
      %v349 = vmul.f32 %v312, %v347
      %v350 = vmul.f32 %v313, %v347
      %353 = vrot.lane.b32.xlu0 %v349, 120
      %v354 = vpop.permute.xlu0 %353
      %355 = vrot.lane.b32.xlu0 %v350, 120
      %v356 = vpop.permute.xlu0 %355
      %v359 = vadd.f32 %v339, %v354
      %v360 = vadd.f32 %v340, %v356
      %v361 = vlaneseq
      %v362 = vshrl.u32 %v361, 7
      %v363 = vsub.s32 3, %v362
      %v364 = vrot.slane %v307, %v363
      %v365 = vmul.f32 %v312, %v364
      %v366 = vmul.f32 %v313, %v364
      %v367 = vmul.f32 %v314, %v364
      %vm371 = vcmask 1046528
      %v372 = vrot.slane %v365, 1
      %v373 = vrot.slane %v366, 1
      %v374 = vsel %vm371, %v372, %v373
      %v375 = vrot.slane %v367, 1
      %v376 = vsel %vm371, %v373, %v375
      %v379 = vadd.f32 %v359, %v374
      %v380 = vadd.f32 %v360, %v376
      %v381 = vlaneseq
      %v382 = vshrl.u32 %v381, 7
      %v383 = vsub.s32 4, %v382
      %v384 = vrot.slane %v307, %v383
      %386 = vrot.lane.b32.xlu0 %v384, 4
      %v387 = vpop.permute.xlu0 %386
      %v389 = vmul.f32 %v312, %v387
      %v390 = vmul.f32 %v313, %v387
      %v391 = vmul.f32 %v314, %v387
      %v395 = vrot.slane %v389, 1
      %v396 = vrot.slane %v390, 1
      %v397 = vsel %vm371, %v395, %v396
      %v398 = vrot.slane %v391, 1
      %v399 = vsel %vm371, %v396, %v398
      %400 = vrot.lane.b32.xlu0 %v397, 124
      %v401 = vpop.permute.xlu0 %400
      %402 = vrot.lane.b32.xlu0 %v399, 124
      %v403 = vpop.permute.xlu0 %402
      %v406 = vadd.f32 %v379, %v401
      %v407 = vadd.f32 %v380, %v403
      %v408 = vlaneseq
      %v409 = vshrl.u32 %v408, 7
      %v410 = vsub.s32 5, %v409
      %v411 = vrot.slane %v307, %v410
      %413 = vrot.lane.b32.xlu0 %v411, 8
      %v414 = vpop.permute.xlu0 %413
      %v416 = vmul.f32 %v312, %v414
      %v417 = vmul.f32 %v313, %v414
      %v418 = vmul.f32 %v314, %v414
      %v422 = vrot.slane %v416, 1
      %v423 = vrot.slane %v417, 1
      %v424 = vsel %vm371, %v422, %v423
      %v425 = vrot.slane %v418, 1
      %v426 = vsel %vm371, %v423, %v425
      %427 = vrot.lane.b32.xlu0 %v424, 120
      %v428 = vpop.permute.xlu0 %427
      %429 = vrot.lane.b32.xlu0 %v426, 120
      %v430 = vpop.permute.xlu0 %429
      %v433 = vadd.f32 %v406, %v428
      %v434 = vadd.f32 %v407, %v430
      %v435 = vlaneseq
      %v436 = vshrl.u32 %v435, 7
      %v437 = vsub.s32 6, %v436
      %v438 = vrot.slane %v307, %v437
      %v439 = vmul.f32 %v312, %v438
      %v440 = vmul.f32 %v313, %v438
      %v441 = vmul.f32 %v314, %v438
      %vm445 = vcmask 1045504
      %v446 = vrot.slane %v439, 2
      %v447 = vrot.slane %v440, 2
      %v448 = vsel %vm445, %v446, %v447
      %v449 = vrot.slane %v441, 2
      %v450 = vsel %vm445, %v447, %v449
      %v453 = vadd.f32 %v433, %v448
      %v454 = vadd.f32 %v434, %v450
      %v455 = vlaneseq
      %v456 = vshrl.u32 %v455, 7
      %v457 = vsub.s32 7, %v456
      %v458 = vrot.slane %v307, %v457
      %460 = vrot.lane.b32.xlu0 %v458, 4
      %v461 = vpop.permute.xlu0 %460
      %v463 = vmul.f32 %v312, %v461
      %v464 = vmul.f32 %v313, %v461
      %v465 = vmul.f32 %v314, %v461
      %v469 = vrot.slane %v463, 2
      %v470 = vrot.slane %v464, 2
      %v471 = vsel %vm445, %v469, %v470
      %v472 = vrot.slane %v465, 2
      %v473 = vsel %vm445, %v470, %v472
      %474 = vrot.lane.b32.xlu0 %v471, 124
      %v475 = vpop.permute.xlu0 %474
      %476 = vrot.lane.b32.xlu0 %v473, 124
      %v477 = vpop.permute.xlu0 %476
      %v480 = vadd.f32 %v453, %v475
      %v481 = vadd.f32 %v454, %v477
      %v482 = vlaneseq
      %v483 = vshrl.u32 %v482, 7
      %v484 = vsub.s32 0, %v483
      %v485 = vrot.slane %v308, %v484
      %487 = vrot.lane.b32.xlu0 %v485, 8
      %v488 = vpop.permute.xlu0 %487
      %v490 = vmul.f32 %v312, %v488
      %v491 = vmul.f32 %v313, %v488
      %v492 = vmul.f32 %v314, %v488
      %v496 = vrot.slane %v490, 2
      %v497 = vrot.slane %v491, 2
      %v498 = vsel %vm445, %v496, %v497
      %v499 = vrot.slane %v492, 2
      %v500 = vsel %vm445, %v497, %v499
      %501 = vrot.lane.b32.xlu0 %v498, 120
      %v502 = vpop.permute.xlu0 %501
      %503 = vrot.lane.b32.xlu0 %v500, 120
      %v504 = vpop.permute.xlu0 %503
      %v507 = vadd.f32 %v480, %v502
      %v508 = vadd.f32 %v481, %v504
      %v509 = vld [vmem:[%s3] sm:$0xff]
      %v510 = vld [vmem:[%s3 + $0x8] sm:$0xff]
      %v511 = vld [vmem:[%s3 + $0x10] sm:$0xff]
      %v512 = vld [vmem:[%s3 + $0x18] sm:$0xff]
      %v513 = vld [vmem:[%s3 + $0x20] sm:$0xff]
      %v514 = vld [vmem:[%s3 + $0x28] sm:$0xff]
      %v515 = vld [vmem:[%s3 + $0x30] sm:$0xff]
      %v516 = vld [vmem:[%s3 + $0x38] sm:$0xff]
      %v517 = vlaneseq
      %v518 = vshrl.u32 %v517, 7
      %v519 = vsub.s32 0, %v518
      %v520 = vrot.slane %v310, %v519
      %vm521 = vcmask 523264
      %v523 = vsel %vm521, %v507, 0
      %v526 = vsel %vm521, %v508, 0
      %528 = vmatprep.subr.mxu0 0.0
      %v529 = vand.u32 %v509, 4294901760
      %530 = vmatpush1.msra.mxu0 %v529
      %531 = vmatprep.subr.mxu0 0.0
      %v532 = vand.u32 %v510, 4294901760
      %533 = vmatpush1.msra.mxu0 %v532
      %534 = vmatprep.subr.mxu0 0.0
      %v535 = vand.u32 %v511, 4294901760
      %536 = vmatpush1.msra.mxu0 %v535
      %537 = vmatprep.subr.mxu0 0.0
      %v538 = vand.u32 %v512, 4294901760
      %539 = vmatpush1.msra.mxu0 %v538
      %540 = vmatprep.subr.mxu0 0.0
      %v541 = vand.u32 %v513, 4294901760
      %542 = vmatpush1.msra.mxu0 %v541
      %543 = vmatprep.subr.mxu0 0.0
      %v544 = vand.u32 %v514, 4294901760
      %545 = vmatpush1.msra.mxu0 %v544
      %546 = vmatprep.subr.mxu0 0.0
      %v547 = vand.u32 %v515, 4294901760
      %548 = vmatpush1.msra.mxu0 %v547
      %549 = vmatprep.subr.mxu0 0.0
      %v550 = vand.u32 %v516, 4294901760
      %551 = vmatpush1.msra.mxu0 %v550
      %552 = vmatprep.subr.mxu0 0.0
      %553 = vmatpush1.msra.mxu0 0.0
      %554 = vmatprep.subr.mxu0 0.0
      %555 = vmatpush1.msra.mxu0 0.0
      %556 = vmatprep.subr.mxu0 0.0
      %557 = vmatpush1.msra.mxu0 0.0
      %558 = vmatprep.subr.mxu0 0.0
      %559 = vmatpush1.msra.mxu0 0.0
      %560 = vmatprep.subr.mxu0 0.0
      %561 = vmatpush1.msra.mxu0 0.0
      %562 = vmatprep.subr.mxu0 0.0
      %563 = vmatpush1.msra.mxu0 0.0
      %564 = vmatprep.subr.mxu0 0.0
      %565 = vmatpush1.msra.mxu0 0.0
      %566 = vmatprep.subr.mxu0 0.0
      %567 = vmatpush1.msra.mxu0 0.0
      %568 = vmatprep.subr.mxu0 0.0
      %569 = vmatpush1.msra.mxu0 0.0
      %570 = vmatprep.subr.mxu0 0.0
      %571 = vmatpush1.msra.mxu0 0.0
      %572 = vmatprep.subr.mxu0 0.0
      %573 = vmatpush1.msra.mxu0 0.0
      %574 = vmatprep.subr.mxu0 0.0
      %575 = vmatpush1.msra.mxu0 0.0
      %576 = vmatprep.subr.mxu0 0.0
      %577 = vmatpush1.msra.mxu0 0.0
      %578 = vmatprep.subr.mxu0 0.0
      %579 = vmatpush1.msra.mxu0 0.0
      %580 = vmatprep.subr.mxu0 0.0
      %581 = vmatpush1.msra.mxu0 0.0
      %582 = vmatprep.subr.mxu0 0.0
      %583 = vmatpush1.msra.mxu0 0.0
      %584 = vmatprep.subr.mxu0 0.0
      %585 = vmatpush1.msra.mxu0 0.0
      %586 = vmatprep.subr.mxu0 0.0
      %587 = vmatpush1.msra.mxu0 0.0
      %588 = vmatprep.subr.mxu0 0.0
      %589 = vmatpush1.msra.mxu0 0.0
      %590 = vmatprep.subr.mxu0 0.0
      %591 = vmatpush1.msra.mxu0 0.0
      %592 = vmatprep.subr.mxu0 0.0
      %593 = vmatpush1.msra.mxu0 0.0
      %594 = vmatprep.subr.mxu0 0.0
      %595 = vmatpush1.msra.mxu0 0.0
      %596 = vmatprep.subr.mxu0 0.0
      %597 = vmatpush1.msra.mxu0 0.0
      %598 = vmatprep.subr.mxu0 0.0
      %599 = vmatpush1.msra.mxu0 0.0
      %600 = vmatprep.mubr.f32.mxu0 0.0
      %v601 = vand.u32 %v523, 4294901760
      %v602 = vsub.f32 %v523, %v601
      %v603 = vand.u32 %v602, 4294901760
      %v604 = vsub.f32 %v602, %v603
      %v605 = vand.u32 %v604, 4294901760
      %606 = vmatmul.mubr.f32.gmra.mrb[0].mxu0 %v605
      %v607 = vpop.f32.mrb[0].mxu0
      %v608 = vadd.f32 %v520, %v607
      %v609 = vpop.f32.mrb[0].mxu0
      %610 = vmatprep.mubr.f32.mxu0 0.0
      %v611 = vand.u32 %v526, 4294901760
      %v612 = vsub.f32 %v526, %v611
      %v613 = vand.u32 %v612, 4294901760
      %v614 = vsub.f32 %v612, %v613
      %v615 = vand.u32 %v614, 4294901760
      %616 = vmatmul.mubr.f32.gmra.mrb[0].mxu0 %v615
      %v617 = vpop.f32.mrb[0].mxu0
      %v618 = vadd.f32 %v520, %v617
      %v619 = vpop.f32.mrb[0].mxu0
      %620 = vdwg.mxu0
      %621 = vmatprep.subr.mxu0 0.0
      %v622 = vand.u32 %v509, 4294901760
      %v623 = vsub.f32 %v509, %v622
      %v624 = vand.u32 %v623, 4294901760
      %v625 = vsub.f32 %v623, %v624
      %v626 = vand.u32 %v625, 4294901760
      %627 = vmatpush1.msra.mxu0 %v626
      %628 = vmatprep.subr.mxu0 0.0
      %v629 = vand.u32 %v510, 4294901760
      %v630 = vsub.f32 %v510, %v629
      %v631 = vand.u32 %v630, 4294901760
      %v632 = vsub.f32 %v630, %v631
      %v633 = vand.u32 %v632, 4294901760
      %634 = vmatpush1.msra.mxu0 %v633
      %635 = vmatprep.subr.mxu0 0.0
      %v636 = vand.u32 %v511, 4294901760
      %v637 = vsub.f32 %v511, %v636
      %v638 = vand.u32 %v637, 4294901760
      %v639 = vsub.f32 %v637, %v638
      %v640 = vand.u32 %v639, 4294901760
      %641 = vmatpush1.msra.mxu0 %v640
      %642 = vmatprep.subr.mxu0 0.0
      %v643 = vand.u32 %v512, 4294901760
      %v644 = vsub.f32 %v512, %v643
      %v645 = vand.u32 %v644, 4294901760
      %v646 = vsub.f32 %v644, %v645
      %v647 = vand.u32 %v646, 4294901760
      %648 = vmatpush1.msra.mxu0 %v647
      %649 = vmatprep.subr.mxu0 0.0
      %v650 = vand.u32 %v513, 4294901760
      %v651 = vsub.f32 %v513, %v650
      %v652 = vand.u32 %v651, 4294901760
      %v653 = vsub.f32 %v651, %v652
      %v654 = vand.u32 %v653, 4294901760
      %655 = vmatpush1.msra.mxu0 %v654
      %656 = vmatprep.subr.mxu0 0.0
      %v657 = vand.u32 %v514, 4294901760
      %v658 = vsub.f32 %v514, %v657
      %v659 = vand.u32 %v658, 4294901760
      %v660 = vsub.f32 %v658, %v659
      %v661 = vand.u32 %v660, 4294901760
      %662 = vmatpush1.msra.mxu0 %v661
      %663 = vmatprep.subr.mxu0 0.0
      %v664 = vand.u32 %v515, 4294901760
      %v665 = vsub.f32 %v515, %v664
      %v666 = vand.u32 %v665, 4294901760
      %v667 = vsub.f32 %v665, %v666
      %v668 = vand.u32 %v667, 4294901760
      %669 = vmatpush1.msra.mxu0 %v668
      %670 = vmatprep.subr.mxu0 0.0
      %v671 = vand.u32 %v516, 4294901760
      %v672 = vsub.f32 %v516, %v671
      %v673 = vand.u32 %v672, 4294901760
      %v674 = vsub.f32 %v672, %v673
      %v675 = vand.u32 %v674, 4294901760
      %676 = vmatpush1.msra.mxu0 %v675
      %677 = vmatprep.subr.mxu0 0.0
      %678 = vmatpush1.msra.mxu0 0.0
      %679 = vmatprep.subr.mxu0 0.0
      %680 = vmatpush1.msra.mxu0 0.0
      %681 = vmatprep.subr.mxu0 0.0
      %682 = vmatpush1.msra.mxu0 0.0
      %683 = vmatprep.subr.mxu0 0.0
      %684 = vmatpush1.msra.mxu0 0.0
      %685 = vmatprep.subr.mxu0 0.0
      %686 = vmatpush1.msra.mxu0 0.0
      %687 = vmatprep.subr.mxu0 0.0
      %688 = vmatpush1.msra.mxu0 0.0
      %689 = vmatprep.subr.mxu0 0.0
      %690 = vmatpush1.msra.mxu0 0.0
      %691 = vmatprep.subr.mxu0 0.0
      %692 = vmatpush1.msra.mxu0 0.0
      %693 = vmatprep.subr.mxu0 0.0
      %694 = vmatpush1.msra.mxu0 0.0
      %695 = vmatprep.subr.mxu0 0.0
      %696 = vmatpush1.msra.mxu0 0.0
      %697 = vmatprep.subr.mxu0 0.0
      %698 = vmatpush1.msra.mxu0 0.0
      %699 = vmatprep.subr.mxu0 0.0
      %700 = vmatpush1.msra.mxu0 0.0
      %701 = vmatprep.subr.mxu0 0.0
      %702 = vmatpush1.msra.mxu0 0.0
      %703 = vmatprep.subr.mxu0 0.0
      %704 = vmatpush1.msra.mxu0 0.0
      %705 = vmatprep.subr.mxu0 0.0
      %706 = vmatpush1.msra.mxu0 0.0
      %707 = vmatprep.subr.mxu0 0.0
      %708 = vmatpush1.msra.mxu0 0.0
      %709 = vmatprep.subr.mxu0 0.0
      %710 = vmatpush1.msra.mxu0 0.0
      %711 = vmatprep.subr.mxu0 0.0
      %712 = vmatpush1.msra.mxu0 0.0
      %713 = vmatprep.subr.mxu0 0.0
      %714 = vmatpush1.msra.mxu0 0.0
      %715 = vmatprep.subr.mxu0 0.0
      %716 = vmatpush1.msra.mxu0 0.0
      %717 = vmatprep.subr.mxu0 0.0
      %718 = vmatpush1.msra.mxu0 0.0
      %719 = vmatprep.subr.mxu0 0.0
      %720 = vmatpush1.msra.mxu0 0.0
      %721 = vmatprep.subr.mxu0 0.0
      %722 = vmatpush1.msra.mxu0 0.0
      %723 = vmatprep.subr.mxu0 0.0
      %724 = vmatpush1.msra.mxu0 0.0
      %725 = vmatprep.mubr.f32.mxu0 0.0
      %v726 = vand.u32 %v523, 4294901760
      %727 = vmatmul.mubr.f32.gmra.mrb[0].mxu0 %v726
      %v728 = vpop.f32.mrb[0].mxu0
      %v729 = vadd.f32 %v608, %v728
      %v730 = vpop.f32.mrb[0].mxu0
      %731 = vmatprep.mubr.f32.mxu0 0.0
      %v732 = vand.u32 %v526, 4294901760
      %733 = vmatmul.mubr.f32.gmra.mrb[0].mxu0 %v732
      %v734 = vpop.f32.mrb[0].mxu0
      %v735 = vadd.f32 %v618, %v734
      %v736 = vpop.f32.mrb[0].mxu0
      %737 = vdwg.mxu0
      %738 = vmatprep.subr.mxu0 0.0
      %v739 = vand.u32 %v509, 4294901760
      %v740 = vsub.f32 %v509, %v739
      %741 = vmatpush1.msra.mxu0 %v740
      %742 = vmatprep.subr.mxu0 0.0
      %v743 = vand.u32 %v510, 4294901760
      %v744 = vsub.f32 %v510, %v743
      %745 = vmatpush1.msra.mxu0 %v744
      %746 = vmatprep.subr.mxu0 0.0
      %v747 = vand.u32 %v511, 4294901760
      %v748 = vsub.f32 %v511, %v747
      %749 = vmatpush1.msra.mxu0 %v748
      %750 = vmatprep.subr.mxu0 0.0
      %v751 = vand.u32 %v512, 4294901760
      %v752 = vsub.f32 %v512, %v751
      %753 = vmatpush1.msra.mxu0 %v752
      %754 = vmatprep.subr.mxu0 0.0
      %v755 = vand.u32 %v513, 4294901760
      %v756 = vsub.f32 %v513, %v755
      %757 = vmatpush1.msra.mxu0 %v756
      %758 = vmatprep.subr.mxu0 0.0
      %v759 = vand.u32 %v514, 4294901760
      %v760 = vsub.f32 %v514, %v759
      %761 = vmatpush1.msra.mxu0 %v760
      %762 = vmatprep.subr.mxu0 0.0
      %v763 = vand.u32 %v515, 4294901760
      %v764 = vsub.f32 %v515, %v763
      %765 = vmatpush1.msra.mxu0 %v764
      %766 = vmatprep.subr.mxu0 0.0
      %v767 = vand.u32 %v516, 4294901760
      %v768 = vsub.f32 %v516, %v767
      %769 = vmatpush1.msra.mxu0 %v768
      %770 = vmatprep.subr.mxu0 0.0
      %771 = vmatpush1.msra.mxu0 0.0
      %772 = vmatprep.subr.mxu0 0.0
      %773 = vmatpush1.msra.mxu0 0.0
      %774 = vmatprep.subr.mxu0 0.0
      %775 = vmatpush1.msra.mxu0 0.0
      %776 = vmatprep.subr.mxu0 0.0
      %777 = vmatpush1.msra.mxu0 0.0
      %778 = vmatprep.subr.mxu0 0.0
      %779 = vmatpush1.msra.mxu0 0.0
      %780 = vmatprep.subr.mxu0 0.0
      %781 = vmatpush1.msra.mxu0 0.0
      %782 = vmatprep.subr.mxu0 0.0
      %783 = vmatpush1.msra.mxu0 0.0
      %784 = vmatprep.subr.mxu0 0.0
      %785 = vmatpush1.msra.mxu0 0.0
      %786 = vmatprep.subr.mxu0 0.0
      %787 = vmatpush1.msra.mxu0 0.0
      %788 = vmatprep.subr.mxu0 0.0
      %789 = vmatpush1.msra.mxu0 0.0
      %790 = vmatprep.subr.mxu0 0.0
      %791 = vmatpush1.msra.mxu0 0.0
      %792 = vmatprep.subr.mxu0 0.0
      %793 = vmatpush1.msra.mxu0 0.0
      %794 = vmatprep.subr.mxu0 0.0
      %795 = vmatpush1.msra.mxu0 0.0
      %796 = vmatprep.subr.mxu0 0.0
      %797 = vmatpush1.msra.mxu0 0.0
      %798 = vmatprep.subr.mxu0 0.0
      %799 = vmatpush1.msra.mxu0 0.0
      %800 = vmatprep.subr.mxu0 0.0
      %801 = vmatpush1.msra.mxu0 0.0
      %802 = vmatprep.subr.mxu0 0.0
      %803 = vmatpush1.msra.mxu0 0.0
      %804 = vmatprep.subr.mxu0 0.0
      %805 = vmatpush1.msra.mxu0 0.0
      %806 = vmatprep.subr.mxu0 0.0
      %807 = vmatpush1.msra.mxu0 0.0
      %808 = vmatprep.subr.mxu0 0.0
      %809 = vmatpush1.msra.mxu0 0.0
      %810 = vmatprep.subr.mxu0 0.0
      %811 = vmatpush1.msra.mxu0 0.0
      %812 = vmatprep.subr.mxu0 0.0
      %813 = vmatpush1.msra.mxu0 0.0
      %814 = vmatprep.subr.mxu0 0.0
      %815 = vmatpush1.msra.mxu0 0.0
      %816 = vmatprep.subr.mxu0 0.0
      %817 = vmatpush1.msra.mxu0 0.0
      %818 = vmatprep.mubr.f32.mxu0 0.0
      %v819 = vand.u32 %v523, 4294901760
      %v820 = vsub.f32 %v523, %v819
      %821 = vmatmul.mubr.f32.gmra.mrb[0].mxu0 %v820
      %v822 = vpop.f32.mrb[0].mxu0
      %v823 = vadd.f32 %v729, %v822
      %v824 = vpop.f32.mrb[0].mxu0
      %825 = vmatprep.mubr.f32.mxu0 0.0
      %v826 = vand.u32 %v526, 4294901760
      %v827 = vsub.f32 %v526, %v826
      %828 = vmatmul.mubr.f32.gmra.mrb[0].mxu0 %v827
      %v829 = vpop.f32.mrb[0].mxu0
      %v830 = vadd.f32 %v735, %v829
      %v831 = vpop.f32.mrb[0].mxu0
      %832 = vdwg.mxu0
      %833 = vmatprep.subr.mxu0 0.0
      %v834 = vand.u32 %v509, 4294901760
      %835 = vmatpush1.msra.mxu0 %v834
      %836 = vmatprep.subr.mxu0 0.0
      %v837 = vand.u32 %v510, 4294901760
      %838 = vmatpush1.msra.mxu0 %v837
      %839 = vmatprep.subr.mxu0 0.0
      %v840 = vand.u32 %v511, 4294901760
      %841 = vmatpush1.msra.mxu0 %v840
      %842 = vmatprep.subr.mxu0 0.0
      %v843 = vand.u32 %v512, 4294901760
      %844 = vmatpush1.msra.mxu0 %v843
      %845 = vmatprep.subr.mxu0 0.0
      %v846 = vand.u32 %v513, 4294901760
      %847 = vmatpush1.msra.mxu0 %v846
      %848 = vmatprep.subr.mxu0 0.0
      %v849 = vand.u32 %v514, 4294901760
      %850 = vmatpush1.msra.mxu0 %v849
      %851 = vmatprep.subr.mxu0 0.0
      %v852 = vand.u32 %v515, 4294901760
      %853 = vmatpush1.msra.mxu0 %v852
      %854 = vmatprep.subr.mxu0 0.0
      %v855 = vand.u32 %v516, 4294901760
      %856 = vmatpush1.msra.mxu0 %v855
      %857 = vmatprep.subr.mxu0 0.0
      %858 = vmatpush1.msra.mxu0 0.0
      %859 = vmatprep.subr.mxu0 0.0
      %860 = vmatpush1.msra.mxu0 0.0
      %861 = vmatprep.subr.mxu0 0.0
      %862 = vmatpush1.msra.mxu0 0.0
      %863 = vmatprep.subr.mxu0 0.0
      %864 = vmatpush1.msra.mxu0 0.0
      %865 = vmatprep.subr.mxu0 0.0
      %866 = vmatpush1.msra.mxu0 0.0
      %867 = vmatprep.subr.mxu0 0.0
      %868 = vmatpush1.msra.mxu0 0.0
      %869 = vmatprep.subr.mxu0 0.0
      %870 = vmatpush1.msra.mxu0 0.0
      %871 = vmatprep.subr.mxu0 0.0
      %872 = vmatpush1.msra.mxu0 0.0
      %873 = vmatprep.subr.mxu0 0.0
      %874 = vmatpush1.msra.mxu0 0.0
      %875 = vmatprep.subr.mxu0 0.0
      %876 = vmatpush1.msra.mxu0 0.0
      %877 = vmatprep.subr.mxu0 0.0
      %878 = vmatpush1.msra.mxu0 0.0
      %879 = vmatprep.subr.mxu0 0.0
      %880 = vmatpush1.msra.mxu0 0.0
      %881 = vmatprep.subr.mxu0 0.0
      %882 = vmatpush1.msra.mxu0 0.0
      %883 = vmatprep.subr.mxu0 0.0
      %884 = vmatpush1.msra.mxu0 0.0
      %885 = vmatprep.subr.mxu0 0.0
      %886 = vmatpush1.msra.mxu0 0.0
      %887 = vmatprep.subr.mxu0 0.0
      %888 = vmatpush1.msra.mxu0 0.0
      %889 = vmatprep.subr.mxu0 0.0
      %890 = vmatpush1.msra.mxu0 0.0
      %891 = vmatprep.subr.mxu0 0.0
      %892 = vmatpush1.msra.mxu0 0.0
      %893 = vmatprep.subr.mxu0 0.0
      %894 = vmatpush1.msra.mxu0 0.0
      %895 = vmatprep.subr.mxu0 0.0
      %896 = vmatpush1.msra.mxu0 0.0
      %897 = vmatprep.subr.mxu0 0.0
      %898 = vmatpush1.msra.mxu0 0.0
      %899 = vmatprep.subr.mxu0 0.0
      %900 = vmatpush1.msra.mxu0 0.0
      %901 = vmatprep.subr.mxu0 0.0
      %902 = vmatpush1.msra.mxu0 0.0
      %903 = vmatprep.subr.mxu0 0.0
      %904 = vmatpush1.msra.mxu0 0.0
      %905 = vmatprep.mubr.f32.mxu0 0.0
      %v906 = vand.u32 %v523, 4294901760
      %v907 = vsub.f32 %v523, %v906
      %v908 = vand.u32 %v907, 4294901760
      %909 = vmatmul.mubr.f32.gmra.mrb[0].mxu0 %v908
      %v910 = vpop.f32.mrb[0].mxu0
      %v911 = vadd.f32 %v823, %v910
      %v912 = vpop.f32.mrb[0].mxu0
      %913 = vmatprep.mubr.f32.mxu0 0.0
      %v914 = vand.u32 %v526, 4294901760
      %v915 = vsub.f32 %v526, %v914
      %v916 = vand.u32 %v915, 4294901760
      %917 = vmatmul.mubr.f32.gmra.mrb[0].mxu0 %v916
      %v918 = vpop.f32.mrb[0].mxu0
      %v919 = vadd.f32 %v830, %v918
      %v920 = vpop.f32.mrb[0].mxu0
      %921 = vdwg.mxu0
      %922 = vmatprep.subr.mxu0 0.0
      %v923 = vand.u32 %v509, 4294901760
      %v924 = vsub.f32 %v509, %v923
      %v925 = vand.u32 %v924, 4294901760
      %926 = vmatpush1.msra.mxu0 %v925
      %927 = vmatprep.subr.mxu0 0.0
      %v928 = vand.u32 %v510, 4294901760
      %v929 = vsub.f32 %v510, %v928
      %v930 = vand.u32 %v929, 4294901760
      %931 = vmatpush1.msra.mxu0 %v930
      %932 = vmatprep.subr.mxu0 0.0
      %v933 = vand.u32 %v511, 4294901760
      %v934 = vsub.f32 %v511, %v933
      %v935 = vand.u32 %v934, 4294901760
      %936 = vmatpush1.msra.mxu0 %v935
      %937 = vmatprep.subr.mxu0 0.0
      %v938 = vand.u32 %v512, 4294901760
      %v939 = vsub.f32 %v512, %v938
      %v940 = vand.u32 %v939, 4294901760
      %941 = vmatpush1.msra.mxu0 %v940
      %942 = vmatprep.subr.mxu0 0.0
      %v943 = vand.u32 %v513, 4294901760
      %v944 = vsub.f32 %v513, %v943
      %v945 = vand.u32 %v944, 4294901760
      %946 = vmatpush1.msra.mxu0 %v945
      %947 = vmatprep.subr.mxu0 0.0
      %v948 = vand.u32 %v514, 4294901760
      %v949 = vsub.f32 %v514, %v948
      %v950 = vand.u32 %v949, 4294901760
      %951 = vmatpush1.msra.mxu0 %v950
      %952 = vmatprep.subr.mxu0 0.0
      %v953 = vand.u32 %v515, 4294901760
      %v954 = vsub.f32 %v515, %v953
      %v955 = vand.u32 %v954, 4294901760
      %956 = vmatpush1.msra.mxu0 %v955
      %957 = vmatprep.subr.mxu0 0.0
      %v958 = vand.u32 %v516, 4294901760
      %v959 = vsub.f32 %v516, %v958
      %v960 = vand.u32 %v959, 4294901760
      %961 = vmatpush1.msra.mxu0 %v960
      %962 = vmatprep.subr.mxu0 0.0
      %963 = vmatpush1.msra.mxu0 0.0
      %964 = vmatprep.subr.mxu0 0.0
      %965 = vmatpush1.msra.mxu0 0.0
      %966 = vmatprep.subr.mxu0 0.0
      %967 = vmatpush1.msra.mxu0 0.0
      %968 = vmatprep.subr.mxu0 0.0
      %969 = vmatpush1.msra.mxu0 0.0
      %970 = vmatprep.subr.mxu0 0.0
      %971 = vmatpush1.msra.mxu0 0.0
      %972 = vmatprep.subr.mxu0 0.0
      %973 = vmatpush1.msra.mxu0 0.0
      %974 = vmatprep.subr.mxu0 0.0
      %975 = vmatpush1.msra.mxu0 0.0
      %976 = vmatprep.subr.mxu0 0.0
      %977 = vmatpush1.msra.mxu0 0.0
      %978 = vmatprep.subr.mxu0 0.0
      %979 = vmatpush1.msra.mxu0 0.0
      %980 = vmatprep.subr.mxu0 0.0
      %981 = vmatpush1.msra.mxu0 0.0
      %982 = vmatprep.subr.mxu0 0.0
      %983 = vmatpush1.msra.mxu0 0.0
      %984 = vmatprep.subr.mxu0 0.0
      %985 = vmatpush1.msra.mxu0 0.0
      %986 = vmatprep.subr.mxu0 0.0
      %987 = vmatpush1.msra.mxu0 0.0
      %988 = vmatprep.subr.mxu0 0.0
      %989 = vmatpush1.msra.mxu0 0.0
      %990 = vmatprep.subr.mxu0 0.0
      %991 = vmatpush1.msra.mxu0 0.0
      %992 = vmatprep.subr.mxu0 0.0
      %993 = vmatpush1.msra.mxu0 0.0
      %994 = vmatprep.subr.mxu0 0.0
      %995 = vmatpush1.msra.mxu0 0.0
      %996 = vmatprep.subr.mxu0 0.0
      %997 = vmatpush1.msra.mxu0 0.0
      %998 = vmatprep.subr.mxu0 0.0
      %999 = vmatpush1.msra.mxu0 0.0
      %1000 = vmatprep.subr.mxu0 0.0
      %1001 = vmatpush1.msra.mxu0 0.0
      %1002 = vmatprep.subr.mxu0 0.0
      %1003 = vmatpush1.msra.mxu0 0.0
      %1004 = vmatprep.subr.mxu0 0.0
      %1005 = vmatpush1.msra.mxu0 0.0
      %1006 = vmatprep.subr.mxu0 0.0
      %1007 = vmatpush1.msra.mxu0 0.0
      %1008 = vmatprep.subr.mxu0 0.0
      %1009 = vmatpush1.msra.mxu0 0.0
      %1010 = vmatprep.mubr.f32.mxu0 0.0
      %v1011 = vand.u32 %v523, 4294901760
      %1012 = vmatmul.mubr.f32.gmra.mrb[0].mxu0 %v1011
      %v1013 = vpop.f32.mrb[0].mxu0
      %v1014 = vadd.f32 %v911, %v1013
      %v1015 = vpop.f32.mrb[0].mxu0
      %1016 = vmatprep.mubr.f32.mxu0 0.0
      %v1017 = vand.u32 %v526, 4294901760
      %1018 = vmatmul.mubr.f32.gmra.mrb[0].mxu0 %v1017
      %v1019 = vpop.f32.mrb[0].mxu0
      %v1020 = vadd.f32 %v919, %v1019
      %v1021 = vpop.f32.mrb[0].mxu0
      %1022 = vdwg.mxu0
      %1023 = vmatprep.subr.mxu0 0.0
      %v1024 = vand.u32 %v509, 4294901760
      %1025 = vmatpush1.msra.mxu0 %v1024
      %1026 = vmatprep.subr.mxu0 0.0
      %v1027 = vand.u32 %v510, 4294901760
      %1028 = vmatpush1.msra.mxu0 %v1027
      %1029 = vmatprep.subr.mxu0 0.0
      %v1030 = vand.u32 %v511, 4294901760
      %1031 = vmatpush1.msra.mxu0 %v1030
      %1032 = vmatprep.subr.mxu0 0.0
      %v1033 = vand.u32 %v512, 4294901760
      %1034 = vmatpush1.msra.mxu0 %v1033
      %1035 = vmatprep.subr.mxu0 0.0
      %v1036 = vand.u32 %v513, 4294901760
      %1037 = vmatpush1.msra.mxu0 %v1036
      %1038 = vmatprep.subr.mxu0 0.0
      %v1039 = vand.u32 %v514, 4294901760
      %1040 = vmatpush1.msra.mxu0 %v1039
      %1041 = vmatprep.subr.mxu0 0.0
      %v1042 = vand.u32 %v515, 4294901760
      %1043 = vmatpush1.msra.mxu0 %v1042
      %1044 = vmatprep.subr.mxu0 0.0
      %v1045 = vand.u32 %v516, 4294901760
      %1046 = vmatpush1.msra.mxu0 %v1045
      %1047 = vmatprep.subr.mxu0 0.0
      %1048 = vmatpush1.msra.mxu0 0.0
      %1049 = vmatprep.subr.mxu0 0.0
      %1050 = vmatpush1.msra.mxu0 0.0
      %1051 = vmatprep.subr.mxu0 0.0
      %1052 = vmatpush1.msra.mxu0 0.0
      %1053 = vmatprep.subr.mxu0 0.0
      %1054 = vmatpush1.msra.mxu0 0.0
      %1055 = vmatprep.subr.mxu0 0.0
      %1056 = vmatpush1.msra.mxu0 0.0
      %1057 = vmatprep.subr.mxu0 0.0
      %1058 = vmatpush1.msra.mxu0 0.0
      %1059 = vmatprep.subr.mxu0 0.0
      %1060 = vmatpush1.msra.mxu0 0.0
      %1061 = vmatprep.subr.mxu0 0.0
      %1062 = vmatpush1.msra.mxu0 0.0
      %1063 = vmatprep.subr.mxu0 0.0
      %1064 = vmatpush1.msra.mxu0 0.0
      %1065 = vmatprep.subr.mxu0 0.0
      %1066 = vmatpush1.msra.mxu0 0.0
      %1067 = vmatprep.subr.mxu0 0.0
      %1068 = vmatpush1.msra.mxu0 0.0
      %1069 = vmatprep.subr.mxu0 0.0
      %1070 = vmatpush1.msra.mxu0 0.0
      %1071 = vmatprep.subr.mxu0 0.0
      %1072 = vmatpush1.msra.mxu0 0.0
      %1073 = vmatprep.subr.mxu0 0.0
      %1074 = vmatpush1.msra.mxu0 0.0
      %1075 = vmatprep.subr.mxu0 0.0
      %1076 = vmatpush1.msra.mxu0 0.0
      %1077 = vmatprep.subr.mxu0 0.0
      %1078 = vmatpush1.msra.mxu0 0.0
      %1079 = vmatprep.subr.mxu0 0.0
      %1080 = vmatpush1.msra.mxu0 0.0
      %1081 = vmatprep.subr.mxu0 0.0
      %1082 = vmatpush1.msra.mxu0 0.0
      %1083 = vmatprep.subr.mxu0 0.0
      %1084 = vmatpush1.msra.mxu0 0.0
      %1085 = vmatprep.subr.mxu0 0.0
      %1086 = vmatpush1.msra.mxu0 0.0
      %1087 = vmatprep.subr.mxu0 0.0
      %1088 = vmatpush1.msra.mxu0 0.0
      %1089 = vmatprep.subr.mxu0 0.0
      %1090 = vmatpush1.msra.mxu0 0.0
      %1091 = vmatprep.subr.mxu0 0.0
      %1092 = vmatpush1.msra.mxu0 0.0
      %1093 = vmatprep.subr.mxu0 0.0
      %1094 = vmatpush1.msra.mxu0 0.0
      %1095 = vmatprep.mubr.f32.mxu0 0.0
      %v1096 = vand.u32 %v523, 4294901760
      %1097 = vmatmul.mubr.f32.gmra.mrb[0].mxu0 %v1096
      %v1098 = vpop.f32.mrb[0].mxu0
      %v1099 = vadd.f32 %v1014, %v1098
      %v1100 = vpop.f32.mrb[0].mxu0
      %1101 = vmatprep.mubr.f32.mxu0 0.0
      %v1102 = vand.u32 %v526, 4294901760
      %1103 = vmatmul.mubr.f32.gmra.mrb[0].mxu0 %v1102
      %v1104 = vpop.f32.mrb[0].mxu0
      %v1105 = vadd.f32 %v1020, %v1104
      %v1106 = vpop.f32.mrb[0].mxu0
      %1107 = vdwg.mxu0
      %v1108 = vmax.f32 %v1099, 0.0
      %v1109 = vmax.f32 %v1105, 0.0
      %v1110 = vlaneseq
      %vm1111 = vcmp.ge.s32.totalorder %v1110, 0
      %vm1112 = vcmp.lt.s32.totalorder %v1110, 144
      %vm1113 = vmand %vm1111, %vm1112
      %1114 = vst.msk [vmem:[#allocation2] ss:$8 sm:$0x3] %vm1113, 0.0
      %1115 = vst.msk [vmem:[#allocation2] ss:$8 sm:$0x0] %vm1113, 0.0
      %s1116 = scalar_lea.vmem [#allocation2], 33
      %1117 = vst.msk [vmem:[%s1116] ss:$8 sm:$0x3] %vm1113, 0.0
      %1118 = vst.msk [vmem:[%s1116] ss:$8 sm:$0x0] %vm1113, 0.0
      %vm1119 = vcmask 64512
      %1120 = vst.msk [vmem:[#allocation2] sm:$0xff] %vm1119, 0.0
      %1121 = vst.msk [vmem:[#allocation2 + $0x10] sm:$0xff] %vm1119, 0.0
      %vm1122 = vcmask 58368
      %1123 = vst.msk [vmem:[#allocation2 + $0x20] sm:$0x3] %vm1122, 0.0
      %vm1124 = vcmask 130112
      %1125 = vst.msk [vmem:[#allocation2 + $0x8] sm:$0xff] %vm1124, 0.0
      %1126 = vst.msk [vmem:[#allocation2 + $0x18] sm:$0xff] %vm1124, 0.0
      %vm1127 = vcmask 123968
      %1128 = vst.msk [vmem:[#allocation2 + $0x28] sm:$0x3] %vm1127, 0.0
      %vm1131 = vcmask 1040384
      %v1132 = vrot.slane %v1108, 7
      %v1133 = vrot.slane %v1109, 7
      %v1134 = vsel %vm1131, %v1132, %v1133
      %1135 = vrot.lane.b32.xlu0 %v1132, 8
      %v1136 = vpop.permute.xlu0 %1135
      %1137 = vrot.lane.b32.xlu0 %v1134, 8
      %v1138 = vpop.permute.xlu0 %1137
      %1139 = vrot.lane.b32.xlu0 %v1133, 8
      %v1140 = vpop.permute.xlu0 %1139
      %vm1144 = vcmask 1047617
      %1145 = vst.msk [vmem:[#allocation2] sm:$0xfe] %vm1144, %v1136
      %vm1146 = vcmask 64513
      %1147 = vst.msk [vmem:[#allocation2 + $0x8] sm:$0xfe] %vm1146, %v1136
      %vm1148 = vcmask 1047616
      %1149 = vst.msk [vmem:[#allocation2 + $0x10] sm:$0xff] %vm1148, %v1138
      %1150 = vst.msk [vmem:[#allocation2 + $0x18] sm:$0xff] %vm1119, %v1138
      %vm1151 = vcmask 1040448
      %1152 = vst.msk [vmem:[#allocation2 + $0x20] sm:$0x1] %vm1151, %v1140
      %vm1153 = vcmask 57344
      %1154 = vst.msk [vmem:[#allocation2 + $0x28] sm:$0x1] %vm1153, %v1140
      %v1155 = vld [vmem:[#allocation2] sm:$0xff]
      %v1156 = vld [vmem:[#allocation2 + $0x10] sm:$0xff]
      %v1157 = vlaneseq
      %v1158 = vshrl.u32 %v1157, 7
      %v1159 = vsub.s32 1, %v1158
      %v1160 = vrot.slane %v308, %v1159
      %v1161 = vmul.f32 %v1155, %v1160
      %v1162 = vmul.f32 %v1156, %v1160
      %v1163 = vld [vmem:[#allocation2 + $0x8] sm:$0xff]
      %v1164 = vld [vmem:[#allocation2 + $0x18] sm:$0xff]
      %v1165 = vlaneseq
      %v1166 = vshrl.u32 %v1165, 7
      %v1167 = vsub.s32 2, %v1166
      %v1168 = vrot.slane %v308, %v1167
      %1170 = vrot.lane.b32.xlu0 %v1168, 8
      %v1171 = vpop.permute.xlu0 %1170
      %v1173 = vmul.f32 %v1155, %v1171
      %v1174 = vmul.f32 %v1163, %v1171
      %v1175 = vmul.f32 %v1156, %v1171
      %v1176 = vmul.f32 %v1164, %v1171
      %1181 = vrot.lane.b32.xlu0 %v1173, 120
      %v1182 = vpop.permute.xlu0 %1181
      %1183 = vrot.lane.b32.xlu0 %v1174, 120
      %v1184 = vpop.permute.xlu0 %1183
      %1185 = vrot.lane.b32.xlu0 %v1175, 120
      %v1186 = vpop.permute.xlu0 %1185
      %1187 = vrot.lane.b32.xlu0 %v1176, 120
      %v1188 = vpop.permute.xlu0 %1187
      %vm1189 = vcmask 982016
      %v1190 = vsel %vm1189, %v1182, %v1184
      %v1191 = vsel %vm1189, %v1186, %v1188
      %v1194 = vadd.f32 %v1161, %v1190
      %v1195 = vadd.f32 %v1162, %v1191
      %v1196 = vlaneseq
      %v1197 = vshrl.u32 %v1196, 7
      %v1198 = vsub.s32 3, %v1197
      %v1199 = vrot.slane %v308, %v1198
      %1201 = vrot.lane.b32.xlu0 %v1199, 16
      %v1202 = vpop.permute.xlu0 %1201
      %v1204 = vmul.f32 %v1155, %v1202
      %v1205 = vmul.f32 %v1163, %v1202
      %v1206 = vmul.f32 %v1156, %v1202
      %v1207 = vmul.f32 %v1164, %v1202
      %1212 = vrot.lane.b32.xlu0 %v1204, 112
      %v1213 = vpop.permute.xlu0 %1212
      %1214 = vrot.lane.b32.xlu0 %v1205, 112
      %v1215 = vpop.permute.xlu0 %1214
      %1216 = vrot.lane.b32.xlu0 %v1206, 112
      %v1217 = vpop.permute.xlu0 %1216
      %1218 = vrot.lane.b32.xlu0 %v1207, 112
      %v1219 = vpop.permute.xlu0 %1218
      %vm1220 = vcmask 916480
      %v1221 = vsel %vm1220, %v1213, %v1215
      %v1222 = vsel %vm1220, %v1217, %v1219
      %v1225 = vadd.f32 %v1194, %v1221
      %v1226 = vadd.f32 %v1195, %v1222
      %v1227 = vld [vmem:[#allocation2] sm:$0xfe]
      %v1228 = vld [vmem:[#allocation2 + $0x20] sm:$0x1]
      %v1229 = vlaneseq
      %v1230 = vshrl.u32 %v1229, 7
      %v1231 = vsub.s32 4, %v1230
      %v1232 = vrot.slane %v308, %v1231
      %v1233 = vmul.f32 %v1227, %v1232
      %v1234 = vmul.f32 %v1156, %v1232
      %v1235 = vmul.f32 %v1228, %v1232
      %v1239 = vrot.slane %v1233, 1
      %v1240 = vrot.slane %v1234, 1
      %v1241 = vsel %vm371, %v1239, %v1240
      %v1242 = vrot.slane %v1235, 1
      %v1243 = vsel %vm371, %v1240, %v1242
      %v1246 = vadd.f32 %v1225, %v1241
      %v1247 = vadd.f32 %v1226, %v1243
      %v1248 = vld [vmem:[#allocation2 + $0x8] sm:$0xfe]
      %v1249 = vld [vmem:[#allocation2 + $0x28] sm:$0x1]
      %v1250 = vlaneseq
      %v1251 = vshrl.u32 %v1250, 7
      %v1252 = vsub.s32 5, %v1251
      %v1253 = vrot.slane %v308, %v1252
      %1255 = vrot.lane.b32.xlu0 %v1253, 8
      %v1256 = vpop.permute.xlu0 %1255
      %v1258 = vmul.f32 %v1227, %v1256
      %v1259 = vmul.f32 %v1248, %v1256
      %v1260 = vmul.f32 %v1156, %v1256
      %v1261 = vmul.f32 %v1164, %v1256
      %v1262 = vmul.f32 %v1228, %v1256
      %v1263 = vmul.f32 %v1249, %v1256
      %v1270 = vrot.slane %v1258, 1
      %v1271 = vrot.slane %v1260, 1
      %v1272 = vsel %vm371, %v1270, %v1271
      %v1273 = vrot.slane %v1259, 1
      %v1274 = vrot.slane %v1261, 1
      %v1275 = vsel %vm371, %v1273, %v1274
      %v1276 = vrot.slane %v1262, 1
      %v1277 = vsel %vm371, %v1271, %v1276
      %v1278 = vrot.slane %v1263, 1
      %v1279 = vsel %vm371, %v1274, %v1278
      %1280 = vrot.lane.b32.xlu0 %v1272, 120
      %v1281 = vpop.permute.xlu0 %1280
      %1282 = vrot.lane.b32.xlu0 %v1275, 120
      %v1283 = vpop.permute.xlu0 %1282
      %1284 = vrot.lane.b32.xlu0 %v1277, 120
      %v1285 = vpop.permute.xlu0 %1284
      %1286 = vrot.lane.b32.xlu0 %v1279, 120
      %v1287 = vpop.permute.xlu0 %1286
      %v1288 = vsel %vm1189, %v1281, %v1283
      %v1289 = vsel %vm1189, %v1285, %v1287
      %v1292 = vadd.f32 %v1246, %v1288
      %v1293 = vadd.f32 %v1247, %v1289
      %v1294 = vlaneseq
      %v1295 = vshrl.u32 %v1294, 7
      %v1296 = vsub.s32 6, %v1295
      %v1297 = vrot.slane %v308, %v1296
      %1299 = vrot.lane.b32.xlu0 %v1297, 16
      %v1300 = vpop.permute.xlu0 %1299
      %v1302 = vmul.f32 %v1227, %v1300
      %v1303 = vmul.f32 %v1248, %v1300
      %v1304 = vmul.f32 %v1156, %v1300
      %v1305 = vmul.f32 %v1164, %v1300
      %v1306 = vmul.f32 %v1228, %v1300
      %v1307 = vmul.f32 %v1249, %v1300
      %v1314 = vrot.slane %v1302, 1
      %v1315 = vrot.slane %v1304, 1
      %v1316 = vsel %vm371, %v1314, %v1315
      %v1317 = vrot.slane %v1303, 1
      %v1318 = vrot.slane %v1305, 1
      %v1319 = vsel %vm371, %v1317, %v1318
      %v1320 = vrot.slane %v1306, 1
      %v1321 = vsel %vm371, %v1315, %v1320
      %v1322 = vrot.slane %v1307, 1
      %v1323 = vsel %vm371, %v1318, %v1322
      %1324 = vrot.lane.b32.xlu0 %v1316, 112
      %v1325 = vpop.permute.xlu0 %1324
      %1326 = vrot.lane.b32.xlu0 %v1319, 112
      %v1327 = vpop.permute.xlu0 %1326
      %1328 = vrot.lane.b32.xlu0 %v1321, 112
      %v1329 = vpop.permute.xlu0 %1328
      %1330 = vrot.lane.b32.xlu0 %v1323, 112
      %v1331 = vpop.permute.xlu0 %1330
      %v1332 = vsel %vm1220, %v1325, %v1327
      %v1333 = vsel %vm1220, %v1329, %v1331
      %v1336 = vadd.f32 %v1292, %v1332
      %v1337 = vadd.f32 %v1293, %v1333
      %v1338 = vld [vmem:[#allocation2] sm:$0xfc]
      %v1339 = vld [vmem:[#allocation2 + $0x20] sm:$0x3]
      %v1340 = vlaneseq
      %v1341 = vshrl.u32 %v1340, 7
      %v1342 = vsub.s32 7, %v1341
      %v1343 = vrot.slane %v308, %v1342
      %v1344 = vmul.f32 %v1338, %v1343
      %v1345 = vmul.f32 %v1156, %v1343
      %v1346 = vmul.f32 %v1339, %v1343
      %v1350 = vrot.slane %v1344, 2
      %v1351 = vrot.slane %v1345, 2
      %v1352 = vsel %vm445, %v1350, %v1351
      %v1353 = vrot.slane %v1346, 2
      %v1354 = vsel %vm445, %v1351, %v1353
      %v1357 = vadd.f32 %v1336, %v1352
      %v1358 = vadd.f32 %v1337, %v1354
      %v1359 = vld [vmem:[#allocation2 + $0x8] sm:$0xfc]
      %v1360 = vld [vmem:[#allocation2 + $0x28] sm:$0x3]
      %v1361 = vlaneseq
      %v1362 = vshrl.u32 %v1361, 7
      %v1363 = vsub.s32 0, %v1362
      %v1364 = vrot.slane %v309, %v1363
      %1366 = vrot.lane.b32.xlu0 %v1364, 8
      %v1367 = vpop.permute.xlu0 %1366
      %v1369 = vmul.f32 %v1338, %v1367
      %v1370 = vmul.f32 %v1359, %v1367
      %v1371 = vmul.f32 %v1156, %v1367
      %v1372 = vmul.f32 %v1164, %v1367
      %v1373 = vmul.f32 %v1339, %v1367
      %v1374 = vmul.f32 %v1360, %v1367
      %v1381 = vrot.slane %v1369, 2
      %v1382 = vrot.slane %v1371, 2
      %v1383 = vsel %vm445, %v1381, %v1382
      %v1384 = vrot.slane %v1370, 2
      %v1385 = vrot.slane %v1372, 2
      %v1386 = vsel %vm445, %v1384, %v1385
      %v1387 = vrot.slane %v1373, 2
      %v1388 = vsel %vm445, %v1382, %v1387
      %v1389 = vrot.slane %v1374, 2
      %v1390 = vsel %vm445, %v1385, %v1389
      %1391 = vrot.lane.b32.xlu0 %v1383, 120
      %v1392 = vpop.permute.xlu0 %1391
      %1393 = vrot.lane.b32.xlu0 %v1386, 120
      %v1394 = vpop.permute.xlu0 %1393
      %1395 = vrot.lane.b32.xlu0 %v1388, 120
      %v1396 = vpop.permute.xlu0 %1395
      %1397 = vrot.lane.b32.xlu0 %v1390, 120
      %v1398 = vpop.permute.xlu0 %1397
      %v1399 = vsel %vm1189, %v1392, %v1394
      %v1400 = vsel %vm1189, %v1396, %v1398
      %v1403 = vadd.f32 %v1357, %v1399
      %v1404 = vadd.f32 %v1358, %v1400
      %v1405 = vlaneseq
      %v1406 = vshrl.u32 %v1405, 7
      %v1407 = vsub.s32 1, %v1406
      %v1408 = vrot.slane %v309, %v1407
      %1410 = vrot.lane.b32.xlu0 %v1408, 16
      %v1411 = vpop.permute.xlu0 %1410
      %v1413 = vmul.f32 %v1338, %v1411
      %v1414 = vmul.f32 %v1359, %v1411
      %v1415 = vmul.f32 %v1156, %v1411
      %v1416 = vmul.f32 %v1164, %v1411
      %v1417 = vmul.f32 %v1339, %v1411
      %v1418 = vmul.f32 %v1360, %v1411
      %v1425 = vrot.slane %v1413, 2
      %v1426 = vrot.slane %v1415, 2
      %v1427 = vsel %vm445, %v1425, %v1426
      %v1428 = vrot.slane %v1414, 2
      %v1429 = vrot.slane %v1416, 2
      %v1430 = vsel %vm445, %v1428, %v1429
      %v1431 = vrot.slane %v1417, 2
      %v1432 = vsel %vm445, %v1426, %v1431
      %v1433 = vrot.slane %v1418, 2
      %v1434 = vsel %vm445, %v1429, %v1433
      %1435 = vrot.lane.b32.xlu0 %v1427, 112
      %v1436 = vpop.permute.xlu0 %1435
      %1437 = vrot.lane.b32.xlu0 %v1430, 112
      %v1438 = vpop.permute.xlu0 %1437
      %1439 = vrot.lane.b32.xlu0 %v1432, 112
      %v1440 = vpop.permute.xlu0 %1439
      %1441 = vrot.lane.b32.xlu0 %v1434, 112
      %v1442 = vpop.permute.xlu0 %1441
      %v1443 = vsel %vm1220, %v1436, %v1438
      %v1444 = vsel %vm1220, %v1440, %v1442
      %v1447 = vadd.f32 %v1403, %v1443
      %v1448 = vadd.f32 %v1404, %v1444
      %v1449 = vld [vmem:[%s4] sm:$0xff]
      %v1450 = vld [vmem:[%s4 + $0x8] sm:$0xff]
      %v1451 = vld [vmem:[%s4 + $0x10] sm:$0xff]
      %v1452 = vld [vmem:[%s4 + $0x18] sm:$0xff]
      %v1453 = vld [vmem:[%s4 + $0x20] sm:$0xff]
      %v1454 = vld [vmem:[%s4 + $0x28] sm:$0xff]
      %v1455 = vld [vmem:[%s4 + $0x30] sm:$0xff]
      %v1456 = vld [vmem:[%s4 + $0x38] sm:$0xff]
      %v1457 = vld [vmem:[%s4 + $0x40] sm:$0xff]
      %v1458 = vld [vmem:[%s4 + $0x48] sm:$0xff]
      %v1459 = vld [vmem:[%s4 + $0x50] sm:$0xff]
      %v1460 = vld [vmem:[%s4 + $0x58] sm:$0xff]
      %v1461 = vld [vmem:[%s4 + $0x60] sm:$0xff]
      %v1462 = vld [vmem:[%s4 + $0x68] sm:$0xff]
      %v1463 = vld [vmem:[%s4 + $0x70] sm:$0xff]
      %v1464 = vld [vmem:[%s4 + $0x78] sm:$0xff]
      %v1465 = vlaneseq
      %v1466 = vshrl.u32 %v1465, 7
      %v1467 = vsub.s32 1, %v1466
      %v1468 = vrot.slane %v310, %v1467
      %1469 = vmatprep.subr.mxu0 0.0
      %v1470 = vand.u32 %v1449, 4294901760
      %1471 = vmatpush1.msra.mxu0 %v1470
      %1472 = vmatprep.subr.mxu0 0.0
      %v1473 = vand.u32 %v1450, 4294901760
      %1474 = vmatpush1.msra.mxu0 %v1473
      %1475 = vmatprep.subr.mxu0 0.0
      %v1476 = vand.u32 %v1451, 4294901760
      %1477 = vmatpush1.msra.mxu0 %v1476
      %1478 = vmatprep.subr.mxu0 0.0
      %v1479 = vand.u32 %v1452, 4294901760
      %1480 = vmatpush1.msra.mxu0 %v1479
      %1481 = vmatprep.subr.mxu0 0.0
      %v1482 = vand.u32 %v1453, 4294901760
      %1483 = vmatpush1.msra.mxu0 %v1482
      %1484 = vmatprep.subr.mxu0 0.0
      %v1485 = vand.u32 %v1454, 4294901760
      %1486 = vmatpush1.msra.mxu0 %v1485
      %1487 = vmatprep.subr.mxu0 0.0
      %v1488 = vand.u32 %v1455, 4294901760
      %1489 = vmatpush1.msra.mxu0 %v1488
      %1490 = vmatprep.subr.mxu0 0.0
      %v1491 = vand.u32 %v1456, 4294901760
      %1492 = vmatpush1.msra.mxu0 %v1491
      %1493 = vmatprep.subr.mxu0 0.0
      %v1494 = vand.u32 %v1457, 4294901760
      %1495 = vmatpush1.msra.mxu0 %v1494
      %1496 = vmatprep.subr.mxu0 0.0
      %v1497 = vand.u32 %v1458, 4294901760
      %1498 = vmatpush1.msra.mxu0 %v1497
      %1499 = vmatprep.subr.mxu0 0.0
      %v1500 = vand.u32 %v1459, 4294901760
      %1501 = vmatpush1.msra.mxu0 %v1500
      %1502 = vmatprep.subr.mxu0 0.0
      %v1503 = vand.u32 %v1460, 4294901760
      %1504 = vmatpush1.msra.mxu0 %v1503
      %1505 = vmatprep.subr.mxu0 0.0
      %v1506 = vand.u32 %v1461, 4294901760
      %1507 = vmatpush1.msra.mxu0 %v1506
      %1508 = vmatprep.subr.mxu0 0.0
      %v1509 = vand.u32 %v1462, 4294901760
      %1510 = vmatpush1.msra.mxu0 %v1509
      %1511 = vmatprep.subr.mxu0 0.0
      %v1512 = vand.u32 %v1463, 4294901760
      %1513 = vmatpush1.msra.mxu0 %v1512
      %1514 = vmatprep.subr.mxu0 0.0
      %v1515 = vand.u32 %v1464, 4294901760
      %1516 = vmatpush1.msra.mxu0 %v1515
      %1517 = vmatprep.subr.mxu0 0.0
      %1518 = vmatpush1.msra.mxu0 0.0
      %1519 = vmatprep.subr.mxu0 0.0
      %1520 = vmatpush1.msra.mxu0 0.0
      %1521 = vmatprep.subr.mxu0 0.0
      %1522 = vmatpush1.msra.mxu0 0.0
      %1523 = vmatprep.subr.mxu0 0.0
      %1524 = vmatpush1.msra.mxu0 0.0
      %1525 = vmatprep.subr.mxu0 0.0
      %1526 = vmatpush1.msra.mxu0 0.0
      %1527 = vmatprep.subr.mxu0 0.0
      %1528 = vmatpush1.msra.mxu0 0.0
      %1529 = vmatprep.subr.mxu0 0.0
      %1530 = vmatpush1.msra.mxu0 0.0
      %1531 = vmatprep.subr.mxu0 0.0
      %1532 = vmatpush1.msra.mxu0 0.0
      %1533 = vmatprep.subr.mxu0 0.0
      %1534 = vmatpush1.msra.mxu0 0.0
      %1535 = vmatprep.subr.mxu0 0.0
      %1536 = vmatpush1.msra.mxu0 0.0
      %1537 = vmatprep.subr.mxu0 0.0
      %1538 = vmatpush1.msra.mxu0 0.0
      %1539 = vmatprep.subr.mxu0 0.0
      %1540 = vmatpush1.msra.mxu0 0.0
      %1541 = vmatprep.subr.mxu0 0.0
      %1542 = vmatpush1.msra.mxu0 0.0
      %1543 = vmatprep.subr.mxu0 0.0
      %1544 = vmatpush1.msra.mxu0 0.0
      %1545 = vmatprep.subr.mxu0 0.0
      %1546 = vmatpush1.msra.mxu0 0.0
      %1547 = vmatprep.subr.mxu0 0.0
      %1548 = vmatpush1.msra.mxu0 0.0
      %1549 = vmatprep.mubr.f32.mxu0 0.0
      %v1550 = vand.u32 %v1447, 4294901760
      %v1551 = vsub.f32 %v1447, %v1550
      %v1552 = vand.u32 %v1551, 4294901760
      %v1553 = vsub.f32 %v1551, %v1552
      %v1554 = vand.u32 %v1553, 4294901760
      %1555 = vmatmul.mubr.f32.gmra.mrb[0].mxu0 %v1554
      %v1556 = vpop.f32.mrb[0].mxu0
      %v1557 = vadd.f32 %v1468, %v1556
      %v1558 = vpop.f32.mrb[0].mxu0
      %1559 = vmatprep.mubr.f32.mxu0 0.0
      %v1560 = vand.u32 %v1448, 4294901760
      %v1561 = vsub.f32 %v1448, %v1560
      %v1562 = vand.u32 %v1561, 4294901760
      %v1563 = vsub.f32 %v1561, %v1562
      %v1564 = vand.u32 %v1563, 4294901760
      %1565 = vmatmul.mubr.f32.gmra.mrb[0].mxu0 %v1564
      %v1566 = vpop.f32.mrb[0].mxu0
      %v1567 = vadd.f32 %v1468, %v1566
      %v1568 = vpop.f32.mrb[0].mxu0
      %1569 = vdwg.mxu0
      %1570 = vmatprep.subr.mxu0 0.0
      %v1571 = vand.u32 %v1449, 4294901760
      %v1572 = vsub.f32 %v1449, %v1571
      %v1573 = vand.u32 %v1572, 4294901760
      %v1574 = vsub.f32 %v1572, %v1573
      %v1575 = vand.u32 %v1574, 4294901760
      %1576 = vmatpush1.msra.mxu0 %v1575
      %1577 = vmatprep.subr.mxu0 0.0
      %v1578 = vand.u32 %v1450, 4294901760
      %v1579 = vsub.f32 %v1450, %v1578
      %v1580 = vand.u32 %v1579, 4294901760
      %v1581 = vsub.f32 %v1579, %v1580
      %v1582 = vand.u32 %v1581, 4294901760
      %1583 = vmatpush1.msra.mxu0 %v1582
      %1584 = vmatprep.subr.mxu0 0.0
      %v1585 = vand.u32 %v1451, 4294901760
      %v1586 = vsub.f32 %v1451, %v1585
      %v1587 = vand.u32 %v1586, 4294901760
      %v1588 = vsub.f32 %v1586, %v1587
      %v1589 = vand.u32 %v1588, 4294901760
      %1590 = vmatpush1.msra.mxu0 %v1589
      %1591 = vmatprep.subr.mxu0 0.0
      %v1592 = vand.u32 %v1452, 4294901760
      %v1593 = vsub.f32 %v1452, %v1592
      %v1594 = vand.u32 %v1593, 4294901760
      %v1595 = vsub.f32 %v1593, %v1594
      %v1596 = vand.u32 %v1595, 4294901760
      %1597 = vmatpush1.msra.mxu0 %v1596
      %1598 = vmatprep.subr.mxu0 0.0
      %v1599 = vand.u32 %v1453, 4294901760
      %v1600 = vsub.f32 %v1453, %v1599
      %v1601 = vand.u32 %v1600, 4294901760
      %v1602 = vsub.f32 %v1600, %v1601
      %v1603 = vand.u32 %v1602, 4294901760
      %1604 = vmatpush1.msra.mxu0 %v1603
      %1605 = vmatprep.subr.mxu0 0.0
      %v1606 = vand.u32 %v1454, 4294901760
      %v1607 = vsub.f32 %v1454, %v1606
      %v1608 = vand.u32 %v1607, 4294901760
      %v1609 = vsub.f32 %v1607, %v1608
      %v1610 = vand.u32 %v1609, 4294901760
      %1611 = vmatpush1.msra.mxu0 %v1610
      %1612 = vmatprep.subr.mxu0 0.0
      %v1613 = vand.u32 %v1455, 4294901760
      %v1614 = vsub.f32 %v1455, %v1613
      %v1615 = vand.u32 %v1614, 4294901760
      %v1616 = vsub.f32 %v1614, %v1615
      %v1617 = vand.u32 %v1616, 4294901760
      %1618 = vmatpush1.msra.mxu0 %v1617
      %1619 = vmatprep.subr.mxu0 0.0
      %v1620 = vand.u32 %v1456, 4294901760
      %v1621 = vsub.f32 %v1456, %v1620
      %v1622 = vand.u32 %v1621, 4294901760
      %v1623 = vsub.f32 %v1621, %v1622
      %v1624 = vand.u32 %v1623, 4294901760
      %1625 = vmatpush1.msra.mxu0 %v1624
      %1626 = vmatprep.subr.mxu0 0.0
      %v1627 = vand.u32 %v1457, 4294901760
      %v1628 = vsub.f32 %v1457, %v1627
      %v1629 = vand.u32 %v1628, 4294901760
      %v1630 = vsub.f32 %v1628, %v1629
      %v1631 = vand.u32 %v1630, 4294901760
      %1632 = vmatpush1.msra.mxu0 %v1631
      %1633 = vmatprep.subr.mxu0 0.0
      %v1634 = vand.u32 %v1458, 4294901760
      %v1635 = vsub.f32 %v1458, %v1634
      %v1636 = vand.u32 %v1635, 4294901760
      %v1637 = vsub.f32 %v1635, %v1636
      %v1638 = vand.u32 %v1637, 4294901760
      %1639 = vmatpush1.msra.mxu0 %v1638
      %1640 = vmatprep.subr.mxu0 0.0
      %v1641 = vand.u32 %v1459, 4294901760
      %v1642 = vsub.f32 %v1459, %v1641
      %v1643 = vand.u32 %v1642, 4294901760
      %v1644 = vsub.f32 %v1642, %v1643
      %v1645 = vand.u32 %v1644, 4294901760
      %1646 = vmatpush1.msra.mxu0 %v1645
      %1647 = vmatprep.subr.mxu0 0.0
      %v1648 = vand.u32 %v1460, 4294901760
      %v1649 = vsub.f32 %v1460, %v1648
      %v1650 = vand.u32 %v1649, 4294901760
      %v1651 = vsub.f32 %v1649, %v1650
      %v1652 = vand.u32 %v1651, 4294901760
      %1653 = vmatpush1.msra.mxu0 %v1652
      %1654 = vmatprep.subr.mxu0 0.0
      %v1655 = vand.u32 %v1461, 4294901760
      %v1656 = vsub.f32 %v1461, %v1655
      %v1657 = vand.u32 %v1656, 4294901760
      %v1658 = vsub.f32 %v1656, %v1657
      %v1659 = vand.u32 %v1658, 4294901760
      %1660 = vmatpush1.msra.mxu0 %v1659
      %1661 = vmatprep.subr.mxu0 0.0
      %v1662 = vand.u32 %v1462, 4294901760
      %v1663 = vsub.f32 %v1462, %v1662
      %v1664 = vand.u32 %v1663, 4294901760
      %v1665 = vsub.f32 %v1663, %v1664
      %v1666 = vand.u32 %v1665, 4294901760
      %1667 = vmatpush1.msra.mxu0 %v1666
      %1668 = vmatprep.subr.mxu0 0.0
      %v1669 = vand.u32 %v1463, 4294901760
      %v1670 = vsub.f32 %v1463, %v1669
      %v1671 = vand.u32 %v1670, 4294901760
      %v1672 = vsub.f32 %v1670, %v1671
      %v1673 = vand.u32 %v1672, 4294901760
      %1674 = vmatpush1.msra.mxu0 %v1673
      %1675 = vmatprep.subr.mxu0 0.0
      %v1676 = vand.u32 %v1464, 4294901760
      %v1677 = vsub.f32 %v1464, %v1676
      %v1678 = vand.u32 %v1677, 4294901760
      %v1679 = vsub.f32 %v1677, %v1678
      %v1680 = vand.u32 %v1679, 4294901760
      %1681 = vmatpush1.msra.mxu0 %v1680
      %1682 = vmatprep.subr.mxu0 0.0
      %1683 = vmatpush1.msra.mxu0 0.0
      %1684 = vmatprep.subr.mxu0 0.0
      %1685 = vmatpush1.msra.mxu0 0.0
      %1686 = vmatprep.subr.mxu0 0.0
      %1687 = vmatpush1.msra.mxu0 0.0
      %1688 = vmatprep.subr.mxu0 0.0
      %1689 = vmatpush1.msra.mxu0 0.0
      %1690 = vmatprep.subr.mxu0 0.0
      %1691 = vmatpush1.msra.mxu0 0.0
      %1692 = vmatprep.subr.mxu0 0.0
      %1693 = vmatpush1.msra.mxu0 0.0
      %1694 = vmatprep.subr.mxu0 0.0
      %1695 = vmatpush1.msra.mxu0 0.0
      %1696 = vmatprep.subr.mxu0 0.0
      %1697 = vmatpush1.msra.mxu0 0.0
      %1698 = vmatprep.subr.mxu0 0.0
      %1699 = vmatpush1.msra.mxu0 0.0
      %1700 = vmatprep.subr.mxu0 0.0
      %1701 = vmatpush1.msra.mxu0 0.0
      %1702 = vmatprep.subr.mxu0 0.0
      %1703 = vmatpush1.msra.mxu0 0.0
      %1704 = vmatprep.subr.mxu0 0.0
      %1705 = vmatpush1.msra.mxu0 0.0
      %1706 = vmatprep.subr.mxu0 0.0
      %1707 = vmatpush1.msra.mxu0 0.0
      %1708 = vmatprep.subr.mxu0 0.0
      %1709 = vmatpush1.msra.mxu0 0.0
      %1710 = vmatprep.subr.mxu0 0.0
      %1711 = vmatpush1.msra.mxu0 0.0
      %1712 = vmatprep.subr.mxu0 0.0
      %1713 = vmatpush1.msra.mxu0 0.0
      %1714 = vmatprep.mubr.f32.mxu0 0.0
      %v1715 = vand.u32 %v1447, 4294901760
      %1716 = vmatmul.mubr.f32.gmra.mrb[0].mxu0 %v1715
      %v1717 = vpop.f32.mrb[0].mxu0
      %v1718 = vadd.f32 %v1557, %v1717
      %v1719 = vpop.f32.mrb[0].mxu0
      %1720 = vmatprep.mubr.f32.mxu0 0.0
      %v1721 = vand.u32 %v1448, 4294901760
      %1722 = vmatmul.mubr.f32.gmra.mrb[0].mxu0 %v1721
      %v1723 = vpop.f32.mrb[0].mxu0
      %v1724 = vadd.f32 %v1567, %v1723
      %v1725 = vpop.f32.mrb[0].mxu0
      %1726 = vdwg.mxu0
      %1727 = vmatprep.subr.mxu0 0.0
      %v1728 = vand.u32 %v1449, 4294901760
      %v1729 = vsub.f32 %v1449, %v1728
      %1730 = vmatpush1.msra.mxu0 %v1729
      %1731 = vmatprep.subr.mxu0 0.0
      %v1732 = vand.u32 %v1450, 4294901760
      %v1733 = vsub.f32 %v1450, %v1732
      %1734 = vmatpush1.msra.mxu0 %v1733
      %1735 = vmatprep.subr.mxu0 0.0
      %v1736 = vand.u32 %v1451, 4294901760
      %v1737 = vsub.f32 %v1451, %v1736
      %1738 = vmatpush1.msra.mxu0 %v1737
      %1739 = vmatprep.subr.mxu0 0.0
      %v1740 = vand.u32 %v1452, 4294901760
      %v1741 = vsub.f32 %v1452, %v1740
      %1742 = vmatpush1.msra.mxu0 %v1741
      %1743 = vmatprep.subr.mxu0 0.0
      %v1744 = vand.u32 %v1453, 4294901760
      %v1745 = vsub.f32 %v1453, %v1744
      %1746 = vmatpush1.msra.mxu0 %v1745
      %1747 = vmatprep.subr.mxu0 0.0
      %v1748 = vand.u32 %v1454, 4294901760
      %v1749 = vsub.f32 %v1454, %v1748
      %1750 = vmatpush1.msra.mxu0 %v1749
      %1751 = vmatprep.subr.mxu0 0.0
      %v1752 = vand.u32 %v1455, 4294901760
      %v1753 = vsub.f32 %v1455, %v1752
      %1754 = vmatpush1.msra.mxu0 %v1753
      %1755 = vmatprep.subr.mxu0 0.0
      %v1756 = vand.u32 %v1456, 4294901760
      %v1757 = vsub.f32 %v1456, %v1756
      %1758 = vmatpush1.msra.mxu0 %v1757
      %1759 = vmatprep.subr.mxu0 0.0
      %v1760 = vand.u32 %v1457, 4294901760
      %v1761 = vsub.f32 %v1457, %v1760
      %1762 = vmatpush1.msra.mxu0 %v1761
      %1763 = vmatprep.subr.mxu0 0.0
      %v1764 = vand.u32 %v1458, 4294901760
      %v1765 = vsub.f32 %v1458, %v1764
      %1766 = vmatpush1.msra.mxu0 %v1765
      %1767 = vmatprep.subr.mxu0 0.0
      %v1768 = vand.u32 %v1459, 4294901760
      %v1769 = vsub.f32 %v1459, %v1768
      %1770 = vmatpush1.msra.mxu0 %v1769
      %1771 = vmatprep.subr.mxu0 0.0
      %v1772 = vand.u32 %v1460, 4294901760
      %v1773 = vsub.f32 %v1460, %v1772
      %1774 = vmatpush1.msra.mxu0 %v1773
      %1775 = vmatprep.subr.mxu0 0.0
      %v1776 = vand.u32 %v1461, 4294901760
      %v1777 = vsub.f32 %v1461, %v1776
      %1778 = vmatpush1.msra.mxu0 %v1777
      %1779 = vmatprep.subr.mxu0 0.0
      %v1780 = vand.u32 %v1462, 4294901760
      %v1781 = vsub.f32 %v1462, %v1780
      %1782 = vmatpush1.msra.mxu0 %v1781
      %1783 = vmatprep.subr.mxu0 0.0
      %v1784 = vand.u32 %v1463, 4294901760
      %v1785 = vsub.f32 %v1463, %v1784
      %1786 = vmatpush1.msra.mxu0 %v1785
      %1787 = vmatprep.subr.mxu0 0.0
      %v1788 = vand.u32 %v1464, 4294901760
      %v1789 = vsub.f32 %v1464, %v1788
      %1790 = vmatpush1.msra.mxu0 %v1789
      %1791 = vmatprep.subr.mxu0 0.0
      %1792 = vmatpush1.msra.mxu0 0.0
      %1793 = vmatprep.subr.mxu0 0.0
      %1794 = vmatpush1.msra.mxu0 0.0
      %1795 = vmatprep.subr.mxu0 0.0
      %1796 = vmatpush1.msra.mxu0 0.0
      %1797 = vmatprep.subr.mxu0 0.0
      %1798 = vmatpush1.msra.mxu0 0.0
      %1799 = vmatprep.subr.mxu0 0.0
      %1800 = vmatpush1.msra.mxu0 0.0
      %1801 = vmatprep.subr.mxu0 0.0
      %1802 = vmatpush1.msra.mxu0 0.0
      %1803 = vmatprep.subr.mxu0 0.0
      %1804 = vmatpush1.msra.mxu0 0.0
      %1805 = vmatprep.subr.mxu0 0.0
      %1806 = vmatpush1.msra.mxu0 0.0
      %1807 = vmatprep.subr.mxu0 0.0
      %1808 = vmatpush1.msra.mxu0 0.0
      %1809 = vmatprep.subr.mxu0 0.0
      %1810 = vmatpush1.msra.mxu0 0.0
      %1811 = vmatprep.subr.mxu0 0.0
      %1812 = vmatpush1.msra.mxu0 0.0
      %1813 = vmatprep.subr.mxu0 0.0
      %1814 = vmatpush1.msra.mxu0 0.0
      %1815 = vmatprep.subr.mxu0 0.0
      %1816 = vmatpush1.msra.mxu0 0.0
      %1817 = vmatprep.subr.mxu0 0.0
      %1818 = vmatpush1.msra.mxu0 0.0
      %1819 = vmatprep.subr.mxu0 0.0
      %1820 = vmatpush1.msra.mxu0 0.0
      %1821 = vmatprep.subr.mxu0 0.0
      %1822 = vmatpush1.msra.mxu0 0.0
      %1823 = vmatprep.mubr.f32.mxu0 0.0
      %v1824 = vand.u32 %v1447, 4294901760
      %v1825 = vsub.f32 %v1447, %v1824
      %1826 = vmatmul.mubr.f32.gmra.mrb[0].mxu0 %v1825
      %v1827 = vpop.f32.mrb[0].mxu0
      %v1828 = vadd.f32 %v1718, %v1827
      %v1829 = vpop.f32.mrb[0].mxu0
      %1830 = vmatprep.mubr.f32.mxu0 0.0
      %v1831 = vand.u32 %v1448, 4294901760
      %v1832 = vsub.f32 %v1448, %v1831
      %1833 = vmatmul.mubr.f32.gmra.mrb[0].mxu0 %v1832
      %v1834 = vpop.f32.mrb[0].mxu0
      %v1835 = vadd.f32 %v1724, %v1834
      %v1836 = vpop.f32.mrb[0].mxu0
      %1837 = vdwg.mxu0
      %1838 = vmatprep.subr.mxu0 0.0
      %v1839 = vand.u32 %v1449, 4294901760
      %1840 = vmatpush1.msra.mxu0 %v1839
      %1841 = vmatprep.subr.mxu0 0.0
      %v1842 = vand.u32 %v1450, 4294901760
      %1843 = vmatpush1.msra.mxu0 %v1842
      %1844 = vmatprep.subr.mxu0 0.0
      %v1845 = vand.u32 %v1451, 4294901760
      %1846 = vmatpush1.msra.mxu0 %v1845
      %1847 = vmatprep.subr.mxu0 0.0
      %v1848 = vand.u32 %v1452, 4294901760
      %1849 = vmatpush1.msra.mxu0 %v1848
      %1850 = vmatprep.subr.mxu0 0.0
      %v1851 = vand.u32 %v1453, 4294901760
      %1852 = vmatpush1.msra.mxu0 %v1851
      %1853 = vmatprep.subr.mxu0 0.0
      %v1854 = vand.u32 %v1454, 4294901760
      %1855 = vmatpush1.msra.mxu0 %v1854
      %1856 = vmatprep.subr.mxu0 0.0
      %v1857 = vand.u32 %v1455, 4294901760
      %1858 = vmatpush1.msra.mxu0 %v1857
      %1859 = vmatprep.subr.mxu0 0.0
      %v1860 = vand.u32 %v1456, 4294901760
      %1861 = vmatpush1.msra.mxu0 %v1860
      %1862 = vmatprep.subr.mxu0 0.0
      %v1863 = vand.u32 %v1457, 4294901760
      %1864 = vmatpush1.msra.mxu0 %v1863
      %1865 = vmatprep.subr.mxu0 0.0
      %v1866 = vand.u32 %v1458, 4294901760
      %1867 = vmatpush1.msra.mxu0 %v1866
      %1868 = vmatprep.subr.mxu0 0.0
      %v1869 = vand.u32 %v1459, 4294901760
      %1870 = vmatpush1.msra.mxu0 %v1869
      %1871 = vmatprep.subr.mxu0 0.0
      %v1872 = vand.u32 %v1460, 4294901760
      %1873 = vmatpush1.msra.mxu0 %v1872
      %1874 = vmatprep.subr.mxu0 0.0
      %v1875 = vand.u32 %v1461, 4294901760
      %1876 = vmatpush1.msra.mxu0 %v1875
      %1877 = vmatprep.subr.mxu0 0.0
      %v1878 = vand.u32 %v1462, 4294901760
      %1879 = vmatpush1.msra.mxu0 %v1878
      %1880 = vmatprep.subr.mxu0 0.0
      %v1881 = vand.u32 %v1463, 4294901760
      %1882 = vmatpush1.msra.mxu0 %v1881
      %1883 = vmatprep.subr.mxu0 0.0
      %v1884 = vand.u32 %v1464, 4294901760
      %1885 = vmatpush1.msra.mxu0 %v1884
      %1886 = vmatprep.subr.mxu0 0.0
      %1887 = vmatpush1.msra.mxu0 0.0
      %1888 = vmatprep.subr.mxu0 0.0
      %1889 = vmatpush1.msra.mxu0 0.0
      %1890 = vmatprep.subr.mxu0 0.0
      %1891 = vmatpush1.msra.mxu0 0.0
      %1892 = vmatprep.subr.mxu0 0.0
      %1893 = vmatpush1.msra.mxu0 0.0
      %1894 = vmatprep.subr.mxu0 0.0
      %1895 = vmatpush1.msra.mxu0 0.0
      %1896 = vmatprep.subr.mxu0 0.0
      %1897 = vmatpush1.msra.mxu0 0.0
      %1898 = vmatprep.subr.mxu0 0.0
      %1899 = vmatpush1.msra.mxu0 0.0
      %1900 = vmatprep.subr.mxu0 0.0
      %1901 = vmatpush1.msra.mxu0 0.0
      %1902 = vmatprep.subr.mxu0 0.0
      %1903 = vmatpush1.msra.mxu0 0.0
      %1904 = vmatprep.subr.mxu0 0.0
      %1905 = vmatpush1.msra.mxu0 0.0
      %1906 = vmatprep.subr.mxu0 0.0
      %1907 = vmatpush1.msra.mxu0 0.0
      %1908 = vmatprep.subr.mxu0 0.0
      %1909 = vmatpush1.msra.mxu0 0.0
      %1910 = vmatprep.subr.mxu0 0.0
      %1911 = vmatpush1.msra.mxu0 0.0
      %1912 = vmatprep.subr.mxu0 0.0
      %1913 = vmatpush1.msra.mxu0 0.0
      %1914 = vmatprep.subr.mxu0 0.0
      %1915 = vmatpush1.msra.mxu0 0.0
      %1916 = vmatprep.subr.mxu0 0.0
      %1917 = vmatpush1.msra.mxu0 0.0
      %1918 = vmatprep.mubr.f32.mxu0 0.0
      %v1919 = vand.u32 %v1447, 4294901760
      %v1920 = vsub.f32 %v1447, %v1919
      %v1921 = vand.u32 %v1920, 4294901760
      %1922 = vmatmul.mubr.f32.gmra.mrb[0].mxu0 %v1921
      %v1923 = vpop.f32.mrb[0].mxu0
      %v1924 = vadd.f32 %v1828, %v1923
      %v1925 = vpop.f32.mrb[0].mxu0
      %1926 = vmatprep.mubr.f32.mxu0 0.0
      %v1927 = vand.u32 %v1448, 4294901760
      %v1928 = vsub.f32 %v1448, %v1927
      %v1929 = vand.u32 %v1928, 4294901760
      %1930 = vmatmul.mubr.f32.gmra.mrb[0].mxu0 %v1929
      %v1931 = vpop.f32.mrb[0].mxu0
      %v1932 = vadd.f32 %v1835, %v1931
      %v1933 = vpop.f32.mrb[0].mxu0
      %1934 = vdwg.mxu0
      %1935 = vmatprep.subr.mxu0 0.0
      %v1936 = vand.u32 %v1449, 4294901760
      %v1937 = vsub.f32 %v1449, %v1936
      %v1938 = vand.u32 %v1937, 4294901760
      %1939 = vmatpush1.msra.mxu0 %v1938
      %1940 = vmatprep.subr.mxu0 0.0
      %v1941 = vand.u32 %v1450, 4294901760
      %v1942 = vsub.f32 %v1450, %v1941
      %v1943 = vand.u32 %v1942, 4294901760
      %1944 = vmatpush1.msra.mxu0 %v1943
      %1945 = vmatprep.subr.mxu0 0.0
      %v1946 = vand.u32 %v1451, 4294901760
      %v1947 = vsub.f32 %v1451, %v1946
      %v1948 = vand.u32 %v1947, 4294901760
      %1949 = vmatpush1.msra.mxu0 %v1948
      %1950 = vmatprep.subr.mxu0 0.0
      %v1951 = vand.u32 %v1452, 4294901760
      %v1952 = vsub.f32 %v1452, %v1951
      %v1953 = vand.u32 %v1952, 4294901760
      %1954 = vmatpush1.msra.mxu0 %v1953
      %1955 = vmatprep.subr.mxu0 0.0
      %v1956 = vand.u32 %v1453, 4294901760
      %v1957 = vsub.f32 %v1453, %v1956
      %v1958 = vand.u32 %v1957, 4294901760
      %1959 = vmatpush1.msra.mxu0 %v1958
      %1960 = vmatprep.subr.mxu0 0.0
      %v1961 = vand.u32 %v1454, 4294901760
      %v1962 = vsub.f32 %v1454, %v1961
      %v1963 = vand.u32 %v1962, 4294901760
      %1964 = vmatpush1.msra.mxu0 %v1963
      %1965 = vmatprep.subr.mxu0 0.0
      %v1966 = vand.u32 %v1455, 4294901760
      %v1967 = vsub.f32 %v1455, %v1966
      %v1968 = vand.u32 %v1967, 4294901760
      %1969 = vmatpush1.msra.mxu0 %v1968
      %1970 = vmatprep.subr.mxu0 0.0
      %v1971 = vand.u32 %v1456, 4294901760
      %v1972 = vsub.f32 %v1456, %v1971
      %v1973 = vand.u32 %v1972, 4294901760
      %1974 = vmatpush1.msra.mxu0 %v1973
      %1975 = vmatprep.subr.mxu0 0.0
      %v1976 = vand.u32 %v1457, 4294901760
      %v1977 = vsub.f32 %v1457, %v1976
      %v1978 = vand.u32 %v1977, 4294901760
      %1979 = vmatpush1.msra.mxu0 %v1978
      %1980 = vmatprep.subr.mxu0 0.0
      %v1981 = vand.u32 %v1458, 4294901760
      %v1982 = vsub.f32 %v1458, %v1981
      %v1983 = vand.u32 %v1982, 4294901760
      %1984 = vmatpush1.msra.mxu0 %v1983
      %1985 = vmatprep.subr.mxu0 0.0
      %v1986 = vand.u32 %v1459, 4294901760
      %v1987 = vsub.f32 %v1459, %v1986
      %v1988 = vand.u32 %v1987, 4294901760
      %1989 = vmatpush1.msra.mxu0 %v1988
      %1990 = vmatprep.subr.mxu0 0.0
      %v1991 = vand.u32 %v1460, 4294901760
      %v1992 = vsub.f32 %v1460, %v1991
      %v1993 = vand.u32 %v1992, 4294901760
      %1994 = vmatpush1.msra.mxu0 %v1993
      %1995 = vmatprep.subr.mxu0 0.0
      %v1996 = vand.u32 %v1461, 4294901760
      %v1997 = vsub.f32 %v1461, %v1996
      %v1998 = vand.u32 %v1997, 4294901760
      %1999 = vmatpush1.msra.mxu0 %v1998
      %2000 = vmatprep.subr.mxu0 0.0
      %v2001 = vand.u32 %v1462, 4294901760
      %v2002 = vsub.f32 %v1462, %v2001
      %v2003 = vand.u32 %v2002, 4294901760
      %2004 = vmatpush1.msra.mxu0 %v2003
      %2005 = vmatprep.subr.mxu0 0.0
      %v2006 = vand.u32 %v1463, 4294901760
      %v2007 = vsub.f32 %v1463, %v2006
      %v2008 = vand.u32 %v2007, 4294901760
      %2009 = vmatpush1.msra.mxu0 %v2008
      %2010 = vmatprep.subr.mxu0 0.0
      %v2011 = vand.u32 %v1464, 4294901760
      %v2012 = vsub.f32 %v1464, %v2011
      %v2013 = vand.u32 %v2012, 4294901760
      %2014 = vmatpush1.msra.mxu0 %v2013
      %2015 = vmatprep.subr.mxu0 0.0
      %2016 = vmatpush1.msra.mxu0 0.0
      %2017 = vmatprep.subr.mxu0 0.0
      %2018 = vmatpush1.msra.mxu0 0.0
      %2019 = vmatprep.subr.mxu0 0.0
      %2020 = vmatpush1.msra.mxu0 0.0
      %2021 = vmatprep.subr.mxu0 0.0
      %2022 = vmatpush1.msra.mxu0 0.0
      %2023 = vmatprep.subr.mxu0 0.0
      %2024 = vmatpush1.msra.mxu0 0.0
      %2025 = vmatprep.subr.mxu0 0.0
      %2026 = vmatpush1.msra.mxu0 0.0
      %2027 = vmatprep.subr.mxu0 0.0
      %2028 = vmatpush1.msra.mxu0 0.0
      %2029 = vmatprep.subr.mxu0 0.0
      %2030 = vmatpush1.msra.mxu0 0.0
      %2031 = vmatprep.subr.mxu0 0.0
      %2032 = vmatpush1.msra.mxu0 0.0
      %2033 = vmatprep.subr.mxu0 0.0
      %2034 = vmatpush1.msra.mxu0 0.0
      %2035 = vmatprep.subr.mxu0 0.0
      %2036 = vmatpush1.msra.mxu0 0.0
      %2037 = vmatprep.subr.mxu0 0.0
      %2038 = vmatpush1.msra.mxu0 0.0
      %2039 = vmatprep.subr.mxu0 0.0
      %2040 = vmatpush1.msra.mxu0 0.0
      %2041 = vmatprep.subr.mxu0 0.0
      %2042 = vmatpush1.msra.mxu0 0.0
      %2043 = vmatprep.subr.mxu0 0.0
      %2044 = vmatpush1.msra.mxu0 0.0
      %2045 = vmatprep.subr.mxu0 0.0
      %2046 = vmatpush1.msra.mxu0 0.0
      %2047 = vmatprep.mubr.f32.mxu0 0.0
      %v2048 = vand.u32 %v1447, 4294901760
      %2049 = vmatmul.mubr.f32.gmra.mrb[0].mxu0 %v2048
      %v2050 = vpop.f32.mrb[0].mxu0
      %v2051 = vadd.f32 %v1924, %v2050
      %v2052 = vpop.f32.mrb[0].mxu0
      %2053 = vmatprep.mubr.f32.mxu0 0.0
      %v2054 = vand.u32 %v1448, 4294901760
      %2055 = vmatmul.mubr.f32.gmra.mrb[0].mxu0 %v2054
      %v2056 = vpop.f32.mrb[0].mxu0
      %v2057 = vadd.f32 %v1932, %v2056
      %v2058 = vpop.f32.mrb[0].mxu0
      %2059 = vdwg.mxu0
      %2060 = vmatprep.subr.mxu0 0.0
      %v2061 = vand.u32 %v1449, 4294901760
      %2062 = vmatpush1.msra.mxu0 %v2061
      %2063 = vmatprep.subr.mxu0 0.0
      %v2064 = vand.u32 %v1450, 4294901760
      %2065 = vmatpush1.msra.mxu0 %v2064
      %2066 = vmatprep.subr.mxu0 0.0
      %v2067 = vand.u32 %v1451, 4294901760
      %2068 = vmatpush1.msra.mxu0 %v2067
      %2069 = vmatprep.subr.mxu0 0.0
      %v2070 = vand.u32 %v1452, 4294901760
      %2071 = vmatpush1.msra.mxu0 %v2070
      %2072 = vmatprep.subr.mxu0 0.0
      %v2073 = vand.u32 %v1453, 4294901760
      %2074 = vmatpush1.msra.mxu0 %v2073
      %2075 = vmatprep.subr.mxu0 0.0
      %v2076 = vand.u32 %v1454, 4294901760
      %2077 = vmatpush1.msra.mxu0 %v2076
      %2078 = vmatprep.subr.mxu0 0.0
      %v2079 = vand.u32 %v1455, 4294901760
      %2080 = vmatpush1.msra.mxu0 %v2079
      %2081 = vmatprep.subr.mxu0 0.0
      %v2082 = vand.u32 %v1456, 4294901760
      %2083 = vmatpush1.msra.mxu0 %v2082
      %2084 = vmatprep.subr.mxu0 0.0
      %v2085 = vand.u32 %v1457, 4294901760
      %2086 = vmatpush1.msra.mxu0 %v2085
      %2087 = vmatprep.subr.mxu0 0.0
      %v2088 = vand.u32 %v1458, 4294901760
      %2089 = vmatpush1.msra.mxu0 %v2088
      %2090 = vmatprep.subr.mxu0 0.0
      %v2091 = vand.u32 %v1459, 4294901760
      %2092 = vmatpush1.msra.mxu0 %v2091
      %2093 = vmatprep.subr.mxu0 0.0
      %v2094 = vand.u32 %v1460, 4294901760
      %2095 = vmatpush1.msra.mxu0 %v2094
      %2096 = vmatprep.subr.mxu0 0.0
      %v2097 = vand.u32 %v1461, 4294901760
      %2098 = vmatpush1.msra.mxu0 %v2097
      %2099 = vmatprep.subr.mxu0 0.0
      %v2100 = vand.u32 %v1462, 4294901760
      %2101 = vmatpush1.msra.mxu0 %v2100
      %2102 = vmatprep.subr.mxu0 0.0
      %v2103 = vand.u32 %v1463, 4294901760
      %2104 = vmatpush1.msra.mxu0 %v2103
      %2105 = vmatprep.subr.mxu0 0.0
      %v2106 = vand.u32 %v1464, 4294901760
      %2107 = vmatpush1.msra.mxu0 %v2106
      %2108 = vmatprep.subr.mxu0 0.0
      %2109 = vmatpush1.msra.mxu0 0.0
      %2110 = vmatprep.subr.mxu0 0.0
      %2111 = vmatpush1.msra.mxu0 0.0
      %2112 = vmatprep.subr.mxu0 0.0
      %2113 = vmatpush1.msra.mxu0 0.0
      %2114 = vmatprep.subr.mxu0 0.0
      %2115 = vmatpush1.msra.mxu0 0.0
      %2116 = vmatprep.subr.mxu0 0.0
      %2117 = vmatpush1.msra.mxu0 0.0
      %2118 = vmatprep.subr.mxu0 0.0
      %2119 = vmatpush1.msra.mxu0 0.0
      %2120 = vmatprep.subr.mxu0 0.0
      %2121 = vmatpush1.msra.mxu0 0.0
      %2122 = vmatprep.subr.mxu0 0.0
      %2123 = vmatpush1.msra.mxu0 0.0
      %2124 = vmatprep.subr.mxu0 0.0
      %2125 = vmatpush1.msra.mxu0 0.0
      %2126 = vmatprep.subr.mxu0 0.0
      %2127 = vmatpush1.msra.mxu0 0.0
      %2128 = vmatprep.subr.mxu0 0.0
      %2129 = vmatpush1.msra.mxu0 0.0
      %2130 = vmatprep.subr.mxu0 0.0
      %2131 = vmatpush1.msra.mxu0 0.0
      %2132 = vmatprep.subr.mxu0 0.0
      %2133 = vmatpush1.msra.mxu0 0.0
      %2134 = vmatprep.subr.mxu0 0.0
      %2135 = vmatpush1.msra.mxu0 0.0
      %2136 = vmatprep.subr.mxu0 0.0
      %2137 = vmatpush1.msra.mxu0 0.0
      %2138 = vmatprep.subr.mxu0 0.0
      %2139 = vmatpush1.msra.mxu0 0.0
      %2140 = vmatprep.mubr.f32.mxu0 0.0
      %v2141 = vand.u32 %v1447, 4294901760
      %2142 = vmatmul.mubr.f32.gmra.mrb[0].mxu0 %v2141
      %v2143 = vpop.f32.mrb[0].mxu0
      %v2144 = vadd.f32 %v2051, %v2143
      %v2145 = vpop.f32.mrb[0].mxu0
      %2146 = vmatprep.mubr.f32.mxu0 0.0
      %v2147 = vand.u32 %v1448, 4294901760
      %2148 = vmatmul.mubr.f32.gmra.mrb[0].mxu0 %v2147
      %v2149 = vpop.f32.mrb[0].mxu0
      %v2150 = vadd.f32 %v2057, %v2149
      %v2151 = vpop.f32.mrb[0].mxu0
      %2152 = vdwg.mxu0
      %2153 = vst.msk [vmem:[#allocation2] ss:$8 sm:$0x3] %vm1113, -3.4028235e+38
      %2154 = vst.msk [vmem:[#allocation2] ss:$8 sm:$0x0] %vm1113, -3.4028235e+38
      %2155 = vst.msk [vmem:[%s1116] ss:$8 sm:$0x3] %vm1113, -3.4028235e+38
      %2156 = vst.msk [vmem:[%s1116] ss:$8 sm:$0x0] %vm1113, -3.4028235e+38
      %2157 = vst.msk [vmem:[#allocation2] sm:$0xff] %vm1119, -3.4028235e+38
      %2158 = vst.msk [vmem:[#allocation2 + $0x10] sm:$0xff] %vm1119, -3.4028235e+38
      %2159 = vst.msk [vmem:[#allocation2 + $0x20] sm:$0x3] %vm1122, -3.4028235e+38
      %2160 = vst.msk [vmem:[#allocation2 + $0x8] sm:$0xff] %vm1124, -3.4028235e+38
      %2161 = vst.msk [vmem:[#allocation2 + $0x18] sm:$0xff] %vm1124, -3.4028235e+38
      %2162 = vst.msk [vmem:[#allocation2 + $0x28] sm:$0x3] %vm1127, -3.4028235e+38
      %v2165 = vrot.slane %v2144, 7
      %v2166 = vrot.slane %v2150, 7
      %v2167 = vsel %vm1131, %v2165, %v2166
      %2168 = vrot.lane.b32.xlu0 %v2165, 8
      %v2169 = vpop.permute.xlu0 %2168
      %2170 = vrot.lane.b32.xlu0 %v2167, 8
      %v2171 = vpop.permute.xlu0 %2170
      %2172 = vrot.lane.b32.xlu0 %v2166, 8
      %v2173 = vpop.permute.xlu0 %2172
      %2177 = vst.msk [vmem:[#allocation2] sm:$0xfe] %vm1144, %v2169
      %2178 = vst.msk [vmem:[#allocation2 + $0x8] sm:$0xfe] %vm1146, %v2169
      %2179 = vst.msk [vmem:[#allocation2 + $0x10] sm:$0xff] %vm1148, %v2171
      %2180 = vst.msk [vmem:[#allocation2 + $0x18] sm:$0xff] %vm1119, %v2171
      %2181 = vst.msk [vmem:[#allocation2 + $0x20] sm:$0x1] %vm1151, %v2173
      %2182 = vst.msk [vmem:[#allocation2 + $0x28] sm:$0x1] %vm1153, %v2173
      %v2183 = vld [vmem:[#allocation2] sm:$0xff]
      %v2184 = vld [vmem:[#allocation2 + $0x10] sm:$0xff]
      %v2185 = vld [vmem:[#allocation2 + $0x8] sm:$0xff]
      %v2186 = vld [vmem:[#allocation2 + $0x18] sm:$0xff]
      %2191 = vrot.lane.b32.xlu0 %v2183, 120
      %v2192 = vpop.permute.xlu0 %2191
      %2193 = vrot.lane.b32.xlu0 %v2185, 120
      %v2194 = vpop.permute.xlu0 %2193
      %2195 = vrot.lane.b32.xlu0 %v2184, 120
      %v2196 = vpop.permute.xlu0 %2195
      %2197 = vrot.lane.b32.xlu0 %v2186, 120
      %v2198 = vpop.permute.xlu0 %2197
      %v2199 = vsel %vm1189, %v2192, %v2194
      %v2200 = vsel %vm1189, %v2196, %v2198
      %v2203 = vmax.f32 %v2183, %v2199
      %v2204 = vmax.f32 %v2184, %v2200
      %2205 = vrot.lane.b32.xlu0 %v2183, 112
      %v2206 = vpop.permute.xlu0 %2205
      %2207 = vrot.lane.b32.xlu0 %v2185, 112
      %v2208 = vpop.permute.xlu0 %2207
      %2209 = vrot.lane.b32.xlu0 %v2184, 112
      %v2210 = vpop.permute.xlu0 %2209
      %2211 = vrot.lane.b32.xlu0 %v2186, 112
      %v2212 = vpop.permute.xlu0 %2211
      %v2213 = vsel %vm1220, %v2206, %v2208
      %v2214 = vsel %vm1220, %v2210, %v2212
      %v2217 = vmax.f32 %v2203, %v2213
      %v2218 = vmax.f32 %v2204, %v2214
      %v2219 = vld [vmem:[#allocation2] sm:$0xfe]
      %v2220 = vld [vmem:[#allocation2 + $0x20] sm:$0x1]
      %v2223 = vrot.slane %v2219, 1
      %v2224 = vrot.slane %v2184, 1
      %v2225 = vsel %vm371, %v2223, %v2224
      %v2226 = vrot.slane %v2220, 1
      %v2227 = vsel %vm371, %v2224, %v2226
      %v2230 = vmax.f32 %v2217, %v2225
      %v2231 = vmax.f32 %v2218, %v2227
      %v2232 = vld [vmem:[#allocation2 + $0x8] sm:$0xfe]
      %v2233 = vld [vmem:[#allocation2 + $0x28] sm:$0x1]
      %v2236 = vrot.slane %v2232, 1
      %v2237 = vrot.slane %v2186, 1
      %v2238 = vsel %vm371, %v2236, %v2237
      %v2239 = vrot.slane %v2233, 1
      %v2240 = vsel %vm371, %v2237, %v2239
      %2241 = vrot.lane.b32.xlu0 %v2225, 120
      %v2242 = vpop.permute.xlu0 %2241
      %2243 = vrot.lane.b32.xlu0 %v2238, 120
      %v2244 = vpop.permute.xlu0 %2243
      %2245 = vrot.lane.b32.xlu0 %v2227, 120
      %v2246 = vpop.permute.xlu0 %2245
      %2247 = vrot.lane.b32.xlu0 %v2240, 120
      %v2248 = vpop.permute.xlu0 %2247
      %v2249 = vsel %vm1189, %v2242, %v2244
      %v2250 = vsel %vm1189, %v2246, %v2248
      %v2253 = vmax.f32 %v2230, %v2249
      %v2254 = vmax.f32 %v2231, %v2250
      %2255 = vrot.lane.b32.xlu0 %v2225, 112
      %v2256 = vpop.permute.xlu0 %2255
      %2257 = vrot.lane.b32.xlu0 %v2238, 112
      %v2258 = vpop.permute.xlu0 %2257
      %2259 = vrot.lane.b32.xlu0 %v2227, 112
      %v2260 = vpop.permute.xlu0 %2259
      %2261 = vrot.lane.b32.xlu0 %v2240, 112
      %v2262 = vpop.permute.xlu0 %2261
      %v2263 = vsel %vm1220, %v2256, %v2258
      %v2264 = vsel %vm1220, %v2260, %v2262
      %v2267 = vmax.f32 %v2253, %v2263
      %v2268 = vmax.f32 %v2254, %v2264
      %v2269 = vld [vmem:[#allocation2] sm:$0xfc]
      %v2270 = vld [vmem:[#allocation2 + $0x20] sm:$0x3]
      %v2273 = vrot.slane %v2269, 2
      %v2274 = vrot.slane %v2184, 2
      %v2275 = vsel %vm445, %v2273, %v2274
      %v2276 = vrot.slane %v2270, 2
      %v2277 = vsel %vm445, %v2274, %v2276
      %v2280 = vmax.f32 %v2267, %v2275
      %v2281 = vmax.f32 %v2268, %v2277
      %v2282 = vld [vmem:[#allocation2 + $0x8] sm:$0xfc]
      %v2283 = vld [vmem:[#allocation2 + $0x28] sm:$0x3]
      %v2286 = vrot.slane %v2282, 2
      %v2287 = vrot.slane %v2186, 2
      %v2288 = vsel %vm445, %v2286, %v2287
      %v2289 = vrot.slane %v2283, 2
      %v2290 = vsel %vm445, %v2287, %v2289
      %2291 = vrot.lane.b32.xlu0 %v2275, 120
      %v2292 = vpop.permute.xlu0 %2291
      %2293 = vrot.lane.b32.xlu0 %v2288, 120
      %v2294 = vpop.permute.xlu0 %2293
      %2295 = vrot.lane.b32.xlu0 %v2277, 120
      %v2296 = vpop.permute.xlu0 %2295
      %2297 = vrot.lane.b32.xlu0 %v2290, 120
      %v2298 = vpop.permute.xlu0 %2297
      %v2299 = vsel %vm1189, %v2292, %v2294
      %v2300 = vsel %vm1189, %v2296, %v2298
      %v2303 = vmax.f32 %v2280, %v2299
      %v2304 = vmax.f32 %v2281, %v2300
      %2305 = vrot.lane.b32.xlu0 %v2275, 112
      %v2306 = vpop.permute.xlu0 %2305
      %2307 = vrot.lane.b32.xlu0 %v2288, 112
      %v2308 = vpop.permute.xlu0 %2307
      %2309 = vrot.lane.b32.xlu0 %v2277, 112
      %v2310 = vpop.permute.xlu0 %2309
      %2311 = vrot.lane.b32.xlu0 %v2290, 112
      %v2312 = vpop.permute.xlu0 %2311
      %v2313 = vsel %vm1220, %v2306, %v2308
      %v2314 = vsel %vm1220, %v2310, %v2312
      %v2317 = vmax.f32 %v2303, %v2313
      %v2318 = vmax.f32 %v2304, %v2314
      %vm2319 = vcmask 130048
      %v2321 = vsel %vm2319, %v311, 0
      %2323 = vmatprep.subr.mxu0 0.0
      %v2324 = vand.u32 %v2317, 4294901760
      %2325 = vmatpush1.msra.mxu0 %v2324
      %2326 = vmatprep.subr.mxu0 0.0
      %v2327 = vand.u32 %v2318, 4294901760
      %2328 = vmatpush1.msra.mxu0 %v2327
      %2329 = vmatprep.subr.mxu0 0.0
      %2330 = vmatpush1.msra.mxu0 0.0
      %2331 = vmatprep.subr.mxu0 0.0
      %2332 = vmatpush1.msra.mxu0 0.0
      %2333 = vmatprep.subr.mxu0 0.0
      %2334 = vmatpush1.msra.mxu0 0.0
      %2335 = vmatprep.subr.mxu0 0.0
      %2336 = vmatpush1.msra.mxu0 0.0
      %2337 = vmatprep.subr.mxu0 0.0
      %2338 = vmatpush1.msra.mxu0 0.0
      %2339 = vmatprep.subr.mxu0 0.0
      %2340 = vmatpush1.msra.mxu0 0.0
      %2341 = vmatprep.subr.mxu0 0.0
      %2342 = vmatpush1.msra.mxu0 0.0
      %2343 = vmatprep.subr.mxu0 0.0
      %2344 = vmatpush1.msra.mxu0 0.0
      %2345 = vmatprep.subr.mxu0 0.0
      %2346 = vmatpush1.msra.mxu0 0.0
      %2347 = vmatprep.subr.mxu0 0.0
      %2348 = vmatpush1.msra.mxu0 0.0
      %2349 = vmatprep.subr.mxu0 0.0
      %2350 = vmatpush1.msra.mxu0 0.0
      %2351 = vmatprep.subr.mxu0 0.0
      %2352 = vmatpush1.msra.mxu0 0.0
      %2353 = vmatprep.subr.mxu0 0.0
      %2354 = vmatpush1.msra.mxu0 0.0
      %2355 = vmatprep.subr.mxu0 0.0
      %2356 = vmatpush1.msra.mxu0 0.0
      %2357 = vmatprep.subr.mxu0 0.0
      %2358 = vmatpush1.msra.mxu0 0.0
      %2359 = vmatprep.subr.mxu0 0.0
      %2360 = vmatpush1.msra.mxu0 0.0
      %2361 = vmatprep.subr.mxu0 0.0
      %2362 = vmatpush1.msra.mxu0 0.0
      %2363 = vmatprep.subr.mxu0 0.0
      %2364 = vmatpush1.msra.mxu0 0.0
      %2365 = vmatprep.subr.mxu0 0.0
      %2366 = vmatpush1.msra.mxu0 0.0
      %2367 = vmatprep.subr.mxu0 0.0
      %2368 = vmatpush1.msra.mxu0 0.0
      %2369 = vmatprep.subr.mxu0 0.0
      %2370 = vmatpush1.msra.mxu0 0.0
      %2371 = vmatprep.subr.mxu0 0.0
      %2372 = vmatpush1.msra.mxu0 0.0
      %2373 = vmatprep.subr.mxu0 0.0
      %2374 = vmatpush1.msra.mxu0 0.0
      %2375 = vmatprep.subr.mxu0 0.0
      %2376 = vmatpush1.msra.mxu0 0.0
      %2377 = vmatprep.subr.mxu0 0.0
      %2378 = vmatpush1.msra.mxu0 0.0
      %2379 = vmatprep.subr.mxu0 0.0
      %2380 = vmatpush1.msra.mxu0 0.0
      %2381 = vmatprep.subr.mxu0 0.0
      %2382 = vmatpush1.msra.mxu0 0.0
      %2383 = vmatprep.subr.mxu0 0.0
      %2384 = vmatpush1.msra.mxu0 0.0
      %2385 = vmatprep.subr.mxu0 0.0
      %2386 = vmatpush1.msra.mxu0 0.0
      %2387 = vmatprep.subr.mxu0 0.0
      %2388 = vmatpush1.msra.mxu0 0.0
      %2389 = vmatprep.mubr.f32.mxu0 0.0
      %v2390 = vand.u32 %v2321, 4294901760
      %v2391 = vsub.f32 %v2321, %v2390
      %v2392 = vand.u32 %v2391, 4294901760
      %v2393 = vsub.f32 %v2391, %v2392
      %v2394 = vand.u32 %v2393, 4294901760
      %2395 = vmatmul.mubr.f32.gmra.mrb[0].mxu0 %v2394
      %v2396 = vpop.f32.mrb[0].mxu0
      %v2397 = vadd.f32 0.0, %v2396
      %v2398 = vpop.f32.mrb[0].mxu0
      %2399 = vdwg.mxu0
      %2400 = vmatprep.subr.mxu0 0.0
      %v2401 = vand.u32 %v2317, 4294901760
      %v2402 = vsub.f32 %v2317, %v2401
      %v2403 = vand.u32 %v2402, 4294901760
      %v2404 = vsub.f32 %v2402, %v2403
      %v2405 = vand.u32 %v2404, 4294901760
      %2406 = vmatpush1.msra.mxu0 %v2405
      %2407 = vmatprep.subr.mxu0 0.0
      %v2408 = vand.u32 %v2318, 4294901760
      %v2409 = vsub.f32 %v2318, %v2408
      %v2410 = vand.u32 %v2409, 4294901760
      %v2411 = vsub.f32 %v2409, %v2410
      %v2412 = vand.u32 %v2411, 4294901760
      %2413 = vmatpush1.msra.mxu0 %v2412
      %2414 = vmatprep.subr.mxu0 0.0
      %2415 = vmatpush1.msra.mxu0 0.0
      %2416 = vmatprep.subr.mxu0 0.0
      %2417 = vmatpush1.msra.mxu0 0.0
      %2418 = vmatprep.subr.mxu0 0.0
      %2419 = vmatpush1.msra.mxu0 0.0
      %2420 = vmatprep.subr.mxu0 0.0
      %2421 = vmatpush1.msra.mxu0 0.0
      %2422 = vmatprep.subr.mxu0 0.0
      %2423 = vmatpush1.msra.mxu0 0.0
      %2424 = vmatprep.subr.mxu0 0.0
      %2425 = vmatpush1.msra.mxu0 0.0
      %2426 = vmatprep.subr.mxu0 0.0
      %2427 = vmatpush1.msra.mxu0 0.0
      %2428 = vmatprep.subr.mxu0 0.0
      %2429 = vmatpush1.msra.mxu0 0.0
      %2430 = vmatprep.subr.mxu0 0.0
      %2431 = vmatpush1.msra.mxu0 0.0
      %2432 = vmatprep.subr.mxu0 0.0
      %2433 = vmatpush1.msra.mxu0 0.0
      %2434 = vmatprep.subr.mxu0 0.0
      %2435 = vmatpush1.msra.mxu0 0.0
      %2436 = vmatprep.subr.mxu0 0.0
      %2437 = vmatpush1.msra.mxu0 0.0
      %2438 = vmatprep.subr.mxu0 0.0
      %2439 = vmatpush1.msra.mxu0 0.0
      %2440 = vmatprep.subr.mxu0 0.0
      %2441 = vmatpush1.msra.mxu0 0.0
      %2442 = vmatprep.subr.mxu0 0.0
      %2443 = vmatpush1.msra.mxu0 0.0
      %2444 = vmatprep.subr.mxu0 0.0
      %2445 = vmatpush1.msra.mxu0 0.0
      %2446 = vmatprep.subr.mxu0 0.0
      %2447 = vmatpush1.msra.mxu0 0.0
      %2448 = vmatprep.subr.mxu0 0.0
      %2449 = vmatpush1.msra.mxu0 0.0
      %2450 = vmatprep.subr.mxu0 0.0
      %2451 = vmatpush1.msra.mxu0 0.0
      %2452 = vmatprep.subr.mxu0 0.0
      %2453 = vmatpush1.msra.mxu0 0.0
      %2454 = vmatprep.subr.mxu0 0.0
      %2455 = vmatpush1.msra.mxu0 0.0
      %2456 = vmatprep.subr.mxu0 0.0
      %2457 = vmatpush1.msra.mxu0 0.0
      %2458 = vmatprep.subr.mxu0 0.0
      %2459 = vmatpush1.msra.mxu0 0.0
      %2460 = vmatprep.subr.mxu0 0.0
      %2461 = vmatpush1.msra.mxu0 0.0
      %2462 = vmatprep.subr.mxu0 0.0
      %2463 = vmatpush1.msra.mxu0 0.0
      %2464 = vmatprep.subr.mxu0 0.0
      %2465 = vmatpush1.msra.mxu0 0.0
      %2466 = vmatprep.subr.mxu0 0.0
      %2467 = vmatpush1.msra.mxu0 0.0
      %2468 = vmatprep.subr.mxu0 0.0
      %2469 = vmatpush1.msra.mxu0 0.0
      %2470 = vmatprep.subr.mxu0 0.0
      %2471 = vmatpush1.msra.mxu0 0.0
      %2472 = vmatprep.subr.mxu0 0.0
      %2473 = vmatpush1.msra.mxu0 0.0
      %2474 = vmatprep.mubr.f32.mxu0 0.0
      %v2475 = vand.u32 %v2321, 4294901760
      %2476 = vmatmul.mubr.f32.gmra.mrb[0].mxu0 %v2475
      %v2477 = vpop.f32.mrb[0].mxu0
      %v2478 = vadd.f32 %v2397, %v2477
      %v2479 = vpop.f32.mrb[0].mxu0
      %2480 = vdwg.mxu0
      %2481 = vmatprep.subr.mxu0 0.0
      %v2482 = vand.u32 %v2317, 4294901760
      %v2483 = vsub.f32 %v2317, %v2482
      %2484 = vmatpush1.msra.mxu0 %v2483
      %2485 = vmatprep.subr.mxu0 0.0
      %v2486 = vand.u32 %v2318, 4294901760
      %v2487 = vsub.f32 %v2318, %v2486
      %2488 = vmatpush1.msra.mxu0 %v2487
      %2489 = vmatprep.subr.mxu0 0.0
      %2490 = vmatpush1.msra.mxu0 0.0
      %2491 = vmatprep.subr.mxu0 0.0
      %2492 = vmatpush1.msra.mxu0 0.0
      %2493 = vmatprep.subr.mxu0 0.0
      %2494 = vmatpush1.msra.mxu0 0.0
      %2495 = vmatprep.subr.mxu0 0.0
      %2496 = vmatpush1.msra.mxu0 0.0
      %2497 = vmatprep.subr.mxu0 0.0
      %2498 = vmatpush1.msra.mxu0 0.0
      %2499 = vmatprep.subr.mxu0 0.0
      %2500 = vmatpush1.msra.mxu0 0.0
      %2501 = vmatprep.subr.mxu0 0.0
      %2502 = vmatpush1.msra.mxu0 0.0
      %2503 = vmatprep.subr.mxu0 0.0
      %2504 = vmatpush1.msra.mxu0 0.0
      %2505 = vmatprep.subr.mxu0 0.0
      %2506 = vmatpush1.msra.mxu0 0.0
      %2507 = vmatprep.subr.mxu0 0.0
      %2508 = vmatpush1.msra.mxu0 0.0
      %2509 = vmatprep.subr.mxu0 0.0
      %2510 = vmatpush1.msra.mxu0 0.0
      %2511 = vmatprep.subr.mxu0 0.0
      %2512 = vmatpush1.msra.mxu0 0.0
      %2513 = vmatprep.subr.mxu0 0.0
      %2514 = vmatpush1.msra.mxu0 0.0
      %2515 = vmatprep.subr.mxu0 0.0
      %2516 = vmatpush1.msra.mxu0 0.0
      %2517 = vmatprep.subr.mxu0 0.0
      %2518 = vmatpush1.msra.mxu0 0.0
      %2519 = vmatprep.subr.mxu0 0.0
      %2520 = vmatpush1.msra.mxu0 0.0
      %2521 = vmatprep.subr.mxu0 0.0
      %2522 = vmatpush1.msra.mxu0 0.0
      %2523 = vmatprep.subr.mxu0 0.0
      %2524 = vmatpush1.msra.mxu0 0.0
      %2525 = vmatprep.subr.mxu0 0.0
      %2526 = vmatpush1.msra.mxu0 0.0
      %2527 = vmatprep.subr.mxu0 0.0
      %2528 = vmatpush1.msra.mxu0 0.0
      %2529 = vmatprep.subr.mxu0 0.0
      %2530 = vmatpush1.msra.mxu0 0.0
      %2531 = vmatprep.subr.mxu0 0.0
      %2532 = vmatpush1.msra.mxu0 0.0
      %2533 = vmatprep.subr.mxu0 0.0
      %2534 = vmatpush1.msra.mxu0 0.0
      %2535 = vmatprep.subr.mxu0 0.0
      %2536 = vmatpush1.msra.mxu0 0.0
      %2537 = vmatprep.subr.mxu0 0.0
      %2538 = vmatpush1.msra.mxu0 0.0
      %2539 = vmatprep.subr.mxu0 0.0
      %2540 = vmatpush1.msra.mxu0 0.0
      %2541 = vmatprep.subr.mxu0 0.0
      %2542 = vmatpush1.msra.mxu0 0.0
      %2543 = vmatprep.subr.mxu0 0.0
      %2544 = vmatpush1.msra.mxu0 0.0
      %2545 = vmatprep.subr.mxu0 0.0
      %2546 = vmatpush1.msra.mxu0 0.0
      %2547 = vmatprep.subr.mxu0 0.0
      %2548 = vmatpush1.msra.mxu0 0.0
      %2549 = vmatprep.mubr.f32.mxu0 0.0
      %v2550 = vand.u32 %v2321, 4294901760
      %v2551 = vsub.f32 %v2321, %v2550
      %2552 = vmatmul.mubr.f32.gmra.mrb[0].mxu0 %v2551
      %v2553 = vpop.f32.mrb[0].mxu0
      %v2554 = vadd.f32 %v2478, %v2553
      %v2555 = vpop.f32.mrb[0].mxu0
      %2556 = vdwg.mxu0
      %2557 = vmatprep.subr.mxu0 0.0
      %v2558 = vand.u32 %v2317, 4294901760
      %2559 = vmatpush1.msra.mxu0 %v2558
      %2560 = vmatprep.subr.mxu0 0.0
      %v2561 = vand.u32 %v2318, 4294901760
      %2562 = vmatpush1.msra.mxu0 %v2561
      %2563 = vmatprep.subr.mxu0 0.0
      %2564 = vmatpush1.msra.mxu0 0.0
      %2565 = vmatprep.subr.mxu0 0.0
      %2566 = vmatpush1.msra.mxu0 0.0
      %2567 = vmatprep.subr.mxu0 0.0
      %2568 = vmatpush1.msra.mxu0 0.0
      %2569 = vmatprep.subr.mxu0 0.0
      %2570 = vmatpush1.msra.mxu0 0.0
      %2571 = vmatprep.subr.mxu0 0.0
      %2572 = vmatpush1.msra.mxu0 0.0
      %2573 = vmatprep.subr.mxu0 0.0
      %2574 = vmatpush1.msra.mxu0 0.0
      %2575 = vmatprep.subr.mxu0 0.0
      %2576 = vmatpush1.msra.mxu0 0.0
      %2577 = vmatprep.subr.mxu0 0.0
      %2578 = vmatpush1.msra.mxu0 0.0
      %2579 = vmatprep.subr.mxu0 0.0
      %2580 = vmatpush1.msra.mxu0 0.0
      %2581 = vmatprep.subr.mxu0 0.0
      %2582 = vmatpush1.msra.mxu0 0.0
      %2583 = vmatprep.subr.mxu0 0.0
      %2584 = vmatpush1.msra.mxu0 0.0
      %2585 = vmatprep.subr.mxu0 0.0
      %2586 = vmatpush1.msra.mxu0 0.0
      %2587 = vmatprep.subr.mxu0 0.0
      %2588 = vmatpush1.msra.mxu0 0.0
      %2589 = vmatprep.subr.mxu0 0.0
      %2590 = vmatpush1.msra.mxu0 0.0
      %2591 = vmatprep.subr.mxu0 0.0
      %2592 = vmatpush1.msra.mxu0 0.0
      %2593 = vmatprep.subr.mxu0 0.0
      %2594 = vmatpush1.msra.mxu0 0.0
      %2595 = vmatprep.subr.mxu0 0.0
      %2596 = vmatpush1.msra.mxu0 0.0
      %2597 = vmatprep.subr.mxu0 0.0
      %2598 = vmatpush1.msra.mxu0 0.0
      %2599 = vmatprep.subr.mxu0 0.0
      %2600 = vmatpush1.msra.mxu0 0.0
      %2601 = vmatprep.subr.mxu0 0.0
      %2602 = vmatpush1.msra.mxu0 0.0
      %2603 = vmatprep.subr.mxu0 0.0
      %2604 = vmatpush1.msra.mxu0 0.0
      %2605 = vmatprep.subr.mxu0 0.0
      %2606 = vmatpush1.msra.mxu0 0.0
      %2607 = vmatprep.subr.mxu0 0.0
      %2608 = vmatpush1.msra.mxu0 0.0
      %2609 = vmatprep.subr.mxu0 0.0
      %2610 = vmatpush1.msra.mxu0 0.0
      %2611 = vmatprep.subr.mxu0 0.0
      %2612 = vmatpush1.msra.mxu0 0.0
      %2613 = vmatprep.subr.mxu0 0.0
      %2614 = vmatpush1.msra.mxu0 0.0
      %2615 = vmatprep.subr.mxu0 0.0
      %2616 = vmatpush1.msra.mxu0 0.0
      %2617 = vmatprep.subr.mxu0 0.0
      %2618 = vmatpush1.msra.mxu0 0.0
      %2619 = vmatprep.subr.mxu0 0.0
      %2620 = vmatpush1.msra.mxu0 0.0
      %2621 = vmatprep.subr.mxu0 0.0
      %2622 = vmatpush1.msra.mxu0 0.0
      %2623 = vmatprep.mubr.f32.mxu0 0.0
      %v2624 = vand.u32 %v2321, 4294901760
      %v2625 = vsub.f32 %v2321, %v2624
      %v2626 = vand.u32 %v2625, 4294901760
      %2627 = vmatmul.mubr.f32.gmra.mrb[0].mxu0 %v2626
      %v2628 = vpop.f32.mrb[0].mxu0
      %v2629 = vadd.f32 %v2554, %v2628
      %v2630 = vpop.f32.mrb[0].mxu0
      %2631 = vdwg.mxu0
      %2632 = vmatprep.subr.mxu0 0.0
      %v2633 = vand.u32 %v2317, 4294901760
      %v2634 = vsub.f32 %v2317, %v2633
      %v2635 = vand.u32 %v2634, 4294901760
      %2636 = vmatpush1.msra.mxu0 %v2635
      %2637 = vmatprep.subr.mxu0 0.0
      %v2638 = vand.u32 %v2318, 4294901760
      %v2639 = vsub.f32 %v2318, %v2638
      %v2640 = vand.u32 %v2639, 4294901760
      %2641 = vmatpush1.msra.mxu0 %v2640
      %2642 = vmatprep.subr.mxu0 0.0
      %2643 = vmatpush1.msra.mxu0 0.0
      %2644 = vmatprep.subr.mxu0 0.0
      %2645 = vmatpush1.msra.mxu0 0.0
      %2646 = vmatprep.subr.mxu0 0.0
      %2647 = vmatpush1.msra.mxu0 0.0
      %2648 = vmatprep.subr.mxu0 0.0
      %2649 = vmatpush1.msra.mxu0 0.0
      %2650 = vmatprep.subr.mxu0 0.0
      %2651 = vmatpush1.msra.mxu0 0.0
      %2652 = vmatprep.subr.mxu0 0.0
      %2653 = vmatpush1.msra.mxu0 0.0
      %2654 = vmatprep.subr.mxu0 0.0
      %2655 = vmatpush1.msra.mxu0 0.0
      %2656 = vmatprep.subr.mxu0 0.0
      %2657 = vmatpush1.msra.mxu0 0.0
      %2658 = vmatprep.subr.mxu0 0.0
      %2659 = vmatpush1.msra.mxu0 0.0
      %2660 = vmatprep.subr.mxu0 0.0
      %2661 = vmatpush1.msra.mxu0 0.0
      %2662 = vmatprep.subr.mxu0 0.0
      %2663 = vmatpush1.msra.mxu0 0.0
      %2664 = vmatprep.subr.mxu0 0.0
      %2665 = vmatpush1.msra.mxu0 0.0
      %2666 = vmatprep.subr.mxu0 0.0
      %2667 = vmatpush1.msra.mxu0 0.0
      %2668 = vmatprep.subr.mxu0 0.0
      %2669 = vmatpush1.msra.mxu0 0.0
      %2670 = vmatprep.subr.mxu0 0.0
      %2671 = vmatpush1.msra.mxu0 0.0
      %2672 = vmatprep.subr.mxu0 0.0
      %2673 = vmatpush1.msra.mxu0 0.0
      %2674 = vmatprep.subr.mxu0 0.0
      %2675 = vmatpush1.msra.mxu0 0.0
      %2676 = vmatprep.subr.mxu0 0.0
      %2677 = vmatpush1.msra.mxu0 0.0
      %2678 = vmatprep.subr.mxu0 0.0
      %2679 = vmatpush1.msra.mxu0 0.0
      %2680 = vmatprep.subr.mxu0 0.0
      %2681 = vmatpush1.msra.mxu0 0.0
      %2682 = vmatprep.subr.mxu0 0.0
      %2683 = vmatpush1.msra.mxu0 0.0
      %2684 = vmatprep.subr.mxu0 0.0
      %2685 = vmatpush1.msra.mxu0 0.0
      %2686 = vmatprep.subr.mxu0 0.0
      %2687 = vmatpush1.msra.mxu0 0.0
      %2688 = vmatprep.subr.mxu0 0.0
      %2689 = vmatpush1.msra.mxu0 0.0
      %2690 = vmatprep.subr.mxu0 0.0
      %2691 = vmatpush1.msra.mxu0 0.0
      %2692 = vmatprep.subr.mxu0 0.0
      %2693 = vmatpush1.msra.mxu0 0.0
      %2694 = vmatprep.subr.mxu0 0.0
      %2695 = vmatpush1.msra.mxu0 0.0
      %2696 = vmatprep.subr.mxu0 0.0
      %2697 = vmatpush1.msra.mxu0 0.0
      %2698 = vmatprep.subr.mxu0 0.0
      %2699 = vmatpush1.msra.mxu0 0.0
      %2700 = vmatprep.subr.mxu0 0.0
      %2701 = vmatpush1.msra.mxu0 0.0
      %2702 = vmatprep.mubr.f32.mxu0 0.0
      %v2703 = vand.u32 %v2321, 4294901760
      %2704 = vmatmul.mubr.f32.gmra.mrb[0].mxu0 %v2703
      %v2705 = vpop.f32.mrb[0].mxu0
      %v2706 = vadd.f32 %v2629, %v2705
      %v2707 = vpop.f32.mrb[0].mxu0
      %2708 = vdwg.mxu0
      %2709 = vmatprep.subr.mxu0 0.0
      %v2710 = vand.u32 %v2317, 4294901760
      %2711 = vmatpush1.msra.mxu0 %v2710
      %2712 = vmatprep.subr.mxu0 0.0
      %v2713 = vand.u32 %v2318, 4294901760
      %2714 = vmatpush1.msra.mxu0 %v2713
      %2715 = vmatprep.subr.mxu0 0.0
      %2716 = vmatpush1.msra.mxu0 0.0
      %2717 = vmatprep.subr.mxu0 0.0
      %2718 = vmatpush1.msra.mxu0 0.0
      %2719 = vmatprep.subr.mxu0 0.0
      %2720 = vmatpush1.msra.mxu0 0.0
      %2721 = vmatprep.subr.mxu0 0.0
      %2722 = vmatpush1.msra.mxu0 0.0
      %2723 = vmatprep.subr.mxu0 0.0
      %2724 = vmatpush1.msra.mxu0 0.0
      %2725 = vmatprep.subr.mxu0 0.0
      %2726 = vmatpush1.msra.mxu0 0.0
      %2727 = vmatprep.subr.mxu0 0.0
      %2728 = vmatpush1.msra.mxu0 0.0
      %2729 = vmatprep.subr.mxu0 0.0
      %2730 = vmatpush1.msra.mxu0 0.0
      %2731 = vmatprep.subr.mxu0 0.0
      %2732 = vmatpush1.msra.mxu0 0.0
      %2733 = vmatprep.subr.mxu0 0.0
      %2734 = vmatpush1.msra.mxu0 0.0
      %2735 = vmatprep.subr.mxu0 0.0
      %2736 = vmatpush1.msra.mxu0 0.0
      %2737 = vmatprep.subr.mxu0 0.0
      %2738 = vmatpush1.msra.mxu0 0.0
      %2739 = vmatprep.subr.mxu0 0.0
      %2740 = vmatpush1.msra.mxu0 0.0
      %2741 = vmatprep.subr.mxu0 0.0
      %2742 = vmatpush1.msra.mxu0 0.0
      %2743 = vmatprep.subr.mxu0 0.0
      %2744 = vmatpush1.msra.mxu0 0.0
      %2745 = vmatprep.subr.mxu0 0.0
      %2746 = vmatpush1.msra.mxu0 0.0
      %2747 = vmatprep.subr.mxu0 0.0
      %2748 = vmatpush1.msra.mxu0 0.0
      %2749 = vmatprep.subr.mxu0 0.0
      %2750 = vmatpush1.msra.mxu0 0.0
      %2751 = vmatprep.subr.mxu0 0.0
      %2752 = vmatpush1.msra.mxu0 0.0
      %2753 = vmatprep.subr.mxu0 0.0
      %2754 = vmatpush1.msra.mxu0 0.0
      %2755 = vmatprep.subr.mxu0 0.0
      %2756 = vmatpush1.msra.mxu0 0.0
      %2757 = vmatprep.subr.mxu0 0.0
      %2758 = vmatpush1.msra.mxu0 0.0
      %2759 = vmatprep.subr.mxu0 0.0
      %2760 = vmatpush1.msra.mxu0 0.0
      %2761 = vmatprep.subr.mxu0 0.0
      %2762 = vmatpush1.msra.mxu0 0.0
      %2763 = vmatprep.subr.mxu0 0.0
      %2764 = vmatpush1.msra.mxu0 0.0
      %2765 = vmatprep.subr.mxu0 0.0
      %2766 = vmatpush1.msra.mxu0 0.0
      %2767 = vmatprep.subr.mxu0 0.0
      %2768 = vmatpush1.msra.mxu0 0.0
      %2769 = vmatprep.subr.mxu0 0.0
      %2770 = vmatpush1.msra.mxu0 0.0
      %2771 = vmatprep.subr.mxu0 0.0
      %2772 = vmatpush1.msra.mxu0 0.0
      %2773 = vmatprep.subr.mxu0 0.0
      %2774 = vmatpush1.msra.mxu0 0.0
      %2775 = vmatprep.mubr.f32.mxu0 0.0
      %v2776 = vand.u32 %v2321, 4294901760
      %2777 = vmatmul.mubr.f32.gmra.mrb[0].mxu0 %v2776
      %v2778 = vpop.f32.mrb[0].mxu0
      %v2779 = vadd.f32 %v2706, %v2778
      %v2780 = vpop.f32.mrb[0].mxu0
      %2781 = vdwg.mxu0
      %v2782 = vld [vmem:[%s6] sm:$0xff]
      %v2783 = vld [vmem:[%s6 + $0x8] sm:$0xff]
      %v2784 = vld [vmem:[%s6 + $0x10] sm:$0xff]
      %v2785 = vld [vmem:[%s6 + $0x18] sm:$0xff]
      %v2786 = vld [vmem:[%s6 + $0x20] sm:$0xff]
      %v2787 = vld [vmem:[%s6 + $0x28] sm:$0xff]
      %v2788 = vld [vmem:[%s6 + $0x30] sm:$0xff]
      %v2789 = vld [vmem:[%s6 + $0x38] sm:$0xff]
      %v2790 = vld [vmem:[%s6 + $0x40] sm:$0xff]
      %v2791 = vld [vmem:[%s6 + $0x48] sm:$0xff]
      %v2792 = vld [vmem:[%s6 + $0x50] sm:$0xff]
      %v2793 = vld [vmem:[%s6 + $0x58] sm:$0xff]
      %v2794 = vld [vmem:[%s6 + $0x60] sm:$0xff]
      %v2795 = vld [vmem:[%s6 + $0x68] sm:$0xff]
      %v2796 = vld [vmem:[%s6 + $0x70] sm:$0xff]
      %v2797 = vld [vmem:[%s6 + $0x78] sm:$0xff]
      %v2801 = vrot.slane %v304, 1
      %v2802 = vrot.slane %v305, 1
      %v2803 = vsel %vm371, %v2801, %v2802
      %v2804 = vrot.slane %v306, 1
      %v2805 = vsel %vm371, %v2802, %v2804
      %2806 = vrot.lane.b32.xlu0 %v2803, 124
      %v2807 = vpop.permute.xlu0 %2806
      %2808 = vrot.lane.b32.xlu0 %v2805, 124
      %v2809 = vpop.permute.xlu0 %2808
      %2812 = vmatprep.subr.mxu0 0.0
      %v2813 = vand.u32 %v2807, 4294901760
      %2814 = vmatpush1.msra.mxu0 %v2813
      %2815 = vmatprep.subr.mxu0 0.0
      %v2816 = vand.u32 %v2809, 4294901760
      %2817 = vmatpush1.msra.mxu0 %v2816
      %2818 = vmatprep.subr.mxu0 0.0
      %2819 = vmatpush1.msra.mxu0 0.0
      %2820 = vmatprep.subr.mxu0 0.0
      %2821 = vmatpush1.msra.mxu0 0.0
      %2822 = vmatprep.subr.mxu0 0.0
      %2823 = vmatpush1.msra.mxu0 0.0
      %2824 = vmatprep.subr.mxu0 0.0
      %2825 = vmatpush1.msra.mxu0 0.0
      %2826 = vmatprep.subr.mxu0 0.0
      %2827 = vmatpush1.msra.mxu0 0.0
      %2828 = vmatprep.subr.mxu0 0.0
      %2829 = vmatpush1.msra.mxu0 0.0
      %2830 = vmatprep.subr.mxu0 0.0
      %2831 = vmatpush1.msra.mxu0 0.0
      %2832 = vmatprep.subr.mxu0 0.0
      %2833 = vmatpush1.msra.mxu0 0.0
      %2834 = vmatprep.subr.mxu0 0.0
      %2835 = vmatpush1.msra.mxu0 0.0
      %2836 = vmatprep.subr.mxu0 0.0
      %2837 = vmatpush1.msra.mxu0 0.0
      %2838 = vmatprep.subr.mxu0 0.0
      %2839 = vmatpush1.msra.mxu0 0.0
      %2840 = vmatprep.subr.mxu0 0.0
      %2841 = vmatpush1.msra.mxu0 0.0
      %2842 = vmatprep.subr.mxu0 0.0
      %2843 = vmatpush1.msra.mxu0 0.0
      %2844 = vmatprep.subr.mxu0 0.0
      %2845 = vmatpush1.msra.mxu0 0.0
      %2846 = vmatprep.subr.mxu0 0.0
      %2847 = vmatpush1.msra.mxu0 0.0
      %2848 = vmatprep.subr.mxu0 0.0
      %2849 = vmatpush1.msra.mxu0 0.0
      %2850 = vmatprep.subr.mxu0 0.0
      %2851 = vmatpush1.msra.mxu0 0.0
      %2852 = vmatprep.subr.mxu0 0.0
      %2853 = vmatpush1.msra.mxu0 0.0
      %2854 = vmatprep.subr.mxu0 0.0
      %2855 = vmatpush1.msra.mxu0 0.0
      %2856 = vmatprep.subr.mxu0 0.0
      %2857 = vmatpush1.msra.mxu0 0.0
      %2858 = vmatprep.subr.mxu0 0.0
      %2859 = vmatpush1.msra.mxu0 0.0
      %2860 = vmatprep.subr.mxu0 0.0
      %2861 = vmatpush1.msra.mxu0 0.0
      %2862 = vmatprep.subr.mxu0 0.0
      %2863 = vmatpush1.msra.mxu0 0.0
      %2864 = vmatprep.subr.mxu0 0.0
      %2865 = vmatpush1.msra.mxu0 0.0
      %2866 = vmatprep.subr.mxu0 0.0
      %2867 = vmatpush1.msra.mxu0 0.0
      %2868 = vmatprep.subr.mxu0 0.0
      %2869 = vmatpush1.msra.mxu0 0.0
      %2870 = vmatprep.subr.mxu0 0.0
      %2871 = vmatpush1.msra.mxu0 0.0
      %2872 = vmatprep.subr.mxu0 0.0
      %2873 = vmatpush1.msra.mxu0 0.0
      %2874 = vmatprep.subr.mxu0 0.0
      %2875 = vmatpush1.msra.mxu0 0.0
      %2876 = vmatprep.subr.mxu0 0.0
      %2877 = vmatpush1.msra.mxu0 0.0
      %2878 = vmatprep.mubr.f32.mxu0 0.0
      %v2879 = vand.u32 %v2321, 4294901760
      %v2880 = vsub.f32 %v2321, %v2879
      %v2881 = vand.u32 %v2880, 4294901760
      %v2882 = vsub.f32 %v2880, %v2881
      %v2883 = vand.u32 %v2882, 4294901760
      %2884 = vmatmul.mubr.f32.gmra.mrb[0].mxu0 %v2883
      %v2885 = vpop.f32.mrb[0].mxu0
      %v2886 = vadd.f32 0.0, %v2885
      %v2887 = vpop.f32.mrb[0].mxu0
      %2888 = vdwg.mxu0
      %2889 = vmatprep.subr.mxu0 0.0
      %v2890 = vand.u32 %v2807, 4294901760
      %v2891 = vsub.f32 %v2807, %v2890
      %v2892 = vand.u32 %v2891, 4294901760
      %v2893 = vsub.f32 %v2891, %v2892
      %v2894 = vand.u32 %v2893, 4294901760
      %2895 = vmatpush1.msra.mxu0 %v2894
      %2896 = vmatprep.subr.mxu0 0.0
      %v2897 = vand.u32 %v2809, 4294901760
      %v2898 = vsub.f32 %v2809, %v2897
      %v2899 = vand.u32 %v2898, 4294901760
      %v2900 = vsub.f32 %v2898, %v2899
      %v2901 = vand.u32 %v2900, 4294901760
      %2902 = vmatpush1.msra.mxu0 %v2901
      %2903 = vmatprep.subr.mxu0 0.0
      %2904 = vmatpush1.msra.mxu0 0.0
      %2905 = vmatprep.subr.mxu0 0.0
      %2906 = vmatpush1.msra.mxu0 0.0
      %2907 = vmatprep.subr.mxu0 0.0
      %2908 = vmatpush1.msra.mxu0 0.0
      %2909 = vmatprep.subr.mxu0 0.0
      %2910 = vmatpush1.msra.mxu0 0.0
      %2911 = vmatprep.subr.mxu0 0.0
      %2912 = vmatpush1.msra.mxu0 0.0
      %2913 = vmatprep.subr.mxu0 0.0
      %2914 = vmatpush1.msra.mxu0 0.0
      %2915 = vmatprep.subr.mxu0 0.0
      %2916 = vmatpush1.msra.mxu0 0.0
      %2917 = vmatprep.subr.mxu0 0.0
      %2918 = vmatpush1.msra.mxu0 0.0
      %2919 = vmatprep.subr.mxu0 0.0
      %2920 = vmatpush1.msra.mxu0 0.0
      %2921 = vmatprep.subr.mxu0 0.0
      %2922 = vmatpush1.msra.mxu0 0.0
      %2923 = vmatprep.subr.mxu0 0.0
      %2924 = vmatpush1.msra.mxu0 0.0
      %2925 = vmatprep.subr.mxu0 0.0
      %2926 = vmatpush1.msra.mxu0 0.0
      %2927 = vmatprep.subr.mxu0 0.0
      %2928 = vmatpush1.msra.mxu0 0.0
      %2929 = vmatprep.subr.mxu0 0.0
      %2930 = vmatpush1.msra.mxu0 0.0
      %2931 = vmatprep.subr.mxu0 0.0
      %2932 = vmatpush1.msra.mxu0 0.0
      %2933 = vmatprep.subr.mxu0 0.0
      %2934 = vmatpush1.msra.mxu0 0.0
      %2935 = vmatprep.subr.mxu0 0.0
      %2936 = vmatpush1.msra.mxu0 0.0
      %2937 = vmatprep.subr.mxu0 0.0
      %2938 = vmatpush1.msra.mxu0 0.0
      %2939 = vmatprep.subr.mxu0 0.0
      %2940 = vmatpush1.msra.mxu0 0.0
      %2941 = vmatprep.subr.mxu0 0.0
      %2942 = vmatpush1.msra.mxu0 0.0
      %2943 = vmatprep.subr.mxu0 0.0
      %2944 = vmatpush1.msra.mxu0 0.0
      %2945 = vmatprep.subr.mxu0 0.0
      %2946 = vmatpush1.msra.mxu0 0.0
      %2947 = vmatprep.subr.mxu0 0.0
      %2948 = vmatpush1.msra.mxu0 0.0
      %2949 = vmatprep.subr.mxu0 0.0
      %2950 = vmatpush1.msra.mxu0 0.0
      %2951 = vmatprep.subr.mxu0 0.0
      %2952 = vmatpush1.msra.mxu0 0.0
      %2953 = vmatprep.subr.mxu0 0.0
      %2954 = vmatpush1.msra.mxu0 0.0
      %2955 = vmatprep.subr.mxu0 0.0
      %2956 = vmatpush1.msra.mxu0 0.0
      %2957 = vmatprep.subr.mxu0 0.0
      %2958 = vmatpush1.msra.mxu0 0.0
      %2959 = vmatprep.subr.mxu0 0.0
      %2960 = vmatpush1.msra.mxu0 0.0
      %2961 = vmatprep.subr.mxu0 0.0
      %2962 = vmatpush1.msra.mxu0 0.0
      %2963 = vmatprep.mubr.f32.mxu0 0.0
      %v2964 = vand.u32 %v2321, 4294901760
      %2965 = vmatmul.mubr.f32.gmra.mrb[0].mxu0 %v2964
      %v2966 = vpop.f32.mrb[0].mxu0
      %v2967 = vadd.f32 %v2886, %v2966
      %v2968 = vpop.f32.mrb[0].mxu0
      %2969 = vdwg.mxu0
      %2970 = vmatprep.subr.mxu0 0.0
      %v2971 = vand.u32 %v2807, 4294901760
      %v2972 = vsub.f32 %v2807, %v2971
      %2973 = vmatpush1.msra.mxu0 %v2972
      %2974 = vmatprep.subr.mxu0 0.0
      %v2975 = vand.u32 %v2809, 4294901760
      %v2976 = vsub.f32 %v2809, %v2975
      %2977 = vmatpush1.msra.mxu0 %v2976
      %2978 = vmatprep.subr.mxu0 0.0
      %2979 = vmatpush1.msra.mxu0 0.0
      %2980 = vmatprep.subr.mxu0 0.0
      %2981 = vmatpush1.msra.mxu0 0.0
      %2982 = vmatprep.subr.mxu0 0.0
      %2983 = vmatpush1.msra.mxu0 0.0
      %2984 = vmatprep.subr.mxu0 0.0
      %2985 = vmatpush1.msra.mxu0 0.0
      %2986 = vmatprep.subr.mxu0 0.0
      %2987 = vmatpush1.msra.mxu0 0.0
      %2988 = vmatprep.subr.mxu0 0.0
      %2989 = vmatpush1.msra.mxu0 0.0
      %2990 = vmatprep.subr.mxu0 0.0
      %2991 = vmatpush1.msra.mxu0 0.0
      %2992 = vmatprep.subr.mxu0 0.0
      %2993 = vmatpush1.msra.mxu0 0.0
      %2994 = vmatprep.subr.mxu0 0.0
      %2995 = vmatpush1.msra.mxu0 0.0
      %2996 = vmatprep.subr.mxu0 0.0
      %2997 = vmatpush1.msra.mxu0 0.0
      %2998 = vmatprep.subr.mxu0 0.0
      %2999 = vmatpush1.msra.mxu0 0.0
      %3000 = vmatprep.subr.mxu0 0.0
      %3001 = vmatpush1.msra.mxu0 0.0
      %3002 = vmatprep.subr.mxu0 0.0
      %3003 = vmatpush1.msra.mxu0 0.0
      %3004 = vmatprep.subr.mxu0 0.0
      %3005 = vmatpush1.msra.mxu0 0.0
      %3006 = vmatprep.subr.mxu0 0.0
      %3007 = vmatpush1.msra.mxu0 0.0
      %3008 = vmatprep.subr.mxu0 0.0
      %3009 = vmatpush1.msra.mxu0 0.0
      %3010 = vmatprep.subr.mxu0 0.0
      %3011 = vmatpush1.msra.mxu0 0.0
      %3012 = vmatprep.subr.mxu0 0.0
      %3013 = vmatpush1.msra.mxu0 0.0
      %3014 = vmatprep.subr.mxu0 0.0
      %3015 = vmatpush1.msra.mxu0 0.0
      %3016 = vmatprep.subr.mxu0 0.0
      %3017 = vmatpush1.msra.mxu0 0.0
      %3018 = vmatprep.subr.mxu0 0.0
      %3019 = vmatpush1.msra.mxu0 0.0
      %3020 = vmatprep.subr.mxu0 0.0
      %3021 = vmatpush1.msra.mxu0 0.0
      %3022 = vmatprep.subr.mxu0 0.0
      %3023 = vmatpush1.msra.mxu0 0.0
      %3024 = vmatprep.subr.mxu0 0.0
      %3025 = vmatpush1.msra.mxu0 0.0
      %3026 = vmatprep.subr.mxu0 0.0
      %3027 = vmatpush1.msra.mxu0 0.0
      %3028 = vmatprep.subr.mxu0 0.0
      %3029 = vmatpush1.msra.mxu0 0.0
      %3030 = vmatprep.subr.mxu0 0.0
      %3031 = vmatpush1.msra.mxu0 0.0
      %3032 = vmatprep.subr.mxu0 0.0
      %3033 = vmatpush1.msra.mxu0 0.0
      %3034 = vmatprep.subr.mxu0 0.0
      %3035 = vmatpush1.msra.mxu0 0.0
      %3036 = vmatprep.subr.mxu0 0.0
      %3037 = vmatpush1.msra.mxu0 0.0
      %3038 = vmatprep.mubr.f32.mxu0 0.0
      %v3039 = vand.u32 %v2321, 4294901760
      %v3040 = vsub.f32 %v2321, %v3039
      %3041 = vmatmul.mubr.f32.gmra.mrb[0].mxu0 %v3040
      %v3042 = vpop.f32.mrb[0].mxu0
      %v3043 = vadd.f32 %v2967, %v3042
      %v3044 = vpop.f32.mrb[0].mxu0
      %3045 = vdwg.mxu0
      %3046 = vmatprep.subr.mxu0 0.0
      %v3047 = vand.u32 %v2807, 4294901760
      %3048 = vmatpush1.msra.mxu0 %v3047
      %3049 = vmatprep.subr.mxu0 0.0
      %v3050 = vand.u32 %v2809, 4294901760
      %3051 = vmatpush1.msra.mxu0 %v3050
      %3052 = vmatprep.subr.mxu0 0.0
      %3053 = vmatpush1.msra.mxu0 0.0
      %3054 = vmatprep.subr.mxu0 0.0
      %3055 = vmatpush1.msra.mxu0 0.0
      %3056 = vmatprep.subr.mxu0 0.0
      %3057 = vmatpush1.msra.mxu0 0.0
      %3058 = vmatprep.subr.mxu0 0.0
      %3059 = vmatpush1.msra.mxu0 0.0
      %3060 = vmatprep.subr.mxu0 0.0
      %3061 = vmatpush1.msra.mxu0 0.0
      %3062 = vmatprep.subr.mxu0 0.0
      %3063 = vmatpush1.msra.mxu0 0.0
      %3064 = vmatprep.subr.mxu0 0.0
      %3065 = vmatpush1.msra.mxu0 0.0
      %3066 = vmatprep.subr.mxu0 0.0
      %3067 = vmatpush1.msra.mxu0 0.0
      %3068 = vmatprep.subr.mxu0 0.0
      %3069 = vmatpush1.msra.mxu0 0.0
      %3070 = vmatprep.subr.mxu0 0.0
      %3071 = vmatpush1.msra.mxu0 0.0
      %3072 = vmatprep.subr.mxu0 0.0
      %3073 = vmatpush1.msra.mxu0 0.0
      %3074 = vmatprep.subr.mxu0 0.0
      %3075 = vmatpush1.msra.mxu0 0.0
      %3076 = vmatprep.subr.mxu0 0.0
      %3077 = vmatpush1.msra.mxu0 0.0
      %3078 = vmatprep.subr.mxu0 0.0
      %3079 = vmatpush1.msra.mxu0 0.0
      %3080 = vmatprep.subr.mxu0 0.0
      %3081 = vmatpush1.msra.mxu0 0.0
      %3082 = vmatprep.subr.mxu0 0.0
      %3083 = vmatpush1.msra.mxu0 0.0
      %3084 = vmatprep.subr.mxu0 0.0
      %3085 = vmatpush1.msra.mxu0 0.0
      %3086 = vmatprep.subr.mxu0 0.0
      %3087 = vmatpush1.msra.mxu0 0.0
      %3088 = vmatprep.subr.mxu0 0.0
      %3089 = vmatpush1.msra.mxu0 0.0
      %3090 = vmatprep.subr.mxu0 0.0
      %3091 = vmatpush1.msra.mxu0 0.0
      %3092 = vmatprep.subr.mxu0 0.0
      %3093 = vmatpush1.msra.mxu0 0.0
      %3094 = vmatprep.subr.mxu0 0.0
      %3095 = vmatpush1.msra.mxu0 0.0
      %3096 = vmatprep.subr.mxu0 0.0
      %3097 = vmatpush1.msra.mxu0 0.0
      %3098 = vmatprep.subr.mxu0 0.0
      %3099 = vmatpush1.msra.mxu0 0.0
      %3100 = vmatprep.subr.mxu0 0.0
      %3101 = vmatpush1.msra.mxu0 0.0
      %3102 = vmatprep.subr.mxu0 0.0
      %3103 = vmatpush1.msra.mxu0 0.0
      %3104 = vmatprep.subr.mxu0 0.0
      %3105 = vmatpush1.msra.mxu0 0.0
      %3106 = vmatprep.subr.mxu0 0.0
      %3107 = vmatpush1.msra.mxu0 0.0
      %3108 = vmatprep.subr.mxu0 0.0
      %3109 = vmatpush1.msra.mxu0 0.0
      %3110 = vmatprep.subr.mxu0 0.0
      %3111 = vmatpush1.msra.mxu0 0.0
      %3112 = vmatprep.mubr.f32.mxu0 0.0
      %v3113 = vand.u32 %v2321, 4294901760
      %v3114 = vsub.f32 %v2321, %v3113
      %v3115 = vand.u32 %v3114, 4294901760
      %3116 = vmatmul.mubr.f32.gmra.mrb[0].mxu0 %v3115
      %v3117 = vpop.f32.mrb[0].mxu0
      %v3118 = vadd.f32 %v3043, %v3117
      %v3119 = vpop.f32.mrb[0].mxu0
      %3120 = vdwg.mxu0
      %3121 = vmatprep.subr.mxu0 0.0
      %v3122 = vand.u32 %v2807, 4294901760
      %v3123 = vsub.f32 %v2807, %v3122
      %v3124 = vand.u32 %v3123, 4294901760
      %3125 = vmatpush1.msra.mxu0 %v3124
      %3126 = vmatprep.subr.mxu0 0.0
      %v3127 = vand.u32 %v2809, 4294901760
      %v3128 = vsub.f32 %v2809, %v3127
      %v3129 = vand.u32 %v3128, 4294901760
      %3130 = vmatpush1.msra.mxu0 %v3129
      %3131 = vmatprep.subr.mxu0 0.0
      %3132 = vmatpush1.msra.mxu0 0.0
      %3133 = vmatprep.subr.mxu0 0.0
      %3134 = vmatpush1.msra.mxu0 0.0
      %3135 = vmatprep.subr.mxu0 0.0
      %3136 = vmatpush1.msra.mxu0 0.0
      %3137 = vmatprep.subr.mxu0 0.0
      %3138 = vmatpush1.msra.mxu0 0.0
      %3139 = vmatprep.subr.mxu0 0.0
      %3140 = vmatpush1.msra.mxu0 0.0
      %3141 = vmatprep.subr.mxu0 0.0
      %3142 = vmatpush1.msra.mxu0 0.0
      %3143 = vmatprep.subr.mxu0 0.0
      %3144 = vmatpush1.msra.mxu0 0.0
      %3145 = vmatprep.subr.mxu0 0.0
      %3146 = vmatpush1.msra.mxu0 0.0
      %3147 = vmatprep.subr.mxu0 0.0
      %3148 = vmatpush1.msra.mxu0 0.0
      %3149 = vmatprep.subr.mxu0 0.0
      %3150 = vmatpush1.msra.mxu0 0.0
      %3151 = vmatprep.subr.mxu0 0.0
      %3152 = vmatpush1.msra.mxu0 0.0
      %3153 = vmatprep.subr.mxu0 0.0
      %3154 = vmatpush1.msra.mxu0 0.0
      %3155 = vmatprep.subr.mxu0 0.0
      %3156 = vmatpush1.msra.mxu0 0.0
      %3157 = vmatprep.subr.mxu0 0.0
      %3158 = vmatpush1.msra.mxu0 0.0
      %3159 = vmatprep.subr.mxu0 0.0
      %3160 = vmatpush1.msra.mxu0 0.0
      %3161 = vmatprep.subr.mxu0 0.0
      %3162 = vmatpush1.msra.mxu0 0.0
      %3163 = vmatprep.subr.mxu0 0.0
      %3164 = vmatpush1.msra.mxu0 0.0
      %3165 = vmatprep.subr.mxu0 0.0
      %3166 = vmatpush1.msra.mxu0 0.0
      %3167 = vmatprep.subr.mxu0 0.0
      %3168 = vmatpush1.msra.mxu0 0.0
      %3169 = vmatprep.subr.mxu0 0.0
      %3170 = vmatpush1.msra.mxu0 0.0
      %3171 = vmatprep.subr.mxu0 0.0
      %3172 = vmatpush1.msra.mxu0 0.0
      %3173 = vmatprep.subr.mxu0 0.0
      %3174 = vmatpush1.msra.mxu0 0.0
      %3175 = vmatprep.subr.mxu0 0.0
      %3176 = vmatpush1.msra.mxu0 0.0
      %3177 = vmatprep.subr.mxu0 0.0
      %3178 = vmatpush1.msra.mxu0 0.0
      %3179 = vmatprep.subr.mxu0 0.0
      %3180 = vmatpush1.msra.mxu0 0.0
      %3181 = vmatprep.subr.mxu0 0.0
      %3182 = vmatpush1.msra.mxu0 0.0
      %3183 = vmatprep.subr.mxu0 0.0
      %3184 = vmatpush1.msra.mxu0 0.0
      %3185 = vmatprep.subr.mxu0 0.0
      %3186 = vmatpush1.msra.mxu0 0.0
      %3187 = vmatprep.subr.mxu0 0.0
      %3188 = vmatpush1.msra.mxu0 0.0
      %3189 = vmatprep.subr.mxu0 0.0
      %3190 = vmatpush1.msra.mxu0 0.0
      %3191 = vmatprep.mubr.f32.mxu0 0.0
      %v3192 = vand.u32 %v2321, 4294901760
      %3193 = vmatmul.mubr.f32.gmra.mrb[0].mxu0 %v3192
      %v3194 = vpop.f32.mrb[0].mxu0
      %v3195 = vadd.f32 %v3118, %v3194
      %v3196 = vpop.f32.mrb[0].mxu0
      %3197 = vdwg.mxu0
      %3198 = vmatprep.subr.mxu0 0.0
      %v3199 = vand.u32 %v2807, 4294901760
      %3200 = vmatpush1.msra.mxu0 %v3199
      %3201 = vmatprep.subr.mxu0 0.0
      %v3202 = vand.u32 %v2809, 4294901760
      %3203 = vmatpush1.msra.mxu0 %v3202
      %3204 = vmatprep.subr.mxu0 0.0
      %3205 = vmatpush1.msra.mxu0 0.0
      %3206 = vmatprep.subr.mxu0 0.0
      %3207 = vmatpush1.msra.mxu0 0.0
      %3208 = vmatprep.subr.mxu0 0.0
      %3209 = vmatpush1.msra.mxu0 0.0
      %3210 = vmatprep.subr.mxu0 0.0
      %3211 = vmatpush1.msra.mxu0 0.0
      %3212 = vmatprep.subr.mxu0 0.0
      %3213 = vmatpush1.msra.mxu0 0.0
      %3214 = vmatprep.subr.mxu0 0.0
      %3215 = vmatpush1.msra.mxu0 0.0
      %3216 = vmatprep.subr.mxu0 0.0
      %3217 = vmatpush1.msra.mxu0 0.0
      %3218 = vmatprep.subr.mxu0 0.0
      %3219 = vmatpush1.msra.mxu0 0.0
      %3220 = vmatprep.subr.mxu0 0.0
      %3221 = vmatpush1.msra.mxu0 0.0
      %3222 = vmatprep.subr.mxu0 0.0
      %3223 = vmatpush1.msra.mxu0 0.0
      %3224 = vmatprep.subr.mxu0 0.0
      %3225 = vmatpush1.msra.mxu0 0.0
      %3226 = vmatprep.subr.mxu0 0.0
      %3227 = vmatpush1.msra.mxu0 0.0
      %3228 = vmatprep.subr.mxu0 0.0
      %3229 = vmatpush1.msra.mxu0 0.0
      %3230 = vmatprep.subr.mxu0 0.0
      %3231 = vmatpush1.msra.mxu0 0.0
      %3232 = vmatprep.subr.mxu0 0.0
      %3233 = vmatpush1.msra.mxu0 0.0
      %3234 = vmatprep.subr.mxu0 0.0
      %3235 = vmatpush1.msra.mxu0 0.0
      %3236 = vmatprep.subr.mxu0 0.0
      %3237 = vmatpush1.msra.mxu0 0.0
      %3238 = vmatprep.subr.mxu0 0.0
      %3239 = vmatpush1.msra.mxu0 0.0
      %3240 = vmatprep.subr.mxu0 0.0
      %3241 = vmatpush1.msra.mxu0 0.0
      %3242 = vmatprep.subr.mxu0 0.0
      %3243 = vmatpush1.msra.mxu0 0.0
      %3244 = vmatprep.subr.mxu0 0.0
      %3245 = vmatpush1.msra.mxu0 0.0
      %3246 = vmatprep.subr.mxu0 0.0
      %3247 = vmatpush1.msra.mxu0 0.0
      %3248 = vmatprep.subr.mxu0 0.0
      %3249 = vmatpush1.msra.mxu0 0.0
      %3250 = vmatprep.subr.mxu0 0.0
      %3251 = vmatpush1.msra.mxu0 0.0
      %3252 = vmatprep.subr.mxu0 0.0
      %3253 = vmatpush1.msra.mxu0 0.0
      %3254 = vmatprep.subr.mxu0 0.0
      %3255 = vmatpush1.msra.mxu0 0.0
      %3256 = vmatprep.subr.mxu0 0.0
      %3257 = vmatpush1.msra.mxu0 0.0
      %3258 = vmatprep.subr.mxu0 0.0
      %3259 = vmatpush1.msra.mxu0 0.0
      %3260 = vmatprep.subr.mxu0 0.0
      %3261 = vmatpush1.msra.mxu0 0.0
      %3262 = vmatprep.subr.mxu0 0.0
      %3263 = vmatpush1.msra.mxu0 0.0
      %3264 = vmatprep.mubr.f32.mxu0 0.0
      %v3265 = vand.u32 %v2321, 4294901760
      %3266 = vmatmul.mubr.f32.gmra.mrb[0].mxu0 %v3265
      %v3267 = vpop.f32.mrb[0].mxu0
      %v3268 = vadd.f32 %v3195, %v3267
      %v3269 = vpop.f32.mrb[0].mxu0
      %3270 = vdwg.mxu0
      %v3271 = vld [vmem:[%s7] sm:$0xff]
      %v3272 = vld [vmem:[%s7 + $0x8] sm:$0xff]
      %v3273 = vld [vmem:[%s7 + $0x10] sm:$0xff]
      %v3274 = vld [vmem:[%s7 + $0x18] sm:$0xff]
      %v3275 = vld [vmem:[%s7 + $0x20] sm:$0xff]
      %v3276 = vld [vmem:[%s7 + $0x28] sm:$0xff]
      %v3277 = vld [vmem:[%s7 + $0x30] sm:$0xff]
      %v3278 = vld [vmem:[%s7 + $0x38] sm:$0xff]
      %v3279 = vlaneseq
      %v3280 = vshrl.u32 %v3279, 7
      %v3281 = vsub.s32 2, %v3280
      %v3282 = vrot.slane %v310, %v3281
      %v3284 = vsel %vm521, %v3268, 0
      %3286 = vmatprep.subr.mxu0 0.0
      %v3287 = vand.u32 %v3271, 4294901760
      %3288 = vmatpush1.msra.mxu0 %v3287
      %3289 = vmatprep.subr.mxu0 0.0
      %v3290 = vand.u32 %v3272, 4294901760
      %3291 = vmatpush1.msra.mxu0 %v3290
      %3292 = vmatprep.subr.mxu0 0.0
      %v3293 = vand.u32 %v3273, 4294901760
      %3294 = vmatpush1.msra.mxu0 %v3293
      %3295 = vmatprep.subr.mxu0 0.0
      %v3296 = vand.u32 %v3274, 4294901760
      %3297 = vmatpush1.msra.mxu0 %v3296
      %3298 = vmatprep.subr.mxu0 0.0
      %v3299 = vand.u32 %v3275, 4294901760
      %3300 = vmatpush1.msra.mxu0 %v3299
      %3301 = vmatprep.subr.mxu0 0.0
      %v3302 = vand.u32 %v3276, 4294901760
      %3303 = vmatpush1.msra.mxu0 %v3302
      %3304 = vmatprep.subr.mxu0 0.0
      %v3305 = vand.u32 %v3277, 4294901760
      %3306 = vmatpush1.msra.mxu0 %v3305
      %3307 = vmatprep.subr.mxu0 0.0
      %v3308 = vand.u32 %v3278, 4294901760
      %3309 = vmatpush1.msra.mxu0 %v3308
      %3310 = vmatprep.subr.mxu0 0.0
      %3311 = vmatpush1.msra.mxu0 0.0
      %3312 = vmatprep.subr.mxu0 0.0
      %3313 = vmatpush1.msra.mxu0 0.0
      %3314 = vmatprep.subr.mxu0 0.0
      %3315 = vmatpush1.msra.mxu0 0.0
      %3316 = vmatprep.subr.mxu0 0.0
      %3317 = vmatpush1.msra.mxu0 0.0
      %3318 = vmatprep.subr.mxu0 0.0
      %3319 = vmatpush1.msra.mxu0 0.0
      %3320 = vmatprep.subr.mxu0 0.0
      %3321 = vmatpush1.msra.mxu0 0.0
      %3322 = vmatprep.subr.mxu0 0.0
      %3323 = vmatpush1.msra.mxu0 0.0
      %3324 = vmatprep.subr.mxu0 0.0
      %3325 = vmatpush1.msra.mxu0 0.0
      %3326 = vmatprep.subr.mxu0 0.0
      %3327 = vmatpush1.msra.mxu0 0.0
      %3328 = vmatprep.subr.mxu0 0.0
      %3329 = vmatpush1.msra.mxu0 0.0
      %3330 = vmatprep.subr.mxu0 0.0
      %3331 = vmatpush1.msra.mxu0 0.0
      %3332 = vmatprep.subr.mxu0 0.0
      %3333 = vmatpush1.msra.mxu0 0.0
      %3334 = vmatprep.subr.mxu0 0.0
      %3335 = vmatpush1.msra.mxu0 0.0
      %3336 = vmatprep.subr.mxu0 0.0
      %3337 = vmatpush1.msra.mxu0 0.0
      %3338 = vmatprep.subr.mxu0 0.0
      %3339 = vmatpush1.msra.mxu0 0.0
      %3340 = vmatprep.subr.mxu0 0.0
      %3341 = vmatpush1.msra.mxu0 0.0
      %3342 = vmatprep.subr.mxu0 0.0
      %3343 = vmatpush1.msra.mxu0 0.0
      %3344 = vmatprep.subr.mxu0 0.0
      %3345 = vmatpush1.msra.mxu0 0.0
      %3346 = vmatprep.subr.mxu0 0.0
      %3347 = vmatpush1.msra.mxu0 0.0
      %3348 = vmatprep.subr.mxu0 0.0
      %3349 = vmatpush1.msra.mxu0 0.0
      %3350 = vmatprep.subr.mxu0 0.0
      %3351 = vmatpush1.msra.mxu0 0.0
      %3352 = vmatprep.subr.mxu0 0.0
      %3353 = vmatpush1.msra.mxu0 0.0
      %3354 = vmatprep.subr.mxu0 0.0
      %3355 = vmatpush1.msra.mxu0 0.0
      %3356 = vmatprep.subr.mxu0 0.0
      %3357 = vmatpush1.msra.mxu0 0.0
      %3358 = vmatprep.mubr.f32.mxu0 0.0
      %v3359 = vand.u32 %v3284, 4294901760
      %v3360 = vsub.f32 %v3284, %v3359
      %v3361 = vand.u32 %v3360, 4294901760
      %v3362 = vsub.f32 %v3360, %v3361
      %v3363 = vand.u32 %v3362, 4294901760
      %3364 = vmatmul.mubr.f32.gmra.mrb[0].mxu0 %v3363
      %v3365 = vpop.f32.mrb[0].mxu0
      %v3366 = vadd.f32 %v3282, %v3365
      %v3367 = vpop.f32.mrb[0].mxu0
      %3368 = vdwg.mxu0
      %3369 = vmatprep.subr.mxu0 0.0
      %v3370 = vand.u32 %v3271, 4294901760
      %v3371 = vsub.f32 %v3271, %v3370
      %v3372 = vand.u32 %v3371, 4294901760
      %v3373 = vsub.f32 %v3371, %v3372
      %v3374 = vand.u32 %v3373, 4294901760
      %3375 = vmatpush1.msra.mxu0 %v3374
      %3376 = vmatprep.subr.mxu0 0.0
      %v3377 = vand.u32 %v3272, 4294901760
      %v3378 = vsub.f32 %v3272, %v3377
      %v3379 = vand.u32 %v3378, 4294901760
      %v3380 = vsub.f32 %v3378, %v3379
      %v3381 = vand.u32 %v3380, 4294901760
      %3382 = vmatpush1.msra.mxu0 %v3381
      %3383 = vmatprep.subr.mxu0 0.0
      %v3384 = vand.u32 %v3273, 4294901760
      %v3385 = vsub.f32 %v3273, %v3384
      %v3386 = vand.u32 %v3385, 4294901760
      %v3387 = vsub.f32 %v3385, %v3386
      %v3388 = vand.u32 %v3387, 4294901760
      %3389 = vmatpush1.msra.mxu0 %v3388
      %3390 = vmatprep.subr.mxu0 0.0
      %v3391 = vand.u32 %v3274, 4294901760
      %v3392 = vsub.f32 %v3274, %v3391
      %v3393 = vand.u32 %v3392, 4294901760
      %v3394 = vsub.f32 %v3392, %v3393
      %v3395 = vand.u32 %v3394, 4294901760
      %3396 = vmatpush1.msra.mxu0 %v3395
      %3397 = vmatprep.subr.mxu0 0.0
      %v3398 = vand.u32 %v3275, 4294901760
      %v3399 = vsub.f32 %v3275, %v3398
      %v3400 = vand.u32 %v3399, 4294901760
      %v3401 = vsub.f32 %v3399, %v3400
      %v3402 = vand.u32 %v3401, 4294901760
      %3403 = vmatpush1.msra.mxu0 %v3402
      %3404 = vmatprep.subr.mxu0 0.0
      %v3405 = vand.u32 %v3276, 4294901760
      %v3406 = vsub.f32 %v3276, %v3405
      %v3407 = vand.u32 %v3406, 4294901760
      %v3408 = vsub.f32 %v3406, %v3407
      %v3409 = vand.u32 %v3408, 4294901760
      %3410 = vmatpush1.msra.mxu0 %v3409
      %3411 = vmatprep.subr.mxu0 0.0
      %v3412 = vand.u32 %v3277, 4294901760
      %v3413 = vsub.f32 %v3277, %v3412
      %v3414 = vand.u32 %v3413, 4294901760
      %v3415 = vsub.f32 %v3413, %v3414
      %v3416 = vand.u32 %v3415, 4294901760
      %3417 = vmatpush1.msra.mxu0 %v3416
      %3418 = vmatprep.subr.mxu0 0.0
      %v3419 = vand.u32 %v3278, 4294901760
      %v3420 = vsub.f32 %v3278, %v3419
      %v3421 = vand.u32 %v3420, 4294901760
      %v3422 = vsub.f32 %v3420, %v3421
      %v3423 = vand.u32 %v3422, 4294901760
      %3424 = vmatpush1.msra.mxu0 %v3423
      %3425 = vmatprep.subr.mxu0 0.0
      %3426 = vmatpush1.msra.mxu0 0.0
      %3427 = vmatprep.subr.mxu0 0.0
      %3428 = vmatpush1.msra.mxu0 0.0
      %3429 = vmatprep.subr.mxu0 0.0
      %3430 = vmatpush1.msra.mxu0 0.0
      %3431 = vmatprep.subr.mxu0 0.0
      %3432 = vmatpush1.msra.mxu0 0.0
      %3433 = vmatprep.subr.mxu0 0.0
      %3434 = vmatpush1.msra.mxu0 0.0
      %3435 = vmatprep.subr.mxu0 0.0
      %3436 = vmatpush1.msra.mxu0 0.0
      %3437 = vmatprep.subr.mxu0 0.0
      %3438 = vmatpush1.msra.mxu0 0.0
      %3439 = vmatprep.subr.mxu0 0.0
      %3440 = vmatpush1.msra.mxu0 0.0
      %3441 = vmatprep.subr.mxu0 0.0
      %3442 = vmatpush1.msra.mxu0 0.0
      %3443 = vmatprep.subr.mxu0 0.0
      %3444 = vmatpush1.msra.mxu0 0.0
      %3445 = vmatprep.subr.mxu0 0.0
      %3446 = vmatpush1.msra.mxu0 0.0
      %3447 = vmatprep.subr.mxu0 0.0
      %3448 = vmatpush1.msra.mxu0 0.0
      %3449 = vmatprep.subr.mxu0 0.0
      %3450 = vmatpush1.msra.mxu0 0.0
      %3451 = vmatprep.subr.mxu0 0.0
      %3452 = vmatpush1.msra.mxu0 0.0
      %3453 = vmatprep.subr.mxu0 0.0
      %3454 = vmatpush1.msra.mxu0 0.0
      %3455 = vmatprep.subr.mxu0 0.0
      %3456 = vmatpush1.msra.mxu0 0.0
      %3457 = vmatprep.subr.mxu0 0.0
      %3458 = vmatpush1.msra.mxu0 0.0
      %3459 = vmatprep.subr.mxu0 0.0
      %3460 = vmatpush1.msra.mxu0 0.0
      %3461 = vmatprep.subr.mxu0 0.0
      %3462 = vmatpush1.msra.mxu0 0.0
      %3463 = vmatprep.subr.mxu0 0.0
      %3464 = vmatpush1.msra.mxu0 0.0
      %3465 = vmatprep.subr.mxu0 0.0
      %3466 = vmatpush1.msra.mxu0 0.0
      %3467 = vmatprep.subr.mxu0 0.0
      %3468 = vmatpush1.msra.mxu0 0.0
      %3469 = vmatprep.subr.mxu0 0.0
      %3470 = vmatpush1.msra.mxu0 0.0
      %3471 = vmatprep.subr.mxu0 0.0
      %3472 = vmatpush1.msra.mxu0 0.0
      %3473 = vmatprep.mubr.f32.mxu0 0.0
      %v3474 = vand.u32 %v3284, 4294901760
      %3475 = vmatmul.mubr.f32.gmra.mrb[0].mxu0 %v3474
      %v3476 = vpop.f32.mrb[0].mxu0
      %v3477 = vadd.f32 %v3366, %v3476
      %v3478 = vpop.f32.mrb[0].mxu0
      %3479 = vdwg.mxu0
      %3480 = vmatprep.subr.mxu0 0.0
      %v3481 = vand.u32 %v3271, 4294901760
      %v3482 = vsub.f32 %v3271, %v3481
      %3483 = vmatpush1.msra.mxu0 %v3482
      %3484 = vmatprep.subr.mxu0 0.0
      %v3485 = vand.u32 %v3272, 4294901760
      %v3486 = vsub.f32 %v3272, %v3485
      %3487 = vmatpush1.msra.mxu0 %v3486
      %3488 = vmatprep.subr.mxu0 0.0
      %v3489 = vand.u32 %v3273, 4294901760
      %v3490 = vsub.f32 %v3273, %v3489
      %3491 = vmatpush1.msra.mxu0 %v3490
      %3492 = vmatprep.subr.mxu0 0.0
      %v3493 = vand.u32 %v3274, 4294901760
      %v3494 = vsub.f32 %v3274, %v3493
      %3495 = vmatpush1.msra.mxu0 %v3494
      %3496 = vmatprep.subr.mxu0 0.0
      %v3497 = vand.u32 %v3275, 4294901760
      %v3498 = vsub.f32 %v3275, %v3497
      %3499 = vmatpush1.msra.mxu0 %v3498
      %3500 = vmatprep.subr.mxu0 0.0
      %v3501 = vand.u32 %v3276, 4294901760
      %v3502 = vsub.f32 %v3276, %v3501
      %3503 = vmatpush1.msra.mxu0 %v3502
      %3504 = vmatprep.subr.mxu0 0.0
      %v3505 = vand.u32 %v3277, 4294901760
      %v3506 = vsub.f32 %v3277, %v3505
      %3507 = vmatpush1.msra.mxu0 %v3506
      %3508 = vmatprep.subr.mxu0 0.0
      %v3509 = vand.u32 %v3278, 4294901760
      %v3510 = vsub.f32 %v3278, %v3509
      %3511 = vmatpush1.msra.mxu0 %v3510
      %3512 = vmatprep.subr.mxu0 0.0
      %3513 = vmatpush1.msra.mxu0 0.0
      %3514 = vmatprep.subr.mxu0 0.0
      %3515 = vmatpush1.msra.mxu0 0.0
      %3516 = vmatprep.subr.mxu0 0.0
      %3517 = vmatpush1.msra.mxu0 0.0
      %3518 = vmatprep.subr.mxu0 0.0
      %3519 = vmatpush1.msra.mxu0 0.0
      %3520 = vmatprep.subr.mxu0 0.0
      %3521 = vmatpush1.msra.mxu0 0.0
      %3522 = vmatprep.subr.mxu0 0.0
      %3523 = vmatpush1.msra.mxu0 0.0
      %3524 = vmatprep.subr.mxu0 0.0
      %3525 = vmatpush1.msra.mxu0 0.0
      %3526 = vmatprep.subr.mxu0 0.0
      %3527 = vmatpush1.msra.mxu0 0.0
      %3528 = vmatprep.subr.mxu0 0.0
      %3529 = vmatpush1.msra.mxu0 0.0
      %3530 = vmatprep.subr.mxu0 0.0
      %3531 = vmatpush1.msra.mxu0 0.0
      %3532 = vmatprep.subr.mxu0 0.0
      %3533 = vmatpush1.msra.mxu0 0.0
      %3534 = vmatprep.subr.mxu0 0.0
      %3535 = vmatpush1.msra.mxu0 0.0
      %3536 = vmatprep.subr.mxu0 0.0
      %3537 = vmatpush1.msra.mxu0 0.0
      %3538 = vmatprep.subr.mxu0 0.0
      %3539 = vmatpush1.msra.mxu0 0.0
      %3540 = vmatprep.subr.mxu0 0.0
      %3541 = vmatpush1.msra.mxu0 0.0
      %3542 = vmatprep.subr.mxu0 0.0
      %3543 = vmatpush1.msra.mxu0 0.0
      %3544 = vmatprep.subr.mxu0 0.0
      %3545 = vmatpush1.msra.mxu0 0.0
      %3546 = vmatprep.subr.mxu0 0.0
      %3547 = vmatpush1.msra.mxu0 0.0
      %3548 = vmatprep.subr.mxu0 0.0
      %3549 = vmatpush1.msra.mxu0 0.0
      %3550 = vmatprep.subr.mxu0 0.0
      %3551 = vmatpush1.msra.mxu0 0.0
      %3552 = vmatprep.subr.mxu0 0.0
      %3553 = vmatpush1.msra.mxu0 0.0
      %3554 = vmatprep.subr.mxu0 0.0
      %3555 = vmatpush1.msra.mxu0 0.0
      %3556 = vmatprep.subr.mxu0 0.0
      %3557 = vmatpush1.msra.mxu0 0.0
      %3558 = vmatprep.subr.mxu0 0.0
      %3559 = vmatpush1.msra.mxu0 0.0
      %3560 = vmatprep.mubr.f32.mxu0 0.0
      %v3561 = vand.u32 %v3284, 4294901760
      %v3562 = vsub.f32 %v3284, %v3561
      %3563 = vmatmul.mubr.f32.gmra.mrb[0].mxu0 %v3562
      %v3564 = vpop.f32.mrb[0].mxu0
      %v3565 = vadd.f32 %v3477, %v3564
      %v3566 = vpop.f32.mrb[0].mxu0
      %3567 = vdwg.mxu0
      %3568 = vmatprep.subr.mxu0 0.0
      %v3569 = vand.u32 %v3271, 4294901760
      %3570 = vmatpush1.msra.mxu0 %v3569
      %3571 = vmatprep.subr.mxu0 0.0
      %v3572 = vand.u32 %v3272, 4294901760
      %3573 = vmatpush1.msra.mxu0 %v3572
      %3574 = vmatprep.subr.mxu0 0.0
      %v3575 = vand.u32 %v3273, 4294901760
      %3576 = vmatpush1.msra.mxu0 %v3575
      %3577 = vmatprep.subr.mxu0 0.0
      %v3578 = vand.u32 %v3274, 4294901760
      %3579 = vmatpush1.msra.mxu0 %v3578
      %3580 = vmatprep.subr.mxu0 0.0
      %v3581 = vand.u32 %v3275, 4294901760
      %3582 = vmatpush1.msra.mxu0 %v3581
      %3583 = vmatprep.subr.mxu0 0.0
      %v3584 = vand.u32 %v3276, 4294901760
      %3585 = vmatpush1.msra.mxu0 %v3584
      %3586 = vmatprep.subr.mxu0 0.0
      %v3587 = vand.u32 %v3277, 4294901760
      %3588 = vmatpush1.msra.mxu0 %v3587
      %3589 = vmatprep.subr.mxu0 0.0
      %v3590 = vand.u32 %v3278, 4294901760
      %3591 = vmatpush1.msra.mxu0 %v3590
      %3592 = vmatprep.subr.mxu0 0.0
      %3593 = vmatpush1.msra.mxu0 0.0
      %3594 = vmatprep.subr.mxu0 0.0
      %3595 = vmatpush1.msra.mxu0 0.0
      %3596 = vmatprep.subr.mxu0 0.0
      %3597 = vmatpush1.msra.mxu0 0.0
      %3598 = vmatprep.subr.mxu0 0.0
      %3599 = vmatpush1.msra.mxu0 0.0
      %3600 = vmatprep.subr.mxu0 0.0
      %3601 = vmatpush1.msra.mxu0 0.0
      %3602 = vmatprep.subr.mxu0 0.0
      %3603 = vmatpush1.msra.mxu0 0.0
      %3604 = vmatprep.subr.mxu0 0.0
      %3605 = vmatpush1.msra.mxu0 0.0
      %3606 = vmatprep.subr.mxu0 0.0
      %3607 = vmatpush1.msra.mxu0 0.0
      %3608 = vmatprep.subr.mxu0 0.0
      %3609 = vmatpush1.msra.mxu0 0.0
      %3610 = vmatprep.subr.mxu0 0.0
      %3611 = vmatpush1.msra.mxu0 0.0
      %3612 = vmatprep.subr.mxu0 0.0
      %3613 = vmatpush1.msra.mxu0 0.0
      %3614 = vmatprep.subr.mxu0 0.0
      %3615 = vmatpush1.msra.mxu0 0.0
      %3616 = vmatprep.subr.mxu0 0.0
      %3617 = vmatpush1.msra.mxu0 0.0
      %3618 = vmatprep.subr.mxu0 0.0
      %3619 = vmatpush1.msra.mxu0 0.0
      %3620 = vmatprep.subr.mxu0 0.0
      %3621 = vmatpush1.msra.mxu0 0.0
      %3622 = vmatprep.subr.mxu0 0.0
      %3623 = vmatpush1.msra.mxu0 0.0
      %3624 = vmatprep.subr.mxu0 0.0
      %3625 = vmatpush1.msra.mxu0 0.0
      %3626 = vmatprep.subr.mxu0 0.0
      %3627 = vmatpush1.msra.mxu0 0.0
      %3628 = vmatprep.subr.mxu0 0.0
      %3629 = vmatpush1.msra.mxu0 0.0
      %3630 = vmatprep.subr.mxu0 0.0
      %3631 = vmatpush1.msra.mxu0 0.0
      %3632 = vmatprep.subr.mxu0 0.0
      %3633 = vmatpush1.msra.mxu0 0.0
      %3634 = vmatprep.subr.mxu0 0.0
      %3635 = vmatpush1.msra.mxu0 0.0
      %3636 = vmatprep.subr.mxu0 0.0
      %3637 = vmatpush1.msra.mxu0 0.0
      %3638 = vmatprep.subr.mxu0 0.0
      %3639 = vmatpush1.msra.mxu0 0.0
      %3640 = vmatprep.mubr.f32.mxu0 0.0
      %v3641 = vand.u32 %v3284, 4294901760
      %v3642 = vsub.f32 %v3284, %v3641
      %v3643 = vand.u32 %v3642, 4294901760
      %3644 = vmatmul.mubr.f32.gmra.mrb[0].mxu0 %v3643
      %v3645 = vpop.f32.mrb[0].mxu0
      %v3646 = vadd.f32 %v3565, %v3645
      %v3647 = vpop.f32.mrb[0].mxu0
      %3648 = vdwg.mxu0
      %3649 = vmatprep.subr.mxu0 0.0
      %v3650 = vand.u32 %v3271, 4294901760
      %v3651 = vsub.f32 %v3271, %v3650
      %v3652 = vand.u32 %v3651, 4294901760
      %3653 = vmatpush1.msra.mxu0 %v3652
      %3654 = vmatprep.subr.mxu0 0.0
      %v3655 = vand.u32 %v3272, 4294901760
      %v3656 = vsub.f32 %v3272, %v3655
      %v3657 = vand.u32 %v3656, 4294901760
      %3658 = vmatpush1.msra.mxu0 %v3657
      %3659 = vmatprep.subr.mxu0 0.0
      %v3660 = vand.u32 %v3273, 4294901760
      %v3661 = vsub.f32 %v3273, %v3660
      %v3662 = vand.u32 %v3661, 4294901760
      %3663 = vmatpush1.msra.mxu0 %v3662
      %3664 = vmatprep.subr.mxu0 0.0
      %v3665 = vand.u32 %v3274, 4294901760
      %v3666 = vsub.f32 %v3274, %v3665
      %v3667 = vand.u32 %v3666, 4294901760
      %3668 = vmatpush1.msra.mxu0 %v3667
      %3669 = vmatprep.subr.mxu0 0.0
      %v3670 = vand.u32 %v3275, 4294901760
      %v3671 = vsub.f32 %v3275, %v3670
      %v3672 = vand.u32 %v3671, 4294901760
      %3673 = vmatpush1.msra.mxu0 %v3672
      %3674 = vmatprep.subr.mxu0 0.0
      %v3675 = vand.u32 %v3276, 4294901760
      %v3676 = vsub.f32 %v3276, %v3675
      %v3677 = vand.u32 %v3676, 4294901760
      %3678 = vmatpush1.msra.mxu0 %v3677
      %3679 = vmatprep.subr.mxu0 0.0
      %v3680 = vand.u32 %v3277, 4294901760
      %v3681 = vsub.f32 %v3277, %v3680
      %v3682 = vand.u32 %v3681, 4294901760
      %3683 = vmatpush1.msra.mxu0 %v3682
      %3684 = vmatprep.subr.mxu0 0.0
      %v3685 = vand.u32 %v3278, 4294901760
      %v3686 = vsub.f32 %v3278, %v3685
      %v3687 = vand.u32 %v3686, 4294901760
      %3688 = vmatpush1.msra.mxu0 %v3687
      %3689 = vmatprep.subr.mxu0 0.0
      %3690 = vmatpush1.msra.mxu0 0.0
      %3691 = vmatprep.subr.mxu0 0.0
      %3692 = vmatpush1.msra.mxu0 0.0
      %3693 = vmatprep.subr.mxu0 0.0
      %3694 = vmatpush1.msra.mxu0 0.0
      %3695 = vmatprep.subr.mxu0 0.0
      %3696 = vmatpush1.msra.mxu0 0.0
      %3697 = vmatprep.subr.mxu0 0.0
      %3698 = vmatpush1.msra.mxu0 0.0
      %3699 = vmatprep.subr.mxu0 0.0
      %3700 = vmatpush1.msra.mxu0 0.0
      %3701 = vmatprep.subr.mxu0 0.0
      %3702 = vmatpush1.msra.mxu0 0.0
      %3703 = vmatprep.subr.mxu0 0.0
      %3704 = vmatpush1.msra.mxu0 0.0
      %3705 = vmatprep.subr.mxu0 0.0
      %3706 = vmatpush1.msra.mxu0 0.0
      %3707 = vmatprep.subr.mxu0 0.0
      %3708 = vmatpush1.msra.mxu0 0.0
      %3709 = vmatprep.subr.mxu0 0.0
      %3710 = vmatpush1.msra.mxu0 0.0
      %3711 = vmatprep.subr.mxu0 0.0
      %3712 = vmatpush1.msra.mxu0 0.0
      %3713 = vmatprep.subr.mxu0 0.0
      %3714 = vmatpush1.msra.mxu0 0.0
      %3715 = vmatprep.subr.mxu0 0.0
      %3716 = vmatpush1.msra.mxu0 0.0
      %3717 = vmatprep.subr.mxu0 0.0
      %3718 = vmatpush1.msra.mxu0 0.0
      %3719 = vmatprep.subr.mxu0 0.0
      %3720 = vmatpush1.msra.mxu0 0.0
      %3721 = vmatprep.subr.mxu0 0.0
      %3722 = vmatpush1.msra.mxu0 0.0
      %3723 = vmatprep.subr.mxu0 0.0
      %3724 = vmatpush1.msra.mxu0 0.0
      %3725 = vmatprep.subr.mxu0 0.0
      %3726 = vmatpush1.msra.mxu0 0.0
      %3727 = vmatprep.subr.mxu0 0.0
      %3728 = vmatpush1.msra.mxu0 0.0
      %3729 = vmatprep.subr.mxu0 0.0
      %3730 = vmatpush1.msra.mxu0 0.0
      %3731 = vmatprep.subr.mxu0 0.0
      %3732 = vmatpush1.msra.mxu0 0.0
      %3733 = vmatprep.subr.mxu0 0.0
      %3734 = vmatpush1.msra.mxu0 0.0
      %3735 = vmatprep.subr.mxu0 0.0
      %3736 = vmatpush1.msra.mxu0 0.0
      %3737 = vmatprep.mubr.f32.mxu0 0.0
      %v3738 = vand.u32 %v3284, 4294901760
      %3739 = vmatmul.mubr.f32.gmra.mrb[0].mxu0 %v3738
      %v3740 = vpop.f32.mrb[0].mxu0
      %v3741 = vadd.f32 %v3646, %v3740
      %v3742 = vpop.f32.mrb[0].mxu0
      %3743 = vdwg.mxu0
      %3744 = vmatprep.subr.mxu0 0.0
      %v3745 = vand.u32 %v3271, 4294901760
      %3746 = vmatpush1.msra.mxu0 %v3745
      %3747 = vmatprep.subr.mxu0 0.0
      %v3748 = vand.u32 %v3272, 4294901760
      %3749 = vmatpush1.msra.mxu0 %v3748
      %3750 = vmatprep.subr.mxu0 0.0
      %v3751 = vand.u32 %v3273, 4294901760
      %3752 = vmatpush1.msra.mxu0 %v3751
      %3753 = vmatprep.subr.mxu0 0.0
      %v3754 = vand.u32 %v3274, 4294901760
      %3755 = vmatpush1.msra.mxu0 %v3754
      %3756 = vmatprep.subr.mxu0 0.0
      %v3757 = vand.u32 %v3275, 4294901760
      %3758 = vmatpush1.msra.mxu0 %v3757
      %3759 = vmatprep.subr.mxu0 0.0
      %v3760 = vand.u32 %v3276, 4294901760
      %3761 = vmatpush1.msra.mxu0 %v3760
      %3762 = vmatprep.subr.mxu0 0.0
      %v3763 = vand.u32 %v3277, 4294901760
      %3764 = vmatpush1.msra.mxu0 %v3763
      %3765 = vmatprep.subr.mxu0 0.0
      %v3766 = vand.u32 %v3278, 4294901760
      %3767 = vmatpush1.msra.mxu0 %v3766
      %3768 = vmatprep.subr.mxu0 0.0
      %3769 = vmatpush1.msra.mxu0 0.0
      %3770 = vmatprep.subr.mxu0 0.0
      %3771 = vmatpush1.msra.mxu0 0.0
      %3772 = vmatprep.subr.mxu0 0.0
      %3773 = vmatpush1.msra.mxu0 0.0
      %3774 = vmatprep.subr.mxu0 0.0
      %3775 = vmatpush1.msra.mxu0 0.0
      %3776 = vmatprep.subr.mxu0 0.0
      %3777 = vmatpush1.msra.mxu0 0.0
      %3778 = vmatprep.subr.mxu0 0.0
      %3779 = vmatpush1.msra.mxu0 0.0
      %3780 = vmatprep.subr.mxu0 0.0
      %3781 = vmatpush1.msra.mxu0 0.0
      %3782 = vmatprep.subr.mxu0 0.0
      %3783 = vmatpush1.msra.mxu0 0.0
      %3784 = vmatprep.subr.mxu0 0.0
      %3785 = vmatpush1.msra.mxu0 0.0
      %3786 = vmatprep.subr.mxu0 0.0
      %3787 = vmatpush1.msra.mxu0 0.0
      %3788 = vmatprep.subr.mxu0 0.0
      %3789 = vmatpush1.msra.mxu0 0.0
      %3790 = vmatprep.subr.mxu0 0.0
      %3791 = vmatpush1.msra.mxu0 0.0
      %3792 = vmatprep.subr.mxu0 0.0
      %3793 = vmatpush1.msra.mxu0 0.0
      %3794 = vmatprep.subr.mxu0 0.0
      %3795 = vmatpush1.msra.mxu0 0.0
      %3796 = vmatprep.subr.mxu0 0.0
      %3797 = vmatpush1.msra.mxu0 0.0
      %3798 = vmatprep.subr.mxu0 0.0
      %3799 = vmatpush1.msra.mxu0 0.0
      %3800 = vmatprep.subr.mxu0 0.0
      %3801 = vmatpush1.msra.mxu0 0.0
      %3802 = vmatprep.subr.mxu0 0.0
      %3803 = vmatpush1.msra.mxu0 0.0
      %3804 = vmatprep.subr.mxu0 0.0
      %3805 = vmatpush1.msra.mxu0 0.0
      %3806 = vmatprep.subr.mxu0 0.0
      %3807 = vmatpush1.msra.mxu0 0.0
      %3808 = vmatprep.subr.mxu0 0.0
      %3809 = vmatpush1.msra.mxu0 0.0
      %3810 = vmatprep.subr.mxu0 0.0
      %3811 = vmatpush1.msra.mxu0 0.0
      %3812 = vmatprep.subr.mxu0 0.0
      %3813 = vmatpush1.msra.mxu0 0.0
      %3814 = vmatprep.subr.mxu0 0.0
      %3815 = vmatpush1.msra.mxu0 0.0
      %3816 = vmatprep.mubr.f32.mxu0 0.0
      %v3817 = vand.u32 %v3284, 4294901760
      %3818 = vmatmul.mubr.f32.gmra.mrb[0].mxu0 %v3817
      %v3819 = vpop.f32.mrb[0].mxu0
      %v3820 = vadd.f32 %v3741, %v3819
      %v3821 = vpop.f32.mrb[0].mxu0
      %3822 = vdwg.mxu0
      %3823 = vmatprep.subr.mxu0 0.0
      %v3824 = vand.u32 %v2782, 4294901760
      %3825 = vmatpush1.msra.mxu0 %v3824
      %3826 = vmatprep.subr.mxu0 0.0
      %v3827 = vand.u32 %v2783, 4294901760
      %3828 = vmatpush1.msra.mxu0 %v3827
      %3829 = vmatprep.subr.mxu0 0.0
      %v3830 = vand.u32 %v2784, 4294901760
      %3831 = vmatpush1.msra.mxu0 %v3830
      %3832 = vmatprep.subr.mxu0 0.0
      %v3833 = vand.u32 %v2785, 4294901760
      %3834 = vmatpush1.msra.mxu0 %v3833
      %3835 = vmatprep.subr.mxu0 0.0
      %v3836 = vand.u32 %v2786, 4294901760
      %3837 = vmatpush1.msra.mxu0 %v3836
      %3838 = vmatprep.subr.mxu0 0.0
      %v3839 = vand.u32 %v2787, 4294901760
      %3840 = vmatpush1.msra.mxu0 %v3839
      %3841 = vmatprep.subr.mxu0 0.0
      %v3842 = vand.u32 %v2788, 4294901760
      %3843 = vmatpush1.msra.mxu0 %v3842
      %3844 = vmatprep.subr.mxu0 0.0
      %v3845 = vand.u32 %v2789, 4294901760
      %3846 = vmatpush1.msra.mxu0 %v3845
      %3847 = vmatprep.subr.mxu0 0.0
      %v3848 = vand.u32 %v2790, 4294901760
      %3849 = vmatpush1.msra.mxu0 %v3848
      %3850 = vmatprep.subr.mxu0 0.0
      %v3851 = vand.u32 %v2791, 4294901760
      %3852 = vmatpush1.msra.mxu0 %v3851
      %3853 = vmatprep.subr.mxu0 0.0
      %v3854 = vand.u32 %v2792, 4294901760
      %3855 = vmatpush1.msra.mxu0 %v3854
      %3856 = vmatprep.subr.mxu0 0.0
      %v3857 = vand.u32 %v2793, 4294901760
      %3858 = vmatpush1.msra.mxu0 %v3857
      %3859 = vmatprep.subr.mxu0 0.0
      %v3860 = vand.u32 %v2794, 4294901760
      %3861 = vmatpush1.msra.mxu0 %v3860
      %3862 = vmatprep.subr.mxu0 0.0
      %v3863 = vand.u32 %v2795, 4294901760
      %3864 = vmatpush1.msra.mxu0 %v3863
      %3865 = vmatprep.subr.mxu0 0.0
      %v3866 = vand.u32 %v2796, 4294901760
      %3867 = vmatpush1.msra.mxu0 %v3866
      %3868 = vmatprep.subr.mxu0 0.0
      %v3869 = vand.u32 %v2797, 4294901760
      %3870 = vmatpush1.msra.mxu0 %v3869
      %3871 = vmatprep.subr.mxu0 0.0
      %3872 = vmatpush1.msra.mxu0 0.0
      %3873 = vmatprep.subr.mxu0 0.0
      %3874 = vmatpush1.msra.mxu0 0.0
      %3875 = vmatprep.subr.mxu0 0.0
      %3876 = vmatpush1.msra.mxu0 0.0
      %3877 = vmatprep.subr.mxu0 0.0
      %3878 = vmatpush1.msra.mxu0 0.0
      %3879 = vmatprep.subr.mxu0 0.0
      %3880 = vmatpush1.msra.mxu0 0.0
      %3881 = vmatprep.subr.mxu0 0.0
      %3882 = vmatpush1.msra.mxu0 0.0
      %3883 = vmatprep.subr.mxu0 0.0
      %3884 = vmatpush1.msra.mxu0 0.0
      %3885 = vmatprep.subr.mxu0 0.0
      %3886 = vmatpush1.msra.mxu0 0.0
      %3887 = vmatprep.subr.mxu0 0.0
      %3888 = vmatpush1.msra.mxu0 0.0
      %3889 = vmatprep.subr.mxu0 0.0
      %3890 = vmatpush1.msra.mxu0 0.0
      %3891 = vmatprep.subr.mxu0 0.0
      %3892 = vmatpush1.msra.mxu0 0.0
      %3893 = vmatprep.subr.mxu0 0.0
      %3894 = vmatpush1.msra.mxu0 0.0
      %3895 = vmatprep.subr.mxu0 0.0
      %3896 = vmatpush1.msra.mxu0 0.0
      %3897 = vmatprep.subr.mxu0 0.0
      %3898 = vmatpush1.msra.mxu0 0.0
      %3899 = vmatprep.subr.mxu0 0.0
      %3900 = vmatpush1.msra.mxu0 0.0
      %3901 = vmatprep.subr.mxu0 0.0
      %3902 = vmatpush1.msra.mxu0 0.0
      %3903 = vmatprep.mubr.f32.mxu0 0.0
      %v3904 = vand.u32 %v2779, 4294901760
      %v3905 = vsub.f32 %v2779, %v3904
      %v3906 = vand.u32 %v3905, 4294901760
      %v3907 = vsub.f32 %v3905, %v3906
      %v3908 = vand.u32 %v3907, 4294901760
      %3909 = vmatmul.mubr.f32.gmra.mrb[0].mxu0 %v3908
      %v3910 = vpop.f32.mrb[0].mxu0
      %v3911 = vadd.f32 %v3820, %v3910
      %v3912 = vpop.f32.mrb[0].mxu0
      %3913 = vdwg.mxu0
      %3914 = vmatprep.subr.mxu0 0.0
      %v3915 = vand.u32 %v2782, 4294901760
      %v3916 = vsub.f32 %v2782, %v3915
      %v3917 = vand.u32 %v3916, 4294901760
      %v3918 = vsub.f32 %v3916, %v3917
      %v3919 = vand.u32 %v3918, 4294901760
      %3920 = vmatpush1.msra.mxu0 %v3919
      %3921 = vmatprep.subr.mxu0 0.0
      %v3922 = vand.u32 %v2783, 4294901760
      %v3923 = vsub.f32 %v2783, %v3922
      %v3924 = vand.u32 %v3923, 4294901760
      %v3925 = vsub.f32 %v3923, %v3924
      %v3926 = vand.u32 %v3925, 4294901760
      %3927 = vmatpush1.msra.mxu0 %v3926
      %3928 = vmatprep.subr.mxu0 0.0
      %v3929 = vand.u32 %v2784, 4294901760
      %v3930 = vsub.f32 %v2784, %v3929
      %v3931 = vand.u32 %v3930, 4294901760
      %v3932 = vsub.f32 %v3930, %v3931
      %v3933 = vand.u32 %v3932, 4294901760
      %3934 = vmatpush1.msra.mxu0 %v3933
      %3935 = vmatprep.subr.mxu0 0.0
      %v3936 = vand.u32 %v2785, 4294901760
      %v3937 = vsub.f32 %v2785, %v3936
      %v3938 = vand.u32 %v3937, 4294901760
      %v3939 = vsub.f32 %v3937, %v3938
      %v3940 = vand.u32 %v3939, 4294901760
      %3941 = vmatpush1.msra.mxu0 %v3940
      %3942 = vmatprep.subr.mxu0 0.0
      %v3943 = vand.u32 %v2786, 4294901760
      %v3944 = vsub.f32 %v2786, %v3943
      %v3945 = vand.u32 %v3944, 4294901760
      %v3946 = vsub.f32 %v3944, %v3945
      %v3947 = vand.u32 %v3946, 4294901760
      %3948 = vmatpush1.msra.mxu0 %v3947
      %3949 = vmatprep.subr.mxu0 0.0
      %v3950 = vand.u32 %v2787, 4294901760
      %v3951 = vsub.f32 %v2787, %v3950
      %v3952 = vand.u32 %v3951, 4294901760
      %v3953 = vsub.f32 %v3951, %v3952
      %v3954 = vand.u32 %v3953, 4294901760
      %3955 = vmatpush1.msra.mxu0 %v3954
      %3956 = vmatprep.subr.mxu0 0.0
      %v3957 = vand.u32 %v2788, 4294901760
      %v3958 = vsub.f32 %v2788, %v3957
      %v3959 = vand.u32 %v3958, 4294901760
      %v3960 = vsub.f32 %v3958, %v3959
      %v3961 = vand.u32 %v3960, 4294901760
      %3962 = vmatpush1.msra.mxu0 %v3961
      %3963 = vmatprep.subr.mxu0 0.0
      %v3964 = vand.u32 %v2789, 4294901760
      %v3965 = vsub.f32 %v2789, %v3964
      %v3966 = vand.u32 %v3965, 4294901760
      %v3967 = vsub.f32 %v3965, %v3966
      %v3968 = vand.u32 %v3967, 4294901760
      %3969 = vmatpush1.msra.mxu0 %v3968
      %3970 = vmatprep.subr.mxu0 0.0
      %v3971 = vand.u32 %v2790, 4294901760
      %v3972 = vsub.f32 %v2790, %v3971
      %v3973 = vand.u32 %v3972, 4294901760
      %v3974 = vsub.f32 %v3972, %v3973
      %v3975 = vand.u32 %v3974, 4294901760
      %3976 = vmatpush1.msra.mxu0 %v3975
      %3977 = vmatprep.subr.mxu0 0.0
      %v3978 = vand.u32 %v2791, 4294901760
      %v3979 = vsub.f32 %v2791, %v3978
      %v3980 = vand.u32 %v3979, 4294901760
      %v3981 = vsub.f32 %v3979, %v3980
      %v3982 = vand.u32 %v3981, 4294901760
      %3983 = vmatpush1.msra.mxu0 %v3982
      %3984 = vmatprep.subr.mxu0 0.0
      %v3985 = vand.u32 %v2792, 4294901760
      %v3986 = vsub.f32 %v2792, %v3985
      %v3987 = vand.u32 %v3986, 4294901760
      %v3988 = vsub.f32 %v3986, %v3987
      %v3989 = vand.u32 %v3988, 4294901760
      %3990 = vmatpush1.msra.mxu0 %v3989
      %3991 = vmatprep.subr.mxu0 0.0
      %v3992 = vand.u32 %v2793, 4294901760
      %v3993 = vsub.f32 %v2793, %v3992
      %v3994 = vand.u32 %v3993, 4294901760
      %v3995 = vsub.f32 %v3993, %v3994
      %v3996 = vand.u32 %v3995, 4294901760
      %3997 = vmatpush1.msra.mxu0 %v3996
      %3998 = vmatprep.subr.mxu0 0.0
      %v3999 = vand.u32 %v2794, 4294901760
      %v4000 = vsub.f32 %v2794, %v3999
      %v4001 = vand.u32 %v4000, 4294901760
      %v4002 = vsub.f32 %v4000, %v4001
      %v4003 = vand.u32 %v4002, 4294901760
      %4004 = vmatpush1.msra.mxu0 %v4003
      %4005 = vmatprep.subr.mxu0 0.0
      %v4006 = vand.u32 %v2795, 4294901760
      %v4007 = vsub.f32 %v2795, %v4006
      %v4008 = vand.u32 %v4007, 4294901760
      %v4009 = vsub.f32 %v4007, %v4008
      %v4010 = vand.u32 %v4009, 4294901760
      %4011 = vmatpush1.msra.mxu0 %v4010
      %4012 = vmatprep.subr.mxu0 0.0
      %v4013 = vand.u32 %v2796, 4294901760
      %v4014 = vsub.f32 %v2796, %v4013
      %v4015 = vand.u32 %v4014, 4294901760
      %v4016 = vsub.f32 %v4014, %v4015
      %v4017 = vand.u32 %v4016, 4294901760
      %4018 = vmatpush1.msra.mxu0 %v4017
      %4019 = vmatprep.subr.mxu0 0.0
      %v4020 = vand.u32 %v2797, 4294901760
      %v4021 = vsub.f32 %v2797, %v4020
      %v4022 = vand.u32 %v4021, 4294901760
      %v4023 = vsub.f32 %v4021, %v4022
      %v4024 = vand.u32 %v4023, 4294901760
      %4025 = vmatpush1.msra.mxu0 %v4024
      %4026 = vmatprep.subr.mxu0 0.0
      %4027 = vmatpush1.msra.mxu0 0.0
      %4028 = vmatprep.subr.mxu0 0.0
      %4029 = vmatpush1.msra.mxu0 0.0
      %4030 = vmatprep.subr.mxu0 0.0
      %4031 = vmatpush1.msra.mxu0 0.0
      %4032 = vmatprep.subr.mxu0 0.0
      %4033 = vmatpush1.msra.mxu0 0.0
      %4034 = vmatprep.subr.mxu0 0.0
      %4035 = vmatpush1.msra.mxu0 0.0
      %4036 = vmatprep.subr.mxu0 0.0
      %4037 = vmatpush1.msra.mxu0 0.0
      %4038 = vmatprep.subr.mxu0 0.0
      %4039 = vmatpush1.msra.mxu0 0.0
      %4040 = vmatprep.subr.mxu0 0.0
      %4041 = vmatpush1.msra.mxu0 0.0
      %4042 = vmatprep.subr.mxu0 0.0
      %4043 = vmatpush1.msra.mxu0 0.0
      %4044 = vmatprep.subr.mxu0 0.0
      %4045 = vmatpush1.msra.mxu0 0.0
      %4046 = vmatprep.subr.mxu0 0.0
      %4047 = vmatpush1.msra.mxu0 0.0
      %4048 = vmatprep.subr.mxu0 0.0
      %4049 = vmatpush1.msra.mxu0 0.0
      %4050 = vmatprep.subr.mxu0 0.0
      %4051 = vmatpush1.msra.mxu0 0.0
      %4052 = vmatprep.subr.mxu0 0.0
      %4053 = vmatpush1.msra.mxu0 0.0
      %4054 = vmatprep.subr.mxu0 0.0
      %4055 = vmatpush1.msra.mxu0 0.0
      %4056 = vmatprep.subr.mxu0 0.0
      %4057 = vmatpush1.msra.mxu0 0.0
      %4058 = vmatprep.mubr.f32.mxu0 0.0
      %v4059 = vand.u32 %v2779, 4294901760
      %4060 = vmatmul.mubr.f32.gmra.mrb[0].mxu0 %v4059
      %v4061 = vpop.f32.mrb[0].mxu0
      %v4062 = vadd.f32 %v3911, %v4061
      %v4063 = vpop.f32.mrb[0].mxu0
      %4064 = vdwg.mxu0
      %4065 = vmatprep.subr.mxu0 0.0
      %v4066 = vand.u32 %v2782, 4294901760
      %v4067 = vsub.f32 %v2782, %v4066
      %4068 = vmatpush1.msra.mxu0 %v4067
      %4069 = vmatprep.subr.mxu0 0.0
      %v4070 = vand.u32 %v2783, 4294901760
      %v4071 = vsub.f32 %v2783, %v4070
      %4072 = vmatpush1.msra.mxu0 %v4071
      %4073 = vmatprep.subr.mxu0 0.0
      %v4074 = vand.u32 %v2784, 4294901760
      %v4075 = vsub.f32 %v2784, %v4074
      %4076 = vmatpush1.msra.mxu0 %v4075
      %4077 = vmatprep.subr.mxu0 0.0
      %v4078 = vand.u32 %v2785, 4294901760
      %v4079 = vsub.f32 %v2785, %v4078
      %4080 = vmatpush1.msra.mxu0 %v4079
      %4081 = vmatprep.subr.mxu0 0.0
      %v4082 = vand.u32 %v2786, 4294901760
      %v4083 = vsub.f32 %v2786, %v4082
      %4084 = vmatpush1.msra.mxu0 %v4083
      %4085 = vmatprep.subr.mxu0 0.0
      %v4086 = vand.u32 %v2787, 4294901760
      %v4087 = vsub.f32 %v2787, %v4086
      %4088 = vmatpush1.msra.mxu0 %v4087
      %4089 = vmatprep.subr.mxu0 0.0
      %v4090 = vand.u32 %v2788, 4294901760
      %v4091 = vsub.f32 %v2788, %v4090
      %4092 = vmatpush1.msra.mxu0 %v4091
      %4093 = vmatprep.subr.mxu0 0.0
      %v4094 = vand.u32 %v2789, 4294901760
      %v4095 = vsub.f32 %v2789, %v4094
      %4096 = vmatpush1.msra.mxu0 %v4095
      %4097 = vmatprep.subr.mxu0 0.0
      %v4098 = vand.u32 %v2790, 4294901760
      %v4099 = vsub.f32 %v2790, %v4098
      %4100 = vmatpush1.msra.mxu0 %v4099
      %4101 = vmatprep.subr.mxu0 0.0
      %v4102 = vand.u32 %v2791, 4294901760
      %v4103 = vsub.f32 %v2791, %v4102
      %4104 = vmatpush1.msra.mxu0 %v4103
      %4105 = vmatprep.subr.mxu0 0.0
      %v4106 = vand.u32 %v2792, 4294901760
      %v4107 = vsub.f32 %v2792, %v4106
      %4108 = vmatpush1.msra.mxu0 %v4107
      %4109 = vmatprep.subr.mxu0 0.0
      %v4110 = vand.u32 %v2793, 4294901760
      %v4111 = vsub.f32 %v2793, %v4110
      %4112 = vmatpush1.msra.mxu0 %v4111
      %4113 = vmatprep.subr.mxu0 0.0
      %v4114 = vand.u32 %v2794, 4294901760
      %v4115 = vsub.f32 %v2794, %v4114
      %4116 = vmatpush1.msra.mxu0 %v4115
      %4117 = vmatprep.subr.mxu0 0.0
      %v4118 = vand.u32 %v2795, 4294901760
      %v4119 = vsub.f32 %v2795, %v4118
      %4120 = vmatpush1.msra.mxu0 %v4119
      %4121 = vmatprep.subr.mxu0 0.0
      %v4122 = vand.u32 %v2796, 4294901760
      %v4123 = vsub.f32 %v2796, %v4122
      %4124 = vmatpush1.msra.mxu0 %v4123
      %4125 = vmatprep.subr.mxu0 0.0
      %v4126 = vand.u32 %v2797, 4294901760
      %v4127 = vsub.f32 %v2797, %v4126
      %4128 = vmatpush1.msra.mxu0 %v4127
      %4129 = vmatprep.subr.mxu0 0.0
      %4130 = vmatpush1.msra.mxu0 0.0
      %4131 = vmatprep.subr.mxu0 0.0
      %4132 = vmatpush1.msra.mxu0 0.0
      %4133 = vmatprep.subr.mxu0 0.0
      %4134 = vmatpush1.msra.mxu0 0.0
      %4135 = vmatprep.subr.mxu0 0.0
      %4136 = vmatpush1.msra.mxu0 0.0
      %4137 = vmatprep.subr.mxu0 0.0
      %4138 = vmatpush1.msra.mxu0 0.0
      %4139 = vmatprep.subr.mxu0 0.0
      %4140 = vmatpush1.msra.mxu0 0.0
      %4141 = vmatprep.subr.mxu0 0.0
      %4142 = vmatpush1.msra.mxu0 0.0
      %4143 = vmatprep.subr.mxu0 0.0
      %4144 = vmatpush1.msra.mxu0 0.0
      %4145 = vmatprep.subr.mxu0 0.0
      %4146 = vmatpush1.msra.mxu0 0.0
      %4147 = vmatprep.subr.mxu0 0.0
      %4148 = vmatpush1.msra.mxu0 0.0
      %4149 = vmatprep.subr.mxu0 0.0
      %4150 = vmatpush1.msra.mxu0 0.0
      %4151 = vmatprep.subr.mxu0 0.0
      %4152 = vmatpush1.msra.mxu0 0.0
      %4153 = vmatprep.subr.mxu0 0.0
      %4154 = vmatpush1.msra.mxu0 0.0
      %4155 = vmatprep.subr.mxu0 0.0
      %4156 = vmatpush1.msra.mxu0 0.0
      %4157 = vmatprep.subr.mxu0 0.0
      %4158 = vmatpush1.msra.mxu0 0.0
      %4159 = vmatprep.subr.mxu0 0.0
      %4160 = vmatpush1.msra.mxu0 0.0
      %4161 = vmatprep.mubr.f32.mxu0 0.0
      %v4162 = vand.u32 %v2779, 4294901760
      %v4163 = vsub.f32 %v2779, %v4162
      %4164 = vmatmul.mubr.f32.gmra.mrb[0].mxu0 %v4163
      %v4165 = vpop.f32.mrb[0].mxu0
      %v4166 = vadd.f32 %v4062, %v4165
      %v4167 = vpop.f32.mrb[0].mxu0
      %4168 = vdwg.mxu0
      %4169 = vmatprep.subr.mxu0 0.0
      %v4170 = vand.u32 %v2782, 4294901760
      %4171 = vmatpush1.msra.mxu0 %v4170
      %4172 = vmatprep.subr.mxu0 0.0
      %v4173 = vand.u32 %v2783, 4294901760
      %4174 = vmatpush1.msra.mxu0 %v4173
      %4175 = vmatprep.subr.mxu0 0.0
      %v4176 = vand.u32 %v2784, 4294901760
      %4177 = vmatpush1.msra.mxu0 %v4176
      %4178 = vmatprep.subr.mxu0 0.0
      %v4179 = vand.u32 %v2785, 4294901760
      %4180 = vmatpush1.msra.mxu0 %v4179
      %4181 = vmatprep.subr.mxu0 0.0
      %v4182 = vand.u32 %v2786, 4294901760
      %4183 = vmatpush1.msra.mxu0 %v4182
      %4184 = vmatprep.subr.mxu0 0.0
      %v4185 = vand.u32 %v2787, 4294901760
      %4186 = vmatpush1.msra.mxu0 %v4185
      %4187 = vmatprep.subr.mxu0 0.0
      %v4188 = vand.u32 %v2788, 4294901760
      %4189 = vmatpush1.msra.mxu0 %v4188
      %4190 = vmatprep.subr.mxu0 0.0
      %v4191 = vand.u32 %v2789, 4294901760
      %4192 = vmatpush1.msra.mxu0 %v4191
      %4193 = vmatprep.subr.mxu0 0.0
      %v4194 = vand.u32 %v2790, 4294901760
      %4195 = vmatpush1.msra.mxu0 %v4194
      %4196 = vmatprep.subr.mxu0 0.0
      %v4197 = vand.u32 %v2791, 4294901760
      %4198 = vmatpush1.msra.mxu0 %v4197
      %4199 = vmatprep.subr.mxu0 0.0
      %v4200 = vand.u32 %v2792, 4294901760
      %4201 = vmatpush1.msra.mxu0 %v4200
      %4202 = vmatprep.subr.mxu0 0.0
      %v4203 = vand.u32 %v2793, 4294901760
      %4204 = vmatpush1.msra.mxu0 %v4203
      %4205 = vmatprep.subr.mxu0 0.0
      %v4206 = vand.u32 %v2794, 4294901760
      %4207 = vmatpush1.msra.mxu0 %v4206
      %4208 = vmatprep.subr.mxu0 0.0
      %v4209 = vand.u32 %v2795, 4294901760
      %4210 = vmatpush1.msra.mxu0 %v4209
      %4211 = vmatprep.subr.mxu0 0.0
      %v4212 = vand.u32 %v2796, 4294901760
      %4213 = vmatpush1.msra.mxu0 %v4212
      %4214 = vmatprep.subr.mxu0 0.0
      %v4215 = vand.u32 %v2797, 4294901760
      %4216 = vmatpush1.msra.mxu0 %v4215
      %4217 = vmatprep.subr.mxu0 0.0
      %4218 = vmatpush1.msra.mxu0 0.0
      %4219 = vmatprep.subr.mxu0 0.0
      %4220 = vmatpush1.msra.mxu0 0.0
      %4221 = vmatprep.subr.mxu0 0.0
      %4222 = vmatpush1.msra.mxu0 0.0
      %4223 = vmatprep.subr.mxu0 0.0
      %4224 = vmatpush1.msra.mxu0 0.0
      %4225 = vmatprep.subr.mxu0 0.0
      %4226 = vmatpush1.msra.mxu0 0.0
      %4227 = vmatprep.subr.mxu0 0.0
      %4228 = vmatpush1.msra.mxu0 0.0
      %4229 = vmatprep.subr.mxu0 0.0
      %4230 = vmatpush1.msra.mxu0 0.0
      %4231 = vmatprep.subr.mxu0 0.0
      %4232 = vmatpush1.msra.mxu0 0.0
      %4233 = vmatprep.subr.mxu0 0.0
      %4234 = vmatpush1.msra.mxu0 0.0
      %4235 = vmatprep.subr.mxu0 0.0
      %4236 = vmatpush1.msra.mxu0 0.0
      %4237 = vmatprep.subr.mxu0 0.0
      %4238 = vmatpush1.msra.mxu0 0.0
      %4239 = vmatprep.subr.mxu0 0.0
      %4240 = vmatpush1.msra.mxu0 0.0
      %4241 = vmatprep.subr.mxu0 0.0
      %4242 = vmatpush1.msra.mxu0 0.0
      %4243 = vmatprep.subr.mxu0 0.0
      %4244 = vmatpush1.msra.mxu0 0.0
      %4245 = vmatprep.subr.mxu0 0.0
      %4246 = vmatpush1.msra.mxu0 0.0
      %4247 = vmatprep.subr.mxu0 0.0
      %4248 = vmatpush1.msra.mxu0 0.0
      %4249 = vmatprep.mubr.f32.mxu0 0.0
      %v4250 = vand.u32 %v2779, 4294901760
      %v4251 = vsub.f32 %v2779, %v4250
      %v4252 = vand.u32 %v4251, 4294901760
      %4253 = vmatmul.mubr.f32.gmra.mrb[0].mxu0 %v4252
      %v4254 = vpop.f32.mrb[0].mxu0
      %v4255 = vadd.f32 %v4166, %v4254
      %v4256 = vpop.f32.mrb[0].mxu0
      %4257 = vdwg.mxu0
      %4258 = vmatprep.subr.mxu0 0.0
      %v4259 = vand.u32 %v2782, 4294901760
      %v4260 = vsub.f32 %v2782, %v4259
      %v4261 = vand.u32 %v4260, 4294901760
      %4262 = vmatpush1.msra.mxu0 %v4261
      %4263 = vmatprep.subr.mxu0 0.0
      %v4264 = vand.u32 %v2783, 4294901760
      %v4265 = vsub.f32 %v2783, %v4264
      %v4266 = vand.u32 %v4265, 4294901760
      %4267 = vmatpush1.msra.mxu0 %v4266
      %4268 = vmatprep.subr.mxu0 0.0
      %v4269 = vand.u32 %v2784, 4294901760
      %v4270 = vsub.f32 %v2784, %v4269
      %v4271 = vand.u32 %v4270, 4294901760
      %4272 = vmatpush1.msra.mxu0 %v4271
      %4273 = vmatprep.subr.mxu0 0.0
      %v4274 = vand.u32 %v2785, 4294901760
      %v4275 = vsub.f32 %v2785, %v4274
      %v4276 = vand.u32 %v4275, 4294901760
      %4277 = vmatpush1.msra.mxu0 %v4276
      %4278 = vmatprep.subr.mxu0 0.0
      %v4279 = vand.u32 %v2786, 4294901760
      %v4280 = vsub.f32 %v2786, %v4279
      %v4281 = vand.u32 %v4280, 4294901760
      %4282 = vmatpush1.msra.mxu0 %v4281
      %4283 = vmatprep.subr.mxu0 0.0
      %v4284 = vand.u32 %v2787, 4294901760
      %v4285 = vsub.f32 %v2787, %v4284
      %v4286 = vand.u32 %v4285, 4294901760
      %4287 = vmatpush1.msra.mxu0 %v4286
      %4288 = vmatprep.subr.mxu0 0.0
      %v4289 = vand.u32 %v2788, 4294901760
      %v4290 = vsub.f32 %v2788, %v4289
      %v4291 = vand.u32 %v4290, 4294901760
      %4292 = vmatpush1.msra.mxu0 %v4291
      %4293 = vmatprep.subr.mxu0 0.0
      %v4294 = vand.u32 %v2789, 4294901760
      %v4295 = vsub.f32 %v2789, %v4294
      %v4296 = vand.u32 %v4295, 4294901760
      %4297 = vmatpush1.msra.mxu0 %v4296
      %4298 = vmatprep.subr.mxu0 0.0
      %v4299 = vand.u32 %v2790, 4294901760
      %v4300 = vsub.f32 %v2790, %v4299
      %v4301 = vand.u32 %v4300, 4294901760
      %4302 = vmatpush1.msra.mxu0 %v4301
      %4303 = vmatprep.subr.mxu0 0.0
      %v4304 = vand.u32 %v2791, 4294901760
      %v4305 = vsub.f32 %v2791, %v4304
      %v4306 = vand.u32 %v4305, 4294901760
      %4307 = vmatpush1.msra.mxu0 %v4306
      %4308 = vmatprep.subr.mxu0 0.0
      %v4309 = vand.u32 %v2792, 4294901760
      %v4310 = vsub.f32 %v2792, %v4309
      %v4311 = vand.u32 %v4310, 4294901760
      %4312 = vmatpush1.msra.mxu0 %v4311
      %4313 = vmatprep.subr.mxu0 0.0
      %v4314 = vand.u32 %v2793, 4294901760
      %v4315 = vsub.f32 %v2793, %v4314
      %v4316 = vand.u32 %v4315, 4294901760
      %4317 = vmatpush1.msra.mxu0 %v4316
      %4318 = vmatprep.subr.mxu0 0.0
      %v4319 = vand.u32 %v2794, 4294901760
      %v4320 = vsub.f32 %v2794, %v4319
      %v4321 = vand.u32 %v4320, 4294901760
      %4322 = vmatpush1.msra.mxu0 %v4321
      %4323 = vmatprep.subr.mxu0 0.0
      %v4324 = vand.u32 %v2795, 4294901760
      %v4325 = vsub.f32 %v2795, %v4324
      %v4326 = vand.u32 %v4325, 4294901760
      %4327 = vmatpush1.msra.mxu0 %v4326
      %4328 = vmatprep.subr.mxu0 0.0
      %v4329 = vand.u32 %v2796, 4294901760
      %v4330 = vsub.f32 %v2796, %v4329
      %v4331 = vand.u32 %v4330, 4294901760
      %4332 = vmatpush1.msra.mxu0 %v4331
      %4333 = vmatprep.subr.mxu0 0.0
      %v4334 = vand.u32 %v2797, 4294901760
      %v4335 = vsub.f32 %v2797, %v4334
      %v4336 = vand.u32 %v4335, 4294901760
      %4337 = vmatpush1.msra.mxu0 %v4336
      %4338 = vmatprep.subr.mxu0 0.0
      %4339 = vmatpush1.msra.mxu0 0.0
      %4340 = vmatprep.subr.mxu0 0.0
      %4341 = vmatpush1.msra.mxu0 0.0
      %4342 = vmatprep.subr.mxu0 0.0
      %4343 = vmatpush1.msra.mxu0 0.0
      %4344 = vmatprep.subr.mxu0 0.0
      %4345 = vmatpush1.msra.mxu0 0.0
      %4346 = vmatprep.subr.mxu0 0.0
      %4347 = vmatpush1.msra.mxu0 0.0
      %4348 = vmatprep.subr.mxu0 0.0
      %4349 = vmatpush1.msra.mxu0 0.0
      %4350 = vmatprep.subr.mxu0 0.0
      %4351 = vmatpush1.msra.mxu0 0.0
      %4352 = vmatprep.subr.mxu0 0.0
      %4353 = vmatpush1.msra.mxu0 0.0
      %4354 = vmatprep.subr.mxu0 0.0
      %4355 = vmatpush1.msra.mxu0 0.0
      %4356 = vmatprep.subr.mxu0 0.0
      %4357 = vmatpush1.msra.mxu0 0.0
      %4358 = vmatprep.subr.mxu0 0.0
      %4359 = vmatpush1.msra.mxu0 0.0
      %4360 = vmatprep.subr.mxu0 0.0
      %4361 = vmatpush1.msra.mxu0 0.0
      %4362 = vmatprep.subr.mxu0 0.0
      %4363 = vmatpush1.msra.mxu0 0.0
      %4364 = vmatprep.subr.mxu0 0.0
      %4365 = vmatpush1.msra.mxu0 0.0
      %4366 = vmatprep.subr.mxu0 0.0
      %4367 = vmatpush1.msra.mxu0 0.0
      %4368 = vmatprep.subr.mxu0 0.0
      %4369 = vmatpush1.msra.mxu0 0.0
      %4370 = vmatprep.mubr.f32.mxu0 0.0
      %v4371 = vand.u32 %v2779, 4294901760
      %4372 = vmatmul.mubr.f32.gmra.mrb[0].mxu0 %v4371
      %v4373 = vpop.f32.mrb[0].mxu0
      %v4374 = vadd.f32 %v4255, %v4373
      %v4375 = vpop.f32.mrb[0].mxu0
      %4376 = vdwg.mxu0
      %4377 = vmatprep.subr.mxu0 0.0
      %v4378 = vand.u32 %v2782, 4294901760
      %4379 = vmatpush1.msra.mxu0 %v4378
      %4380 = vmatprep.subr.mxu0 0.0
      %v4381 = vand.u32 %v2783, 4294901760
      %4382 = vmatpush1.msra.mxu0 %v4381
      %4383 = vmatprep.subr.mxu0 0.0
      %v4384 = vand.u32 %v2784, 4294901760
      %4385 = vmatpush1.msra.mxu0 %v4384
      %4386 = vmatprep.subr.mxu0 0.0
      %v4387 = vand.u32 %v2785, 4294901760
      %4388 = vmatpush1.msra.mxu0 %v4387
      %4389 = vmatprep.subr.mxu0 0.0
      %v4390 = vand.u32 %v2786, 4294901760
      %4391 = vmatpush1.msra.mxu0 %v4390
      %4392 = vmatprep.subr.mxu0 0.0
      %v4393 = vand.u32 %v2787, 4294901760
      %4394 = vmatpush1.msra.mxu0 %v4393
      %4395 = vmatprep.subr.mxu0 0.0
      %v4396 = vand.u32 %v2788, 4294901760
      %4397 = vmatpush1.msra.mxu0 %v4396
      %4398 = vmatprep.subr.mxu0 0.0
      %v4399 = vand.u32 %v2789, 4294901760
      %4400 = vmatpush1.msra.mxu0 %v4399
      %4401 = vmatprep.subr.mxu0 0.0
      %v4402 = vand.u32 %v2790, 4294901760
      %4403 = vmatpush1.msra.mxu0 %v4402
      %4404 = vmatprep.subr.mxu0 0.0
      %v4405 = vand.u32 %v2791, 4294901760
      %4406 = vmatpush1.msra.mxu0 %v4405
      %4407 = vmatprep.subr.mxu0 0.0
      %v4408 = vand.u32 %v2792, 4294901760
      %4409 = vmatpush1.msra.mxu0 %v4408
      %4410 = vmatprep.subr.mxu0 0.0
      %v4411 = vand.u32 %v2793, 4294901760
      %4412 = vmatpush1.msra.mxu0 %v4411
      %4413 = vmatprep.subr.mxu0 0.0
      %v4414 = vand.u32 %v2794, 4294901760
      %4415 = vmatpush1.msra.mxu0 %v4414
      %4416 = vmatprep.subr.mxu0 0.0
      %v4417 = vand.u32 %v2795, 4294901760
      %4418 = vmatpush1.msra.mxu0 %v4417
      %4419 = vmatprep.subr.mxu0 0.0
      %v4420 = vand.u32 %v2796, 4294901760
      %4421 = vmatpush1.msra.mxu0 %v4420
      %4422 = vmatprep.subr.mxu0 0.0
      %v4423 = vand.u32 %v2797, 4294901760
      %4424 = vmatpush1.msra.mxu0 %v4423
      %4425 = vmatprep.subr.mxu0 0.0
      %4426 = vmatpush1.msra.mxu0 0.0
      %4427 = vmatprep.subr.mxu0 0.0
      %4428 = vmatpush1.msra.mxu0 0.0
      %4429 = vmatprep.subr.mxu0 0.0
      %4430 = vmatpush1.msra.mxu0 0.0
      %4431 = vmatprep.subr.mxu0 0.0
      %4432 = vmatpush1.msra.mxu0 0.0
      %4433 = vmatprep.subr.mxu0 0.0
      %4434 = vmatpush1.msra.mxu0 0.0
      %4435 = vmatprep.subr.mxu0 0.0
      %4436 = vmatpush1.msra.mxu0 0.0
      %4437 = vmatprep.subr.mxu0 0.0
      %4438 = vmatpush1.msra.mxu0 0.0
      %4439 = vmatprep.subr.mxu0 0.0
      %4440 = vmatpush1.msra.mxu0 0.0
      %4441 = vmatprep.subr.mxu0 0.0
      %4442 = vmatpush1.msra.mxu0 0.0
      %4443 = vmatprep.subr.mxu0 0.0
      %4444 = vmatpush1.msra.mxu0 0.0
      %4445 = vmatprep.subr.mxu0 0.0
      %4446 = vmatpush1.msra.mxu0 0.0
      %4447 = vmatprep.subr.mxu0 0.0
      %4448 = vmatpush1.msra.mxu0 0.0
      %4449 = vmatprep.subr.mxu0 0.0
      %4450 = vmatpush1.msra.mxu0 0.0
      %4451 = vmatprep.subr.mxu0 0.0
      %4452 = vmatpush1.msra.mxu0 0.0
      %4453 = vmatprep.subr.mxu0 0.0
      %4454 = vmatpush1.msra.mxu0 0.0
      %4455 = vmatprep.subr.mxu0 0.0
      %4456 = vmatpush1.msra.mxu0 0.0
      %4457 = vmatprep.mubr.f32.mxu0 0.0
      %v4458 = vand.u32 %v2779, 4294901760
      %4459 = vmatmul.mubr.f32.gmra.mrb[0].mxu0 %v4458
      %v4460 = vpop.f32.mrb[0].mxu0
      %v4461 = vadd.f32 %v4374, %v4460
      %v4462 = vpop.f32.mrb[0].mxu0
      %4463 = vdwg.mxu0
      %4464 = vst.msk [vmem:[%s303] sm:$0xff] %vm521, %v4461
      %p4465 = scmp.lt.s32.totalorder %s19, 1
      %s4466 = scalar_select %p4465, %s19, 1
      %s4467 = smul.addr %s4466, 8
      %s4468 = scalar_lea.vmem %s8, %s4467
      // Predicated region
      $region53: #{_lambda_.1} parent=51 // pred_check
        %p4469 = pneg %p210
      $region54: #{_lambda_.1} parent=51 // pred_check_branch
        %4471 = sbr.rel (%p4469) target = $region56
      $region55: #{_lambda_.1} parent=51 // pred_region
        _
      $region56: #{_lambda_.1} parent=51 // pred_fallthru
        _
    $region52: #{_lambda_.1} parent=5 // pred_fallthru
      _
    %p4472 = scmp.le.s32.totalorder 2, %s14
    // Predicated region
    $region57: #{_lambda_.1} parent=5 // pred_check
      %p4473 = pneg %p4472
    $region58: #{_lambda_.1} parent=5 // pred_check_branch
      %4475 = sbr.rel (%p4473) target = $region60
    $region59: #{_lambda_.1} parent=5 // pred_region
      %s4476 = ssub.s32 %s14, 2
      // Predicated region
      $region61: #{_lambda_.1} parent=59 // pred_check
        %p4477 = pneg %p216
      $region62: #{_lambda_.1} parent=59 // pred_check_branch
        %4479 = sbr.rel (%p4477) target = $region64
      $region63: #{_lambda_.1} parent=59 // pred_region
        %p4480 = scmp.lt.s32.totalorder %s20, 1
        %s4481 = scalar_select %p4480, %s20, 1
        %s4482 = smul.addr %s4481, 8
        %s4483 = scalar_lea.vmem %s8, %s4482
      $region64: #{_lambda_.1} parent=59 // pred_fallthru
        _
    $region60: #{_lambda_.1} parent=5 // pred_fallthru
      _
  $region6: #{_lambda_.1} parent=0 // loop_footer
    %s18 = sadd.s32 1, %s14
  $region7: #{_lambda_.1} parent=0 // loop_footer_branch
    %13 = sbr.rel target = $region3
  $region8: #{_lambda_.1} parent=0 // loop_exit
    _

</llo_original>
